<compile_context>
chip_gen: v7x
topology: tpu7x:2x2x1
jax: 0.10.0
libtpu: 0.0.40
codegen_flags: <defaults>
</compile_context>

<pallas_src>
import functools
import math

import jax
import jax.numpy as jnp
from jax.experimental import pallas as pl
from jax.experimental.pallas import tpu as pltpu


# ----------------------------------------------------------------------------
# Small helpers
# ----------------------------------------------------------------------------
def _round_up(x, m):
    return (x + m - 1) // m * m


def _vmem_limit_cap_bytes():
    """Generation-aware scoped-VMEM ceiling (leave headroom for Mosaic)."""
    kind = ""
    try:
        kind = jax.devices()[0].device_kind.lower()
    except Exception:
        pass
    if any(t in kind for t in ("v4", "v5", "v6")):
        return 100 * 2 ** 20          # 128 MiB physical VMEM parts
    return 48 * 2 ** 20               # v7x-safe default (64 MiB physical)


_TM_CANDIDATES = (1024, 896, 768, 640, 512, 384, 256, 128)


def _pick_tm(m, cap=1024):
    """M tile (multiple of 16 for bf16 sublane packing) and padded M."""
    m16 = _round_up(m, 16)
    if m16 <= cap:
        return m16, m16
    best = None
    for tm in _TM_CANDIDATES:
        if tm > cap:
            continue
        m_pad = _round_up(m, tm)
        if m_pad - m <= max(m // 8, 16):     # <=12.5% zero-row padding
            return tm, m_pad
        if best is None or m_pad < best[1]:
            best = (tm, m_pad)
    return best


def _largest_divisor_tile(dim_pad, cap, quantum=128):
    """Largest multiple of `quantum` <= cap that divides dim_pad."""
    if dim_pad <= cap:
        return dim_pad
    t = (cap // quantum) * quantum
    while t >= quantum:
        if dim_pad % t == 0:
            return t
        t -= quantum
    return quantum


# ----------------------------------------------------------------------------
# Kernel 1: conv-as-matmul on an (M, Cout, K) grid + per-tile channel stats.
# K is the innermost ("arbitrary") axis; y / psum / psq blocks are resident
# across it and written on the last K step.
# ----------------------------------------------------------------------------
def conv_stats_kernel(p_ref, w_ref, y_ref, psum_ref, psq_ref, acc_ref):
    @pl.when(pl.program_id(2) == 0)
    def _init():
        acc_ref[...] = jnp.zeros_like(acc_ref)

    # bf16 operands -> single MXU pass; HIGHEST only on the f32 fidelity path.
    prec = (jax.lax.Precision.HIGHEST
            if p_ref.dtype == jnp.float32 else None)
    acc_ref[...] += jnp.dot(p_ref[...], w_ref[...],
                            preferred_element_type=jnp.float32,
                            precision=prec)

    @pl.when(pl.program_id(2) == pl.num_programs(2) - 1)
    def _finalize():
        acc = acc_ref[...]
        y_ref[...] = acc.astype(y_ref.dtype)          # bf16 intermediate store
        tm, tn = acc.shape
        # (8, tn) vreg-aligned partial sums (pure VPU folds); the final
        # channel reduction happens in XLA across the gm partials.
        psum_ref[...] = jnp.sum(acc.reshape(tm // 8, 8, tn), axis=0)
        psq_ref[...] = jnp.sum((acc * acc).reshape(tm // 8, 8, tn), axis=0)


# ----------------------------------------------------------------------------
# Kernel 2: fused BatchNorm affine (per-channel scale/shift) + LeakyReLU(0.1).
# Reads bf16, upcasts in-register (v5e VPU has no bf16 math), writes bf16.
# Output aliases y's HBM buffer (input_output_aliases={0: 0}).
# ----------------------------------------------------------------------------
def bn_leaky_kernel(y_ref, scale_ref, shift_ref, o_ref):
    v = y_ref[...].astype(jnp.float32) * scale_ref[...] + shift_ref[...]
    o_ref[...] = jnp.where(v >= 0, v, 0.1 * v).astype(o_ref.dtype)


# ----------------------------------------------------------------------------
# Kernel 3: tiny fused matmul + bias for the final Linear layer.
# ----------------------------------------------------------------------------
def linear_kernel(x_ref, w_ref, b_ref, o_ref):
    o_ref[...] = (jnp.dot(x_ref[...], w_ref[...],
                          preferred_element_type=jnp.float32) + b_ref[...])


# ----------------------------------------------------------------------------
# im2col in NHWC: pad + k*k strided slices + channel concat (no transpose).
# Row layout of K is (ky, kx, c), matching conv_w.transpose(2,3,1,0).
# TODO(synk): replace with in-kernel tap formation from a halo'd VMEM strip
# (manual DMA implicit GEMM) to avoid materializing k^2-inflated patches.
# ----------------------------------------------------------------------------
def _im2col_nhwc(x, k, stride, pad):
    n, h, w, c = x.shape
    oh = (h + 2 * pad - k) // stride + 1
    ow = (w + 2 * pad - k) // stride + 1
    if k == 1 and pad == 0:
        if stride != 1:
            x = x[:, ::stride, ::stride, :]
        return x.reshape(n * oh * ow, c), oh, ow
    xp = jnp.pad(x, ((0, 0), (pad, pad), (pad, pad), (0, 0)))
    taps = []
    for ky in range(k):
        for kx in range(k):
            taps.append(
                xp[:, ky:ky + stride * oh:stride, kx:kx + stride * ow:stride, :])
    patches = jnp.concatenate(taps, axis=-1)          # (N, OH, OW, k*k*C)
    return patches.reshape(n * oh * ow, k * k * c), oh, ow


# ----------------------------------------------------------------------------
# Convolutional block: Conv2d(bias=False) + BatchNorm2d(train) + LeakyReLU(0.1)
# NHWC in / NHWC out (network-internal layout, no transposes).
# ----------------------------------------------------------------------------
@functools.partial(jax.jit, static_argnames=("kernel", "stride", "compute_dtype"))
def conv_bn_leaky_nhwc(x, conv_w, bn_gamma, bn_beta, *, kernel, stride,
                       compute_dtype=jnp.bfloat16):
    n = x.shape[0]
    cout, cin = conv_w.shape[0], conv_w.shape[1]
    pad = kernel // 2

    patches, oh, ow = _im2col_nhwc(x, kernel, stride, pad)        # (M, K)
    m, kdim = patches.shape
    w2d = jnp.transpose(conv_w, (2, 3, 1, 0)).reshape(kernel * kernel * cin, cout)

    if compute_dtype is not None:
        patches = patches.astype(compute_dtype)
        w2d = w2d.astype(compute_dtype)
    y_dtype = patches.dtype

    k_pad = _round_up(kdim, 128)
    c_pad = _round_up(cout, 128)

    # ---- tile selection ----------------------------------------------------
    vmem_cap = _vmem_limit_cap_bytes()
    isz = jnp.dtype(patches.dtype).itemsize
    ysz = jnp.dtype(y_dtype).itemsize

    tm, m_pad = _pick_tm(m, cap=1024)
    tn = _largest_divisor_tile(c_pad, 512)
    # v7x: 2 TensorCores share the parallel grid axes -> make gm*gn >= 2
    # whenever there is enough work to split.
    if (m_pad // tm) * (c_pad // tn) == 1:
        if c_pad >= 256 and (c_pad // 2) % 128 == 0:
            tn = c_pad // 2
        elif m_pad >= 32 and (m_pad // 2) % 16 == 0:
            tm = m_pad // 2

    budget = int(0.70 * vmem_cap)
    tk = 128
    for tk_cap in (2048, 1024, 512, 256, 128):
        tk = _largest_divisor_tile(k_pad, tk_cap)
        est = (2 * (tm * tk + tk * tn) * isz        # double-buffered inputs
               + 2 * tm * tn * ysz                  # double-buffered y block
               + 2 * 2 * 8 * tn * 4                 # psum/psq blocks
               + tm * tn * 4)                       # f32 accumulator scratch
        if est <= budget:
            break

    gm, gn, gk = m_pad // tm, c_pad // tn, k_pad // tk

    # Zero padding: lane-dense loads/stores, full MXU passes.  Zero rows/cols
    # contribute nothing to the dot or the statistics (we divide by true m).
    patches = jnp.pad(patches, ((0, m_pad - m), (0, k_pad - kdim)))
    w2d = jnp.pad(w2d, ((0, k_pad - kdim), (0, c_pad - cout)))

    y, psum, psq = pl.pallas_call(
        conv_stats_kernel,
        out_shape=(
            jax.ShapeDtypeStruct((m_pad, c_pad), y_dtype),
            jax.ShapeDtypeStruct((gm * 8, c_pad), jnp.float32),
            jax.ShapeDtypeStruct((gm * 8, c_pad), jnp.float32),
        ),
        grid=(gm, gn, gk),
        in_specs=[
            pl.BlockSpec((tm, tk), lambda i, j, k: (i, k)),
            pl.BlockSpec((tk, tn), lambda i, j, k: (k, j)),
        ],
        out_specs=(
            pl.BlockSpec((tm, tn), lambda i, j, k: (i, j)),
            pl.BlockSpec((8, tn), lambda i, j, k: (i, j)),
            pl.BlockSpec((8, tn), lambda i, j, k: (i, j)),
        ),
        scratch_shapes=[pltpu.VMEM((tm, tn), jnp.float32)],
        compiler_params=pltpu.CompilerParams(
            dimension_semantics=("parallel", "parallel", "arbitrary"),
            vmem_limit_bytes=vmem_cap),
    )(patches, w2d)

    # BatchNorm training-mode statistics over the true M = N*OH*OW rows.
    # Single-pass E[x^2]-mean^2 (clamped >= 0); adequate at BN scales.
    # TODO(synk): running_mean/running_var EMA updates are a training-time
    # side effect with no impact on the forward output; not materialized.
    csum = jnp.sum(psum, axis=0)
    csq = jnp.sum(psq, axis=0)
    mean = csum / float(m)
    var = jnp.maximum(csq / float(m) - mean * mean, 0.0)
    inv_std = jax.lax.rsqrt(var + 1e-5)
    gamma_p = jnp.pad(bn_gamma.astype(jnp.float32), (0, c_pad - cout))
    beta_p = jnp.pad(bn_beta.astype(jnp.float32), (0, c_pad - cout))
    scale = (gamma_p * inv_std).reshape(1, c_pad)
    shift = (beta_p - mean * gamma_p * inv_std).reshape(1, c_pad)

    out_flat = pl.pallas_call(
        bn_leaky_kernel,
        out_shape=jax.ShapeDtypeStruct((m_pad, c_pad), y_dtype),
        grid=(gm, gn),
        in_specs=[
            pl.BlockSpec((tm, tn), lambda i, j: (i, j)),
            pl.BlockSpec((1, tn), lambda i, j: (0, j)),
            pl.BlockSpec((1, tn), lambda i, j: (0, j)),
        ],
        out_specs=pl.BlockSpec((tm, tn), lambda i, j: (i, j)),
        input_output_aliases={0: 0},                  # reuse y's HBM buffer
        compiler_params=pltpu.CompilerParams(
            dimension_semantics=("parallel", "parallel"),
            vmem_limit_bytes=vmem_cap),
    )(y, scale, shift)

    return out_flat[:m, :cout].reshape(n, oh, ow, cout)


def convolutional_forward_nchw(x, conv_w, bn_gamma, bn_beta, *, kernel, stride,
                               compute_dtype=jnp.bfloat16):
    """NCHW wrapper matching the PyTorch Convolutional block interface."""
    x_nhwc = jnp.transpose(x, (0, 2, 3, 1))
    y = conv_bn_leaky_nhwc(x_nhwc, conv_w, bn_gamma, bn_beta,
                           kernel=kernel, stride=stride,
                           compute_dtype=compute_dtype)
    return jnp.transpose(y, (0, 3, 1, 2))


@functools.partial(jax.jit, static_argnames=("kernel", "stride"))
def reference_forward(x, conv_w, bn_gamma, bn_beta, *, kernel, stride):
    """Plain-JAX reference with the exact PyTorch forward semantics (NCHW)."""
    pad = kernel // 2
    y = jax.lax.conv_general_dilated(
        x, conv_w, window_strides=(stride, stride),
        padding=((pad, pad), (pad, pad)),
        dimension_numbers=("NCHW", "OIHW", "NCHW"),
        precision=jax.lax.Precision.HIGHEST)
    mean = y.mean(axis=(0, 2, 3), keepdims=True)
    var = y.var(axis=(0, 2, 3), keepdims=True)
    z = (y - mean) * jax.lax.rsqrt(var + 1e-5)
    z = z * bn_gamma.reshape(1, -1, 1, 1) + bn_beta.reshape(1, -1, 1, 1)
    return jnp.where(z >= 0, z, 0.1 * z)


# ----------------------------------------------------------------------------
# Final Linear layer (Flatten output @ W + b) as a single-block Pallas call.
# ----------------------------------------------------------------------------
def linear_pallas(x, w, b):
    n, k = x.shape
    c = w.shape[1]
    n_pad = _round_up(n, 8)
    k_pad = _round_up(k, 128)
    c_pad = _round_up(c, 128)
    x = jnp.pad(x.astype(jnp.float32), ((0, n_pad - n), (0, k_pad - k)))
    w = jnp.pad(w.astype(jnp.float32), ((0, k_pad - k), (0, c_pad - c)))
    b = jnp.pad(b.astype(jnp.float32), (0, c_pad - c)).reshape(1, c_pad)
    out = pl.pallas_call(
        linear_kernel,
        out_shape=jax.ShapeDtypeStruct((n_pad, c_pad), jnp.float32),
        grid=(1,),
        in_specs=[
            pl.BlockSpec((n_pad, k_pad), lambda i: (0, 0)),
            pl.BlockSpec((k_pad, c_pad), lambda i: (0, 0)),
            pl.BlockSpec((1, c_pad), lambda i: (0, 0)),
        ],
        out_specs=pl.BlockSpec((n_pad, c_pad), lambda i: (0, 0)),
    )(x, w, b)
    return out[:n, :c]


# ----------------------------------------------------------------------------
# YoloBackbone / YoloPretraining composition (NHWC internal layout).
# ----------------------------------------------------------------------------
BACKBONE = [
    ("C", 3, 64, 7, 2), ("M",),
    ("C", 64, 192, 3, 1), ("M",),
    ("C", 192, 128, 1, 1), ("C", 128, 256, 3, 1), ("C", 256, 256, 1, 1),
    ("C", 256, 512, 2, 1), ("M",),
    ("C", 512, 256, 1, 1), ("C", 256, 512, 3, 1),
    ("C", 512, 256, 1, 1), ("C", 256, 512, 3, 1),
    ("C", 512, 256, 1, 1), ("C", 256, 512, 3, 1),
    ("C", 512, 256, 1, 1), ("C", 256, 512, 3, 1),
    ("C", 512, 512, 1, 1), ("C", 512, 1024, 3, 1), ("M",),
    ("C", 1024, 512, 1, 1), ("C", 512, 1024, 3, 1),
    ("C", 1024, 512, 1, 1), ("C", 512, 1024, 3, 1),
    ("C", 1024, 1024, 3, 1), ("C", 1024, 1024, 3, 2),
    ("C", 1024, 1024, 3, 1), ("C", 1024, 1024, 3, 1),
]
CONV_CFGS = [e[1:] for e in BACKBONE if e[0] == "C"]


def init_yolo_params(key, n_classes):
    convs = []
    for (cin, cout, k, _s) in CONV_CFGS:
        key, kw, kg, kb = jax.random.split(key, 4)
        w = (jax.random.normal(kw, (cout, cin, k, k), jnp.float32)
             / math.sqrt(cin * k * k))
        gamma = 1.0 + 0.1 * jax.random.normal(kg, (cout,), jnp.float32)
        beta = 0.1 * jax.random.normal(kb, (cout,), jnp.float32)
        convs.append((w, gamma, beta))
    key, kw, kb = jax.random.split(key, 3)
    fcw = jax.random.normal(kw, (1024, n_classes), jnp.float32) / math.sqrt(1024.0)
    fcb = 0.01 * jax.random.normal(kb, (n_classes,), jnp.float32)
    return {"convs": convs, "fc": (fcw, fcb)}


# TODO(synk): MaxPool/AvgPool are trivially mem-bound reshape-reduces kept in
# XLA; they could be fused into the following conv's im2col / the BN pass.
def _maxpool2_nhwc(x):
    n, h, w, c = x.shape
    x = x[:, : (h // 2) * 2, : (w // 2) * 2, :]
    return x.reshape(n, h // 2, 2, w // 2, 2, c).max(axis=(2, 4))


def _avgpool4_nhwc(x):
    n, h, w, c = x.shape
    x = x[:, : (h // 4) * 4, : (w // 4) * 4, :]
    return x.reshape(n, h // 4, 4, w // 4, 4, c).mean(axis=(2, 4))


def yolo_pretraining_forward(x_nchw, params, *, compute_dtype=jnp.bfloat16):
    """YoloPretraining.forward: backbone -> AvgPool2d(4) -> Flatten -> Linear."""
    x = jnp.transpose(x_nchw, (0, 2, 3, 1))          # NHWC internal layout
    if compute_dtype is not None:
        x = x.astype(compute_dtype)
    ci = 0
    for entry in BACKBONE:
        if entry[0] == "C":
            _cin, _cout, k, s = entry[1:]
            w, g, b = params["convs"][ci]
            ci += 1
            x = conv_bn_leaky_nhwc(x, w, g, b, kernel=k, stride=s,
                                   compute_dtype=compute_dtype)
        else:
            x = _maxpool2_nhwc(x)
    x = _avgpool4_nhwc(x)
    x = jnp.transpose(x, (0, 3, 1, 2))                # torch-order Flatten
    x = x.reshape(x.shape[0], -1)
    fcw, fcb = params["fc"]
    return linear_pallas(x, fcw, fcb)


# ----------------------------------------------------------------------------
# Tests
# ----------------------------------------------------------------------------
if __name__ == "__main__":
    key = jax.random.PRNGKey(0)

    # --- Convolutional block: Pallas vs. reference ---------------------------
    # (N, H, W, cin, cout, kernel, stride)
    block_cfgs = [
        (2, 24, 24, 4, 8, 3, 1),      # tiny 3x3, channel/K zero-padding
        (2, 16, 16, 96, 192, 3, 2),   # stride 2, K=864 -> tk=896 divisor path
        (1, 8, 8, 256, 512, 1, 1),    # 1x1 path (no im2col inflation)
        (2, 12, 12, 8, 16, 2, 1),     # kernel=2 block from group3 (odd output)
    ]
    for idx, (N, H, W, cin, cout, k, s) in enumerate(block_cfgs):
        key, kx, kw, kg, kb = jax.random.split(key, 5)
        x = jax.random.normal(kx, (N, cin, H, W), dtype=jnp.float32)
        conv_w = (jax.random.normal(kw, (cout, cin, k, k), dtype=jnp.float32)
                  / math.sqrt(cin * k * k))
        gamma = 1.0 + 0.1 * jax.random.normal(kg, (cout,), dtype=jnp.float32)
        beta = 0.1 * jax.random.normal(kb, (cout,), dtype=jnp.float32)

        out = convolutional_forward_nchw(x, conv_w, gamma, beta,
                                         kernel=k, stride=s)     # bf16 default
        out = jax.block_until_ready(out)
        ref = reference_forward(x, conv_w, gamma, beta, kernel=k, stride=s)
        assert out.shape == ref.shape, (idx, out.shape, ref.shape)
        assert bool(jnp.allclose(out.astype(jnp.float32), ref,
                                 atol=5e-2, rtol=5e-2)), idx

        if idx == 1:                      # f32 fidelity path (HIGHEST MXU)
            out32 = convolutional_forward_nchw(x, conv_w, gamma, beta,
                                               kernel=k, stride=s,
                                               compute_dtype=None)
            out32 = jax.block_until_ready(out32)
            assert bool(jnp.allclose(out32, ref, atol=1e-4, rtol=1e-4)), idx

    # --- Full YoloPretraining forward (smallest valid input: 256x256) --------
    n_classes = 20
    key, kp, kx = jax.random.split(key, 3)
    params = init_yolo_params(kp, n_classes)
    x_img = jax.random.normal(kx, (1, 3, 256, 256), dtype=jnp.float32)
    logits = yolo_pretraining_forward(x_img, params)
    logits = jax.block_until_ready(logits)
    assert logits.shape == (1, n_classes), logits.shape
    assert bool(jnp.all(jnp.isfinite(logits)))

    print("KERNEL_OK")
</pallas_src>

<mosaic_0001>
module attributes {stable_mosaic.version = 11 : i64} {
  func.func @conv_stats_kernel(%arg0: i32, %arg1: i32, %arg2: i32, %arg3: memref<640x128xbf16, #tpu.memory_space<vmem>>, %arg4: memref<128x128xbf16, #tpu.memory_space<vmem>>, %arg5: memref<640x128xbf16, #tpu.memory_space<vmem>>, %arg6: memref<8x128xf32, #tpu.memory_space<vmem>>, %arg7: memref<8x128xf32, #tpu.memory_space<vmem>>, %arg8: memref<640x128xf32, #tpu.memory_space<vmem>>) attributes {dimension_semantics = [#tpu.dimension_semantics<parallel>, #tpu.dimension_semantics<parallel>, #tpu.dimension_semantics<arbitrary>], iteration_bounds = array<i64: 2, 1, 1>, scalar_prefetch = 0 : i64, scratch_operands = 1 : i64, tpu.core_type = #tpu.core_type<tc>, window_params = [{transform_indices = @transform_0, window_bounds = array<i64: 640, 128>}, {transform_indices = @transform_1, window_bounds = array<i64: 128, 128>}, {transform_indices = @transform_2, window_bounds = array<i64: 640, 128>}, {transform_indices = @transform_3, window_bounds = array<i64: 8, 128>}, {transform_indices = @transform_4, window_bounds = array<i64: 8, 128>}]} {
    %c0_i32 = arith.constant 0 : i32
    %0 = arith.cmpi eq, %arg2, %c0_i32 : i32
    %1 = arith.extui %0 : i1 to i32
    %c0_i32_0 = arith.constant 0 : i32
    %2 = arith.cmpi ne, %1, %c0_i32_0 : i32
    scf.if %2 {
      %cst_10 = arith.constant 0.000000e+00 : f32
      %12 = vector.broadcast %cst_10 : f32 to vector<640x128xf32>
      %c0_11 = arith.constant 0 : index
      %c0_12 = arith.constant 0 : index
      %13 = vector.load %arg8[%c0_11, %c0_12] : memref<640x128xf32, #tpu.memory_space<vmem>>, vector<640x128xf32>
      tpu.vector_store %arg8[%c0_11, %c0_12], %12 {strides = array<i32>} : memref<640x128xf32, #tpu.memory_space<vmem>>, vector<640x128xf32>,
    } else {
    }
    %c0 = arith.constant 0 : index
    %c0_1 = arith.constant 0 : index
    %3 = vector.load %arg8[%c0, %c0_1] : memref<640x128xf32, #tpu.memory_space<vmem>>, vector<640x128xf32>
    %c0_2 = arith.constant 0 : index
    %c0_3 = arith.constant 0 : index
    %4 = vector.load %arg3[%c0_2, %c0_3] : memref<640x128xbf16, #tpu.memory_space<vmem>>, vector<640x128xbf16>
    %c0_4 = arith.constant 0 : index
    %c0_5 = arith.constant 0 : index
    %5 = vector.load %arg4[%c0_4, %c0_5] : memref<128x128xbf16, #tpu.memory_space<vmem>>, vector<128x128xbf16>
    %cst = arith.constant dense<0.000000e+00> : vector<640x128xf32>
    %6 = tpu.matmul %4, %5, %cst {dimension_numbers = #tpu.dot_dimension_numbers<[1], [0], [0], [1], [0, 0, 1, 1], [], []>} : vector<640x128xbf16>, vector<128x128xbf16>, vector<640x128xf32> -> vector<640x128xf32>
    %7 = arith.addf %3, %6 : vector<640x128xf32>
    %c0_6 = arith.constant 0 : index
    %c0_7 = arith.constant 0 : index
    %8 = vector.load %arg8[%c0_6, %c0_7] : memref<640x128xf32, #tpu.memory_space<vmem>>, vector<640x128xf32>
    tpu.vector_store %arg8[%c0_6, %c0_7], %7 {strides = array<i32>} : memref<640x128xf32, #tpu.memory_space<vmem>>, vector<640x128xf32>,
    %c0_i32_8 = arith.constant 0 : i32
    %9 = arith.cmpi eq, %arg2, %c0_i32_8 : i32
    %10 = arith.extui %9 : i1 to i32
    %c0_i32_9 = arith.constant 0 : i32
    %11 = arith.cmpi ne, %10, %c0_i32_9 : i32
    scf.if %11 {
      %c0_10 = arith.constant 0 : index
      %c0_11 = arith.constant 0 : index
      %12 = vector.load %arg8[%c0_10, %c0_11] : memref<640x128xf32, #tpu.memory_space<vmem>>, vector<640x128xf32>
      %13 = arith.truncf %12 : vector<640x128xf32> to vector<640x128xbf16>
      %c0_12 = arith.constant 0 : index
      %c0_13 = arith.constant 0 : index
      %14 = vector.load %arg5[%c0_12, %c0_13] : memref<640x128xbf16, #tpu.memory_space<vmem>>, vector<640x128xbf16>
      tpu.vector_store %arg5[%c0_12, %c0_13], %13 {strides = array<i32>} : memref<640x128xbf16, #tpu.memory_space<vmem>>, vector<640x128xbf16>,
      %15 = vector.shape_cast %12 : vector<640x128xf32> to vector<80x8x128xf32>
      %cst_14 = arith.constant dense<0.000000e+00> : vector<8x128xf32>
      %16 = vector.multi_reduction <add>, %15, %cst_14 [0] : vector<80x8x128xf32> to vector<8x128xf32>
      %c0_15 = arith.constant 0 : index
      %c0_16 = arith.constant 0 : index
      %17 = vector.load %arg6[%c0_15, %c0_16] : memref<8x128xf32, #tpu.memory_space<vmem>>, vector<8x128xf32>
      tpu.vector_store %arg6[%c0_15, %c0_16], %16 {strides = array<i32>} : memref<8x128xf32, #tpu.memory_space<vmem>>, vector<8x128xf32>,
      %18 = arith.mulf %12, %12 : vector<640x128xf32>
      %19 = vector.shape_cast %18 : vector<640x128xf32> to vector<80x8x128xf32>
      %cst_17 = arith.constant dense<0.000000e+00> : vector<8x128xf32>
      %20 = vector.multi_reduction <add>, %19, %cst_17 [0] : vector<80x8x128xf32> to vector<8x128xf32>
      %c0_18 = arith.constant 0 : index
      %c0_19 = arith.constant 0 : index
      %21 = vector.load %arg7[%c0_18, %c0_19] : memref<8x128xf32, #tpu.memory_space<vmem>>, vector<8x128xf32>
      tpu.vector_store %arg7[%c0_18, %c0_19], %20 {strides = array<i32>} : memref<8x128xf32, #tpu.memory_space<vmem>>, vector<8x128xf32>,
    } else {
    }
    return
  }
  func.func @transform_0(%arg0: i32, %arg1: i32, %arg2: i32) -> (i32, i32) {
    %c0_i32 = arith.constant 0 : i32
    return %arg0, %arg2 : i32, i32
  }
  func.func @transform_1(%arg0: i32, %arg1: i32, %arg2: i32) -> (i32, i32) {
    %c0_i32 = arith.constant 0 : i32
    return %arg2, %arg1 : i32, i32
  }
  func.func @transform_2(%arg0: i32, %arg1: i32, %arg2: i32) -> (i32, i32) {
    %c0_i32 = arith.constant 0 : i32
    return %arg0, %arg1 : i32, i32
  }
  func.func @transform_3(%arg0: i32, %arg1: i32, %arg2: i32) -> (i32, i32) {
    %c0_i32 = arith.constant 0 : i32
    return %arg0, %arg1 : i32, i32
  }
  func.func @transform_4(%arg0: i32, %arg1: i32, %arg2: i32) -> (i32, i32) {
    %c0_i32 = arith.constant 0 : i32
    return %arg0, %arg1 : i32, i32
  }
}

module attributes {stable_mosaic.version = 11 : i64} {
  func.func @bn_leaky_kernel(%arg0: i32, %arg1: i32, %arg2: memref<640x128xbf16, #tpu.memory_space<vmem>>, %arg3: memref<1x128xf32, #tpu.memory_space<vmem>>, %arg4: memref<1x128xf32, #tpu.memory_space<vmem>>, %arg5: memref<640x128xbf16, #tpu.memory_space<vmem>>) attributes {dimension_semantics = [#tpu.dimension_semantics<parallel>, #tpu.dimension_semantics<parallel>], iteration_bounds = array<i64: 2, 1>, scalar_prefetch = 0 : i64, scratch_operands = 0 : i64, tpu.core_type = #tpu.core_type<tc>, window_params = [{transform_indices = @transform_0, window_bounds = array<i64: 640, 128>}, {transform_indices = @transform_1, window_bounds = array<i64: 1, 128>}, {transform_indices = @transform_2, window_bounds = array<i64: 1, 128>}, {transform_indices = @transform_3, window_bounds = array<i64: 640, 128>}]} {
    %c0 = arith.constant 0 : index
    %c0_0 = arith.constant 0 : index
    %0 = vector.load %arg2[%c0, %c0_0] : memref<640x128xbf16, #tpu.memory_space<vmem>>, vector<640x128xbf16>
    %1 = arith.extf %0 : vector<640x128xbf16> to vector<640x128xf32>
    %c0_1 = arith.constant 0 : index
    %c0_2 = arith.constant 0 : index
    %2 = vector.load %arg3[%c0_1, %c0_2] : memref<1x128xf32, #tpu.memory_space<vmem>>, vector<1x128xf32>
    %3 = vector.broadcast %2 : vector<1x128xf32> to vector<640x128xf32>
    %4 = arith.mulf %1, %3 : vector<640x128xf32>
    %c0_3 = arith.constant 0 : index
    %c0_4 = arith.constant 0 : index
    %5 = vector.load %arg4[%c0_3, %c0_4] : memref<1x128xf32, #tpu.memory_space<vmem>>, vector<1x128xf32>
    %6 = vector.broadcast %5 : vector<1x128xf32> to vector<640x128xf32>
    %7 = arith.addf %4, %6 : vector<640x128xf32>
    %cst = arith.constant 0.000000e+00 : f32
    %8 = vector.broadcast %cst : f32 to vector<640x128xf32>
    %9 = arith.cmpf oge, %7, %8 : vector<640x128xf32>
    %cst_5 = arith.constant 1.000000e-01 : f32
    %10 = vector.broadcast %cst_5 : f32 to vector<640x128xf32>
    %11 = arith.mulf %10, %7 : vector<640x128xf32>
    %12 = arith.select %9, %7, %11 : vector<640x128xi1>, vector<640x128xf32>
    %13 = arith.truncf %12 : vector<640x128xf32> to vector<640x128xbf16>
    %c0_6 = arith.constant 0 : index
    %c0_7 = arith.constant 0 : index
    %14 = vector.load %arg5[%c0_6, %c0_7] : memref<640x128xbf16, #tpu.memory_space<vmem>>, vector<640x128xbf16>
    tpu.vector_store %arg5[%c0_6, %c0_7], %13 {strides = array<i32>} : memref<640x128xbf16, #tpu.memory_space<vmem>>, vector<640x128xbf16>,
    return
  }
  func.func @transform_0(%arg0: i32, %arg1: i32) -> (i32, i32) {
    %c0_i32 = arith.constant 0 : i32
    return %arg0, %arg1 : i32, i32
  }
  func.func @transform_1(%arg0: i32, %arg1: i32) -> (i32, i32) {
    %c0_i32 = arith.constant 0 : i32
    %c0_i32_0 = arith.constant 0 : i32
    return %c0_i32, %arg1 : i32, i32
  }
  func.func @transform_2(%arg0: i32, %arg1: i32) -> (i32, i32) {
    %c0_i32 = arith.constant 0 : i32
    %c0_i32_0 = arith.constant 0 : i32
    return %c0_i32, %arg1 : i32, i32
  }
  func.func @transform_3(%arg0: i32, %arg1: i32) -> (i32, i32) {
    %c0_i32 = arith.constant 0 : i32
    return %arg0, %arg1 : i32, i32
  }
}

</mosaic_0001>

<llo_original>
// kernel: conv_bn_leaky_nhwc.3
$region0: #{conv_bn_leaky_nhwc.3}
  #allocation0 [shape = 'u32[]', space=smem, size = 0x4, offset = 0x4, fixed_abs, tag = 'smem constant byte address 0x4 - core index']
  #allocation1 [shape = 'u32[144,128]{1,0:T(1,128)}', space=vmem, size = 0x12000, scoped, tag = 'internal scratch']
  %s0 = inlined_call_operand.vmem [shape: bf16[1280,128], index: 0, kind: input, shape index: {}, may-alias: {0,3}]
  %s1 = inlined_call_operand.vmem [shape: f32[1,128], index: 1, kind: input, shape index: {}]
  %s2 = inlined_call_operand.vmem [shape: f32[1,128], index: 2, kind: input, shape index: {}]
  %s3 = inlined_call_operand.vmem [shape: bf16[1280,128], index: 3, kind: output, shape index: {}, may-alias: {0,3}]
  %s4 = sld [smem:[#allocation0]]
  $region45: #{conv_bn_leaky_nhwc.3} parent=0
    _
  %s6 = ssub.s32 1, %s4
  %s7 = scalar_select 0, %s6, %s4
  loop: start=0, step=1, limit=4
  $region2: #{conv_bn_leaky_nhwc.3} parent=0 // loop_pre_header
    _
  $region3: #{conv_bn_leaky_nhwc.3} parent=0 // loop_header
    %s9 = sphi 0, %s13
    %p10 = scmp.ge.s32.totalorder %s9, 4
    %s16 = sphi 0, %s28
    %s17 = sphi 0, %s24
    %s18 = sphi 0, %s16
    %s19 = sphi 0, %s17
    %s20 = sphi 0, %s18
    %s21 = sphi 0, %s19
    %s33 = sphi 0, %s35
    %s36 = sphi 0, %s33
    %s37 = sphi 0, %s36
    %s53 = sphi 0, %s37
    %s59 = sphi 0, %s61
    %s62 = sphi 0, %s59
    %s63 = sphi 0, %s62
    %s79 = sphi 0, %s63
    %s85 = sphi 0, %s87
    %s88 = sphi 0, %s85
    %s89 = sphi 0, %s88
    %s105 = sphi 0, %s89
    %s113 = sphi 0, %s115
    %s116 = sphi 0, %s113
    %s117 = sphi 0, %s116
    %s133 = sphi 0, %s117
  $region4: #{conv_bn_leaky_nhwc.3} parent=0 // loop_header_branch
    %12 = sbr.rel (%p10) target = $region8
  $region5: #{conv_bn_leaky_nhwc.3} parent=0 // loop_body
    %s14 = ssub.s32 %s9, 1
    %s15 = ssub.s32 %s9, 2
    %s22 = sadd.s32 1, %s17
    %p23 = scmp.ge.s32.totalorder %s22, 1
    %s24 = scalar_select %p23, 0, %s22
    %s25 = sadd.s32 1, %s16
    %s26 = scalar_select %p23, %s25, %s16
    %p27 = scmp.ge.s32.totalorder %s26, 2
    %s28 = scalar_select %p27, 0, %s26
    %s29 = ssub.s32 %s16, %s28
    %s30 = ssub.s32 %s17, %s24
    %s31 = sor.u32 %s29, %s30
    %p32 = scmp.eq.s32.totalorder %s31, 0
    %s34 = sadd.s32 %s33, 1
    %s35 = scalar_select %p32, %s33, %s34
    %p38 = pneg %p32
    %p39 = scmp.eq.s32.totalorder %s9, 1
    %p40 = por %p38, %p39
    %p41 = scmp.ne.s32.totalorder %s33, %s36
    %p42 = scmp.eq.s32.totalorder %s9, 0
    %p43 = por %p41, %p42
    %p44 = scmp.ne.s32.totalorder %s33, %s36
    %p45 = scmp.eq.s32.totalorder %s14, 1
    %p46 = por %p44, %p45
    %p47 = scmp.ne.s32.totalorder %s36, %s37
    %p48 = scmp.eq.s32.totalorder %s14, 0
    %p49 = por %p47, %p48
    %p50 = scmp.ne.s32.totalorder %s36, %s37
    %p51 = scmp.eq.s32.totalorder %s15, 1
    %p52 = por %p50, %p51
    %p54 = scmp.ne.s32.totalorder %s37, %s53
    %p55 = scmp.eq.s32.totalorder %s15, 0
    %p56 = por %p54, %p55
    %s57 = ssub.s32 %s17, %s24
    %p58 = scmp.eq.s32.totalorder %s57, 0
    %s60 = sadd.s32 %s59, 1
    %s61 = scalar_select %p58, %s59, %s60
    %p64 = pneg %p58
    %p65 = scmp.eq.s32.totalorder %s9, 1
    %p66 = por %p64, %p65
    %p67 = scmp.ne.s32.totalorder %s59, %s62
    %p68 = scmp.eq.s32.totalorder %s9, 0
    %p69 = por %p67, %p68
    %p70 = scmp.ne.s32.totalorder %s59, %s62
    %p71 = scmp.eq.s32.totalorder %s14, 1
    %p72 = por %p70, %p71
    %p73 = scmp.ne.s32.totalorder %s62, %s63
    %p74 = scmp.eq.s32.totalorder %s14, 0
    %p75 = por %p73, %p74
    %p76 = scmp.ne.s32.totalorder %s62, %s63
    %p77 = scmp.eq.s32.totalorder %s15, 1
    %p78 = por %p76, %p77
    %p80 = scmp.ne.s32.totalorder %s63, %s79
    %p81 = scmp.eq.s32.totalorder %s15, 0
    %p82 = por %p80, %p81
    %s83 = ssub.s32 %s17, %s24
    %p84 = scmp.eq.s32.totalorder %s83, 0
    %s86 = sadd.s32 %s85, 1
    %s87 = scalar_select %p84, %s85, %s86
    %p90 = pneg %p84
    %p91 = scmp.eq.s32.totalorder %s9, 1
    %p92 = por %p90, %p91
    %p93 = scmp.ne.s32.totalorder %s85, %s88
    %p94 = scmp.eq.s32.totalorder %s9, 0
    %p95 = por %p93, %p94
    %p96 = scmp.ne.s32.totalorder %s85, %s88
    %p97 = scmp.eq.s32.totalorder %s14, 1
    %p98 = por %p96, %p97
    %p99 = scmp.ne.s32.totalorder %s88, %s89
    %p100 = scmp.eq.s32.totalorder %s14, 0
    %p101 = por %p99, %p100
    %p102 = scmp.ne.s32.totalorder %s88, %s89
    %p103 = scmp.eq.s32.totalorder %s15, 1
    %p104 = por %p102, %p103
    %p106 = scmp.ne.s32.totalorder %s89, %s105
    %p107 = scmp.eq.s32.totalorder %s15, 0
    %p108 = por %p106, %p107
    %s109 = ssub.s32 %s16, %s28
    %s110 = ssub.s32 %s17, %s24
    %s111 = sor.u32 %s109, %s110
    %p112 = scmp.eq.s32.totalorder %s111, 0
    %s114 = sadd.s32 %s113, 1
    %s115 = scalar_select %p112, %s113, %s114
    %p118 = pneg %p112
    %p119 = scmp.eq.s32.totalorder %s9, 1
    %p120 = por %p118, %p119
    %p121 = scmp.ne.s32.totalorder %s113, %s116
    %p122 = scmp.eq.s32.totalorder %s9, 0
    %p123 = por %p121, %p122
    %p124 = scmp.ne.s32.totalorder %s113, %s116
    %p125 = scmp.eq.s32.totalorder %s14, 1
    %p126 = por %p124, %p125
    %p127 = scmp.ne.s32.totalorder %s116, %s117
    %p128 = scmp.eq.s32.totalorder %s14, 0
    %p129 = por %p127, %p128
    %p130 = scmp.ne.s32.totalorder %s116, %s117
    %p131 = scmp.eq.s32.totalorder %s15, 1
    %p132 = por %p130, %p131
    %p134 = scmp.ne.s32.totalorder %s117, %s133
    %p135 = scmp.eq.s32.totalorder %s15, 0
    %p136 = por %p134, %p135
    %p137 = scmp.le.s32.totalorder 1, %s9
    %p138 = scmp.lt.s32.totalorder %s9, 3
    %p139 = pnand %p137, %p138
    %p140 = pneg %p139
    // Predicated region
    $region9: #{conv_bn_leaky_nhwc.3} parent=5 // pred_check
      _
    $region10: #{conv_bn_leaky_nhwc.3} parent=5 // pred_check_branch
      %142 = sbr.rel (%p139) target = $region12
    $region11: #{conv_bn_leaky_nhwc.3} parent=5 // pred_region
      %s143 = ssub.s32 %s9, 1
      // Predicated region
      $region13: #{conv_bn_leaky_nhwc.3} parent=11 // pred_check
        %p144 = pneg %p75
      $region14: #{conv_bn_leaky_nhwc.3} parent=11 // pred_check_branch
        %146 = sbr.rel (%p144) target = $region16
      $region15: #{conv_bn_leaky_nhwc.3} parent=11 // pred_region
        %p147 = scmp.lt.s32.totalorder %s19, 0
        %s148 = scalar_select %p147, %s19, 0
        %s149 = scalar_lea.vmem %s1, %s148
      $region16: #{conv_bn_leaky_nhwc.3} parent=11 // pred_fallthru
        _
      // Predicated region
      $region17: #{conv_bn_leaky_nhwc.3} parent=11 // pred_check
        %p150 = pneg %p101
      $region18: #{conv_bn_leaky_nhwc.3} parent=11 // pred_check_branch
        %152 = sbr.rel (%p150) target = $region20
      $region19: #{conv_bn_leaky_nhwc.3} parent=11 // pred_region
        %p153 = scmp.lt.s32.totalorder %s19, 0
        %s154 = scalar_select %p153, %s19, 0
        %s155 = scalar_lea.vmem %s2, %s154
      $region20: #{conv_bn_leaky_nhwc.3} parent=11 // pred_fallthru
        _
    $region12: #{conv_bn_leaky_nhwc.3} parent=5 // pred_fallthru
      _
    %p156 = scmp.lt.s32.totalorder %s9, 2
    // Predicated region
    $region21: #{conv_bn_leaky_nhwc.3} parent=5 // pred_check
      %p157 = pneg %p156
    $region22: #{conv_bn_leaky_nhwc.3} parent=5 // pred_check_branch
      %159 = sbr.rel (%p157) target = $region24
    $region23: #{conv_bn_leaky_nhwc.3} parent=5 // pred_region
      // Predicated region
      $region25: #{conv_bn_leaky_nhwc.3} parent=23 // pred_check
        %p160 = pneg %p43
      $region26: #{conv_bn_leaky_nhwc.3} parent=23 // pred_check_branch
        %162 = sbr.rel (%p160) target = $region28
      $region27: #{conv_bn_leaky_nhwc.3} parent=23 // pred_region
        %s163 = smul.u32 80, %s16
        %p164 = scmp.lt.s32.totalorder %s163, 159
        %s165 = scalar_select %p164, %s163, 159
        %p166 = scmp.lt.s32.totalorder %s17, 0
        %s167 = scalar_select %p166, %s17, 0
        %s168 = sadd.s32 %s167, %s165
        %s169 = smul.addr %s168, 4
        %s170 = scalar_lea.vmem %s0, %s169
        %s171 = smul.u32 80, %s16
      $region28: #{conv_bn_leaky_nhwc.3} parent=23 // pred_fallthru
        _
    $region24: #{conv_bn_leaky_nhwc.3} parent=5 // pred_fallthru
      _
    %p172 = scmp.le.s32.totalorder 1, %s9
    %p173 = scmp.lt.s32.totalorder %s9, 3
    %p174 = pnand %p172, %p173
    %p175 = pneg %p174
    // Predicated region
    $region29: #{conv_bn_leaky_nhwc.3} parent=5 // pred_check
      _
    $region30: #{conv_bn_leaky_nhwc.3} parent=5 // pred_check_branch
      %177 = sbr.rel (%p174) target = $region32
    $region31: #{conv_bn_leaky_nhwc.3} parent=5 // pred_region
      %s178 = ssub.s32 %s9, 1
      %s179 = smul.u32 80, %s18
      %p180 = scmp.lt.s32.totalorder %s179, 159
      %s181 = scalar_select %p180, %s179, 159
      %p182 = scmp.lt.s32.totalorder %s19, 0
      %s183 = scalar_select %p182, %s19, 0
      %s184 = sadd.s32 %s183, %s181
      %s185 = smul.addr %s184, 4
      %s186 = scalar_lea.vmem %s0, %s185
      %p187 = pneg %p49
      %p188 = pneg %p46
      %p189 = scmp.lt.s32.totalorder %s19, 0
      %s190 = scalar_select %p189, %s19, 0
      %s191 = scalar_lea.vmem %s1, %s190
      %p192 = pneg %p75
      %p193 = pneg %p72
      %p194 = scmp.lt.s32.totalorder %s19, 0
      %s195 = scalar_select %p194, %s19, 0
      %s196 = scalar_lea.vmem %s2, %s195
      %p197 = pneg %p101
      %p198 = pneg %p98
      %p199 = pneg %p129
      %p200 = pneg %p126
      %s201 = smul.u32 80, %s18
      %p202 = scmp.lt.s32.totalorder %s201, 159
      %s203 = scalar_select %p202, %s201, 159
      %p204 = scmp.lt.s32.totalorder %s19, 0
      %s205 = scalar_select %p204, %s19, 0
      %s206 = sadd.s32 %s205, %s203
      %s207 = smul.addr %s206, 4
      %s208 = scalar_lea.vmem %s3, %s207
      %s209 = smul.u32 80, %s18
      %p210 = scmp.lt.s32.totalorder %s209, 159
      %s211 = scalar_select %p210, %s209, 159
      %p212 = scmp.lt.s32.totalorder %s19, 0
      %s213 = scalar_select %p212, %s19, 0
      %s214 = sadd.s32 %s213, %s211
      %s215 = smul.addr %s214, 4
      %s216 = scalar_lea.vmem %s0, %s215
      %s217 = smul.u32 80, %s18
      %p218 = scmp.lt.s32.totalorder %s19, 0
      %s219 = scalar_select %p218, %s19, 0
      %s220 = scalar_lea.vmem %s1, %s219
      %p221 = scmp.lt.s32.totalorder %s19, 0
      %s222 = scalar_select %p221, %s19, 0
      %s223 = scalar_lea.vmem %s2, %s222
      %s224 = smul.u32 80, %s18
      %p225 = scmp.lt.s32.totalorder %s224, 159
      %s226 = scalar_select %p225, %s224, 159
      %p227 = scmp.lt.s32.totalorder %s19, 0
      %s228 = scalar_select %p227, %s19, 0
      %s229 = sadd.s32 %s228, %s226
      %s230 = smul.addr %s229, 4
      %s231 = scalar_lea.vmem %s3, %s230
      %s232 = smul.u32 80, %s18
      %v233 = vld [vmem:[%s216] sm:$0xf]
      %v234 = vld [vmem:[%s216 + $0x4] sm:$0xf]
      %v235 = vld [vmem:[%s216 + $0x8] sm:$0xf]
      %v236 = vld [vmem:[%s216 + $0xc] sm:$0xf]
      %v237 = vld [vmem:[%s216 + $0x10] sm:$0xf]
      %v238 = vld [vmem:[%s216 + $0x14] sm:$0xf]
      %v239 = vld [vmem:[%s216 + $0x18] sm:$0xf]
      %v240 = vld [vmem:[%s216 + $0x1c] sm:$0xf]
      %v241 = vld [vmem:[%s216 + $0x20] sm:$0xf]
      %v242 = vld [vmem:[%s216 + $0x24] sm:$0xf]
      %v243 = vld [vmem:[%s216 + $0x28] sm:$0xf]
      %v244 = vld [vmem:[%s216 + $0x2c] sm:$0xf]
      %v245 = vld [vmem:[%s216 + $0x30] sm:$0xf]
      %v246 = vld [vmem:[%s216 + $0x34] sm:$0xf]
      %v247 = vld [vmem:[%s216 + $0x38] sm:$0xf]
      %v248 = vld [vmem:[%s216 + $0x3c] sm:$0xf]
      %v249 = vld [vmem:[%s216 + $0x40] sm:$0xf]
      %v250 = vld [vmem:[%s216 + $0x44] sm:$0xf]
      %v251 = vld [vmem:[%s216 + $0x48] sm:$0xf]
      %v252 = vld [vmem:[%s216 + $0x4c] sm:$0xf]
      %v253 = vld [vmem:[%s216 + $0x50] sm:$0xf]
      %v254 = vld [vmem:[%s216 + $0x54] sm:$0xf]
      %v255 = vld [vmem:[%s216 + $0x58] sm:$0xf]
      %v256 = vld [vmem:[%s216 + $0x5c] sm:$0xf]
      %v257 = vld [vmem:[%s216 + $0x60] sm:$0xf]
      %v258 = vld [vmem:[%s216 + $0x64] sm:$0xf]
      %v259 = vld [vmem:[%s216 + $0x68] sm:$0xf]
      %v260 = vld [vmem:[%s216 + $0x6c] sm:$0xf]
      %v261 = vld [vmem:[%s216 + $0x70] sm:$0xf]
      %v262 = vld [vmem:[%s216 + $0x74] sm:$0xf]
      %v263 = vld [vmem:[%s216 + $0x78] sm:$0xf]
      %v264 = vld [vmem:[%s216 + $0x7c] sm:$0xf]
      %v265 = vld [vmem:[%s216 + $0x80] sm:$0xf]
      %v266 = vld [vmem:[%s216 + $0x84] sm:$0xf]
      %v267 = vld [vmem:[%s216 + $0x88] sm:$0xf]
      %v268 = vld [vmem:[%s216 + $0x8c] sm:$0xf]
      %v269 = vld [vmem:[%s216 + $0x90] sm:$0xf]
      %v270 = vld [vmem:[%s216 + $0x94] sm:$0xf]
      %v271 = vld [vmem:[%s216 + $0x98] sm:$0xf]
      %v272 = vld [vmem:[%s216 + $0x9c] sm:$0xf]
      %v273 = vld [vmem:[%s216 + $0xa0] sm:$0xf]
      %v274 = vld [vmem:[%s216 + $0xa4] sm:$0xf]
      %v275 = vld [vmem:[%s216 + $0xa8] sm:$0xf]
      %v276 = vld [vmem:[%s216 + $0xac] sm:$0xf]
      %v277 = vld [vmem:[%s216 + $0xb0] sm:$0xf]
      %v278 = vld [vmem:[%s216 + $0xb4] sm:$0xf]
      %v279 = vld [vmem:[%s216 + $0xb8] sm:$0xf]
      %v280 = vld [vmem:[%s216 + $0xbc] sm:$0xf]
      %v281 = vld [vmem:[%s216 + $0xc0] sm:$0xf]
      %v282 = vld [vmem:[%s216 + $0xc4] sm:$0xf]
      %v283 = vld [vmem:[%s216 + $0xc8] sm:$0xf]
      %v284 = vld [vmem:[%s216 + $0xcc] sm:$0xf]
      %v285 = vld [vmem:[%s216 + $0xd0] sm:$0xf]
      %v286 = vld [vmem:[%s216 + $0xd4] sm:$0xf]
      %v287 = vld [vmem:[%s216 + $0xd8] sm:$0xf]
      %v288 = vld [vmem:[%s216 + $0xdc] sm:$0xf]
      %v289 = vld [vmem:[%s216 + $0xe0] sm:$0xf]
      %v290 = vld [vmem:[%s216 + $0xe4] sm:$0xf]
      %v291 = vld [vmem:[%s216 + $0xe8] sm:$0xf]
      %v292 = vld [vmem:[%s216 + $0xec] sm:$0xf]
      %v293 = vld [vmem:[%s216 + $0xf0] sm:$0xf]
      %v294 = vld [vmem:[%s216 + $0xf4] sm:$0xf]
      %v295 = vld [vmem:[%s216 + $0xf8] sm:$0xf]
      %v296 = vld [vmem:[%s216 + $0xfc] sm:$0xf]
      %v297 = vld [vmem:[%s216 + $0x100] sm:$0xf]
      %v298 = vld [vmem:[%s216 + $0x104] sm:$0xf]
      %v299 = vld [vmem:[%s216 + $0x108] sm:$0xf]
      %v300 = vld [vmem:[%s216 + $0x10c] sm:$0xf]
      %v301 = vld [vmem:[%s216 + $0x110] sm:$0xf]
      %v302 = vld [vmem:[%s216 + $0x114] sm:$0xf]
      %v303 = vld [vmem:[%s216 + $0x118] sm:$0xf]
      %v304 = vld [vmem:[%s216 + $0x11c] sm:$0xf]
      %v305 = vld [vmem:[%s216 + $0x120] sm:$0xf]
      %v306 = vld [vmem:[%s216 + $0x124] sm:$0xf]
      %v307 = vld [vmem:[%s216 + $0x128] sm:$0xf]
      %v308 = vld [vmem:[%s216 + $0x12c] sm:$0xf]
      %v309 = vld [vmem:[%s216 + $0x130] sm:$0xf]
      %v310 = vld [vmem:[%s216 + $0x134] sm:$0xf]
      %v311 = vld [vmem:[%s216 + $0x138] sm:$0xf]
      %v312 = vld [vmem:[%s216 + $0x13c] sm:$0xf]
      %v313 = vunpack.c.l.bf16 %v233
      %v314 = vunpack.c.l.bf16 %v234
      %v315 = vunpack.c.l.bf16 %v235
      %v316 = vunpack.c.l.bf16 %v236
      %v317 = vunpack.c.l.bf16 %v237
      %v318 = vunpack.c.l.bf16 %v238
      %v319 = vunpack.c.l.bf16 %v239
      %v320 = vunpack.c.l.bf16 %v240
      %v321 = vunpack.c.l.bf16 %v241
      %v322 = vunpack.c.l.bf16 %v242
      %v323 = vunpack.c.l.bf16 %v243
      %v324 = vunpack.c.l.bf16 %v244
      %v325 = vunpack.c.l.bf16 %v245
      %v326 = vunpack.c.l.bf16 %v246
      %v327 = vunpack.c.l.bf16 %v247
      %v328 = vunpack.c.l.bf16 %v248
      %v329 = vunpack.c.l.bf16 %v249
      %v330 = vunpack.c.l.bf16 %v250
      %v331 = vunpack.c.l.bf16 %v251
      %v332 = vunpack.c.l.bf16 %v252
      %v333 = vunpack.c.l.bf16 %v253
      %v334 = vunpack.c.l.bf16 %v254
      %v335 = vunpack.c.l.bf16 %v255
      %v336 = vunpack.c.l.bf16 %v256
      %v337 = vunpack.c.l.bf16 %v257
      %v338 = vunpack.c.l.bf16 %v258
      %v339 = vunpack.c.l.bf16 %v259
      %v340 = vunpack.c.l.bf16 %v260
      %v341 = vunpack.c.l.bf16 %v261
      %v342 = vunpack.c.l.bf16 %v262
      %v343 = vunpack.c.l.bf16 %v263
      %v344 = vunpack.c.l.bf16 %v264
      %v345 = vunpack.c.l.bf16 %v265
      %v346 = vunpack.c.l.bf16 %v266
      %v347 = vunpack.c.l.bf16 %v267
      %v348 = vunpack.c.l.bf16 %v268
      %v349 = vunpack.c.l.bf16 %v269
      %v350 = vunpack.c.l.bf16 %v270
      %v351 = vunpack.c.l.bf16 %v271
      %v352 = vunpack.c.l.bf16 %v272
      %v353 = vunpack.c.l.bf16 %v273
      %v354 = vunpack.c.l.bf16 %v274
      %v355 = vunpack.c.l.bf16 %v275
      %v356 = vunpack.c.l.bf16 %v276
      %v357 = vunpack.c.l.bf16 %v277
      %v358 = vunpack.c.l.bf16 %v278
      %v359 = vunpack.c.l.bf16 %v279
      %v360 = vunpack.c.l.bf16 %v280
      %v361 = vunpack.c.l.bf16 %v281
      %v362 = vunpack.c.l.bf16 %v282
      %v363 = vunpack.c.l.bf16 %v283
      %v364 = vunpack.c.l.bf16 %v284
      %v365 = vunpack.c.l.bf16 %v285
      %v366 = vunpack.c.l.bf16 %v286
      %v367 = vunpack.c.l.bf16 %v287
      %v368 = vunpack.c.l.bf16 %v288
      %v369 = vunpack.c.l.bf16 %v289
      %v370 = vunpack.c.l.bf16 %v290
      %v371 = vunpack.c.l.bf16 %v291
      %v372 = vunpack.c.l.bf16 %v292
      %v373 = vunpack.c.l.bf16 %v293
      %v374 = vunpack.c.l.bf16 %v294
      %v375 = vunpack.c.l.bf16 %v295
      %v376 = vunpack.c.l.bf16 %v296
      %v377 = vunpack.c.l.bf16 %v297
      %v378 = vunpack.c.l.bf16 %v298
      %v379 = vunpack.c.l.bf16 %v299
      %v380 = vunpack.c.l.bf16 %v300
      %v381 = vunpack.c.l.bf16 %v301
      %v382 = vunpack.c.l.bf16 %v302
      %v383 = vunpack.c.l.bf16 %v303
      %v384 = vunpack.c.l.bf16 %v304
      %v385 = vunpack.c.l.bf16 %v305
      %v386 = vunpack.c.l.bf16 %v306
      %v387 = vunpack.c.l.bf16 %v307
      %v388 = vunpack.c.l.bf16 %v308
      %v389 = vunpack.c.l.bf16 %v309
      %v390 = vunpack.c.l.bf16 %v310
      %v391 = vunpack.c.l.bf16 %v311
      %v392 = vunpack.c.l.bf16 %v312
      %v393 = vld [vmem:[%s220] sm:$0x1]
      %v395 = vlaneseq
      %v396 = vshrl.u32 %v395, 7
      %v397 = vsub.s32 0, %v396
      %v398 = vrot.slane %v393, %v397
      %v400 = vmul.f32 %v313, %v398
      %v401 = vmul.f32 %v314, %v398
      %v402 = vmul.f32 %v315, %v398
      %v403 = vmul.f32 %v316, %v398
      %v404 = vmul.f32 %v317, %v398
      %v405 = vmul.f32 %v318, %v398
      %v406 = vmul.f32 %v319, %v398
      %v407 = vmul.f32 %v320, %v398
      %v408 = vmul.f32 %v321, %v398
      %v409 = vmul.f32 %v322, %v398
      %v410 = vmul.f32 %v323, %v398
      %v411 = vmul.f32 %v324, %v398
      %v412 = vmul.f32 %v325, %v398
      %v413 = vmul.f32 %v326, %v398
      %v414 = vmul.f32 %v327, %v398
      %v415 = vmul.f32 %v328, %v398
      %v416 = vmul.f32 %v329, %v398
      %v417 = vmul.f32 %v330, %v398
      %v418 = vmul.f32 %v331, %v398
      %v419 = vmul.f32 %v332, %v398
      %v420 = vmul.f32 %v333, %v398
      %v421 = vmul.f32 %v334, %v398
      %v422 = vmul.f32 %v335, %v398
      %v423 = vmul.f32 %v336, %v398
      %v424 = vmul.f32 %v337, %v398
      %v425 = vmul.f32 %v338, %v398
      %v426 = vmul.f32 %v339, %v398
      %v427 = vmul.f32 %v340, %v398
      %v428 = vmul.f32 %v341, %v398
      %v429 = vmul.f32 %v342, %v398
      %v430 = vmul.f32 %v343, %v398
      %v431 = vmul.f32 %v344, %v398
      %v432 = vmul.f32 %v345, %v398
      %v433 = vmul.f32 %v346, %v398
      %v434 = vmul.f32 %v347, %v398
      %v435 = vmul.f32 %v348, %v398
      %v436 = vmul.f32 %v349, %v398
      %v437 = vmul.f32 %v350, %v398
      %v438 = vmul.f32 %v351, %v398
      %v439 = vmul.f32 %v352, %v398
      %v440 = vmul.f32 %v353, %v398
      %v441 = vmul.f32 %v354, %v398
      %v442 = vmul.f32 %v355, %v398
      %v443 = vmul.f32 %v356, %v398
      %v444 = vmul.f32 %v357, %v398
      %v445 = vmul.f32 %v358, %v398
      %v446 = vmul.f32 %v359, %v398
      %v447 = vmul.f32 %v360, %v398
      %v448 = vmul.f32 %v361, %v398
      %v449 = vmul.f32 %v362, %v398
      %v450 = vmul.f32 %v363, %v398
      %v451 = vmul.f32 %v364, %v398
      %v452 = vmul.f32 %v365, %v398
      %v453 = vmul.f32 %v366, %v398
      %v454 = vmul.f32 %v367, %v398
      %v455 = vmul.f32 %v368, %v398
      %v456 = vmul.f32 %v369, %v398
      %v457 = vmul.f32 %v370, %v398
      %v458 = vmul.f32 %v371, %v398
      %v459 = vmul.f32 %v372, %v398
      %v460 = vmul.f32 %v373, %v398
      %v461 = vmul.f32 %v374, %v398
      %v462 = vmul.f32 %v375, %v398
      %v463 = vmul.f32 %v376, %v398
      %v464 = vmul.f32 %v377, %v398
      %v465 = vmul.f32 %v378, %v398
      %v466 = vmul.f32 %v379, %v398
      %v467 = vmul.f32 %v380, %v398
      %v468 = vmul.f32 %v381, %v398
      %v469 = vmul.f32 %v382, %v398
      %v470 = vmul.f32 %v383, %v398
      %v471 = vmul.f32 %v384, %v398
      %v472 = vmul.f32 %v385, %v398
      %v473 = vmul.f32 %v386, %v398
      %v474 = vmul.f32 %v387, %v398
      %v475 = vmul.f32 %v388, %v398
      %v476 = vmul.f32 %v389, %v398
      %v477 = vmul.f32 %v390, %v398
      %v478 = vmul.f32 %v391, %v398
      %v479 = vmul.f32 %v392, %v398
      %v480 = vld [vmem:[%s223] sm:$0x1]
      %v482 = vlaneseq
      %v483 = vshrl.u32 %v482, 7
      %v484 = vsub.s32 0, %v483
      %v485 = vrot.slane %v480, %v484
      %v487 = vadd.f32 %v400, %v485
      %v488 = vadd.f32 %v401, %v485
      %v489 = vadd.f32 %v402, %v485
      %v490 = vadd.f32 %v403, %v485
      %v491 = vadd.f32 %v404, %v485
      %v492 = vadd.f32 %v405, %v485
      %v493 = vadd.f32 %v406, %v485
      %v494 = vadd.f32 %v407, %v485
      %v495 = vadd.f32 %v408, %v485
      %v496 = vadd.f32 %v409, %v485
      %v497 = vadd.f32 %v410, %v485
      %v498 = vadd.f32 %v411, %v485
      %v499 = vadd.f32 %v412, %v485
      %v500 = vadd.f32 %v413, %v485
      %v501 = vadd.f32 %v414, %v485
      %v502 = vadd.f32 %v415, %v485
      %v503 = vadd.f32 %v416, %v485
      %v504 = vadd.f32 %v417, %v485
      %v505 = vadd.f32 %v418, %v485
      %v506 = vadd.f32 %v419, %v485
      %v507 = vadd.f32 %v420, %v485
      %v508 = vadd.f32 %v421, %v485
      %v509 = vadd.f32 %v422, %v485
      %v510 = vadd.f32 %v423, %v485
      %v511 = vadd.f32 %v424, %v485
      %v512 = vadd.f32 %v425, %v485
      %v513 = vadd.f32 %v426, %v485
      %v514 = vadd.f32 %v427, %v485
      %v515 = vadd.f32 %v428, %v485
      %v516 = vadd.f32 %v429, %v485
      %v517 = vadd.f32 %v430, %v485
      %v518 = vadd.f32 %v431, %v485
      %v519 = vadd.f32 %v432, %v485
      %v520 = vadd.f32 %v433, %v485
      %v521 = vadd.f32 %v434, %v485
      %v522 = vadd.f32 %v435, %v485
      %v523 = vadd.f32 %v436, %v485
      %v524 = vadd.f32 %v437, %v485
      %v525 = vadd.f32 %v438, %v485
      %v526 = vadd.f32 %v439, %v485
      %v527 = vadd.f32 %v440, %v485
      %v528 = vadd.f32 %v441, %v485
      %v529 = vadd.f32 %v442, %v485
      %v530 = vadd.f32 %v443, %v485
      %v531 = vadd.f32 %v444, %v485
      %v532 = vadd.f32 %v445, %v485
      %v533 = vadd.f32 %v446, %v485
      %v534 = vadd.f32 %v447, %v485
      %v535 = vadd.f32 %v448, %v485
      %v536 = vadd.f32 %v449, %v485
      %v537 = vadd.f32 %v450, %v485
      %v538 = vadd.f32 %v451, %v485
      %v539 = vadd.f32 %v452, %v485
      %v540 = vadd.f32 %v453, %v485
      %v541 = vadd.f32 %v454, %v485
      %v542 = vadd.f32 %v455, %v485
      %v543 = vadd.f32 %v456, %v485
      %v544 = vadd.f32 %v457, %v485
      %v545 = vadd.f32 %v458, %v485
      %v546 = vadd.f32 %v459, %v485
      %v547 = vadd.f32 %v460, %v485
      %v548 = vadd.f32 %v461, %v485
      %v549 = vadd.f32 %v462, %v485
      %v550 = vadd.f32 %v463, %v485
      %v551 = vadd.f32 %v464, %v485
      %v552 = vadd.f32 %v465, %v485
      %v553 = vadd.f32 %v466, %v485
      %v554 = vadd.f32 %v467, %v485
      %v555 = vadd.f32 %v468, %v485
      %v556 = vadd.f32 %v469, %v485
      %v557 = vadd.f32 %v470, %v485
      %v558 = vadd.f32 %v471, %v485
      %v559 = vadd.f32 %v472, %v485
      %v560 = vadd.f32 %v473, %v485
      %v561 = vadd.f32 %v474, %v485
      %v562 = vadd.f32 %v475, %v485
      %v563 = vadd.f32 %v476, %v485
      %v564 = vadd.f32 %v477, %v485
      %v565 = vadd.f32 %v478, %v485
      %v566 = vadd.f32 %v479, %v485
      %vm567 = vcmp.ge.f32.partialorder %v487, 0.0
      %vm568 = vcmp.ge.f32.partialorder %v488, 0.0
      %vm569 = vcmp.ge.f32.partialorder %v489, 0.0
      %vm570 = vcmp.ge.f32.partialorder %v490, 0.0
      %vm571 = vcmp.ge.f32.partialorder %v491, 0.0
      %vm572 = vcmp.ge.f32.partialorder %v492, 0.0
      %vm573 = vcmp.ge.f32.partialorder %v493, 0.0
      %vm574 = vcmp.ge.f32.partialorder %v494, 0.0
      %vm575 = vcmp.ge.f32.partialorder %v495, 0.0
      %vm576 = vcmp.ge.f32.partialorder %v496, 0.0
      %vm577 = vcmp.ge.f32.partialorder %v497, 0.0
      %vm578 = vcmp.ge.f32.partialorder %v498, 0.0
      %vm579 = vcmp.ge.f32.partialorder %v499, 0.0
      %vm580 = vcmp.ge.f32.partialorder %v500, 0.0
      %vm581 = vcmp.ge.f32.partialorder %v501, 0.0
      %vm582 = vcmp.ge.f32.partialorder %v502, 0.0
      %vm583 = vcmp.ge.f32.partialorder %v503, 0.0
      %vm584 = vcmp.ge.f32.partialorder %v504, 0.0
      %vm585 = vcmp.ge.f32.partialorder %v505, 0.0
      %vm586 = vcmp.ge.f32.partialorder %v506, 0.0
      %vm587 = vcmp.ge.f32.partialorder %v507, 0.0
      %vm588 = vcmp.ge.f32.partialorder %v508, 0.0
      %vm589 = vcmp.ge.f32.partialorder %v509, 0.0
      %vm590 = vcmp.ge.f32.partialorder %v510, 0.0
      %vm591 = vcmp.ge.f32.partialorder %v511, 0.0
      %vm592 = vcmp.ge.f32.partialorder %v512, 0.0
      %vm593 = vcmp.ge.f32.partialorder %v513, 0.0
      %vm594 = vcmp.ge.f32.partialorder %v514, 0.0
      %vm595 = vcmp.ge.f32.partialorder %v515, 0.0
      %vm596 = vcmp.ge.f32.partialorder %v516, 0.0
      %vm597 = vcmp.ge.f32.partialorder %v517, 0.0
      %vm598 = vcmp.ge.f32.partialorder %v518, 0.0
      %vm599 = vcmp.ge.f32.partialorder %v519, 0.0
      %vm600 = vcmp.ge.f32.partialorder %v520, 0.0
      %vm601 = vcmp.ge.f32.partialorder %v521, 0.0
      %vm602 = vcmp.ge.f32.partialorder %v522, 0.0
      %vm603 = vcmp.ge.f32.partialorder %v523, 0.0
      %vm604 = vcmp.ge.f32.partialorder %v524, 0.0
      %vm605 = vcmp.ge.f32.partialorder %v525, 0.0
      %vm606 = vcmp.ge.f32.partialorder %v526, 0.0
      %vm607 = vcmp.ge.f32.partialorder %v527, 0.0
      %vm608 = vcmp.ge.f32.partialorder %v528, 0.0
      %vm609 = vcmp.ge.f32.partialorder %v529, 0.0
      %vm610 = vcmp.ge.f32.partialorder %v530, 0.0
      %vm611 = vcmp.ge.f32.partialorder %v531, 0.0
      %vm612 = vcmp.ge.f32.partialorder %v532, 0.0
      %vm613 = vcmp.ge.f32.partialorder %v533, 0.0
      %vm614 = vcmp.ge.f32.partialorder %v534, 0.0
      %vm615 = vcmp.ge.f32.partialorder %v535, 0.0
      %vm616 = vcmp.ge.f32.partialorder %v536, 0.0
      %vm617 = vcmp.ge.f32.partialorder %v537, 0.0
      %vm618 = vcmp.ge.f32.partialorder %v538, 0.0
      %vm619 = vcmp.ge.f32.partialorder %v539, 0.0
      %vm620 = vcmp.ge.f32.partialorder %v540, 0.0
      %vm621 = vcmp.ge.f32.partialorder %v541, 0.0
      %vm622 = vcmp.ge.f32.partialorder %v542, 0.0
      %vm623 = vcmp.ge.f32.partialorder %v543, 0.0
      %vm624 = vcmp.ge.f32.partialorder %v544, 0.0
      %vm625 = vcmp.ge.f32.partialorder %v545, 0.0
      %vm626 = vcmp.ge.f32.partialorder %v546, 0.0
      %vm627 = vcmp.ge.f32.partialorder %v547, 0.0
      %vm628 = vcmp.ge.f32.partialorder %v548, 0.0
      %vm629 = vcmp.ge.f32.partialorder %v549, 0.0
      %vm630 = vcmp.ge.f32.partialorder %v550, 0.0
      %vm631 = vcmp.ge.f32.partialorder %v551, 0.0
      %vm632 = vcmp.ge.f32.partialorder %v552, 0.0
      %vm633 = vcmp.ge.f32.partialorder %v553, 0.0
      %vm634 = vcmp.ge.f32.partialorder %v554, 0.0
      %vm635 = vcmp.ge.f32.partialorder %v555, 0.0
      %vm636 = vcmp.ge.f32.partialorder %v556, 0.0
      %vm637 = vcmp.ge.f32.partialorder %v557, 0.0
      %vm638 = vcmp.ge.f32.partialorder %v558, 0.0
      %vm639 = vcmp.ge.f32.partialorder %v559, 0.0
      %vm640 = vcmp.ge.f32.partialorder %v560, 0.0
      %vm641 = vcmp.ge.f32.partialorder %v561, 0.0
      %vm642 = vcmp.ge.f32.partialorder %v562, 0.0
      %vm643 = vcmp.ge.f32.partialorder %v563, 0.0
      %vm644 = vcmp.ge.f32.partialorder %v564, 0.0
      %vm645 = vcmp.ge.f32.partialorder %v565, 0.0
      %vm646 = vcmp.ge.f32.partialorder %v566, 0.0
      %v647 = vmul.f32 %v487, 0.1
      %v648 = vmul.f32 %v488, 0.1
      %v649 = vmul.f32 %v489, 0.1
      %v650 = vmul.f32 %v490, 0.1
      %v651 = vmul.f32 %v491, 0.1
      %v652 = vmul.f32 %v492, 0.1
      %v653 = vmul.f32 %v493, 0.1
      %v654 = vmul.f32 %v494, 0.1
      %v655 = vmul.f32 %v495, 0.1
      %v656 = vmul.f32 %v496, 0.1
      %v657 = vmul.f32 %v497, 0.1
      %v658 = vmul.f32 %v498, 0.1
      %v659 = vmul.f32 %v499, 0.1
      %v660 = vmul.f32 %v500, 0.1
      %v661 = vmul.f32 %v501, 0.1
      %v662 = vmul.f32 %v502, 0.1
      %v663 = vmul.f32 %v503, 0.1
      %v664 = vmul.f32 %v504, 0.1
      %v665 = vmul.f32 %v505, 0.1
      %v666 = vmul.f32 %v506, 0.1
      %v667 = vmul.f32 %v507, 0.1
      %v668 = vmul.f32 %v508, 0.1
      %v669 = vmul.f32 %v509, 0.1
      %v670 = vmul.f32 %v510, 0.1
      %v671 = vmul.f32 %v511, 0.1
      %v672 = vmul.f32 %v512, 0.1
      %v673 = vmul.f32 %v513, 0.1
      %v674 = vmul.f32 %v514, 0.1
      %v675 = vmul.f32 %v515, 0.1
      %v676 = vmul.f32 %v516, 0.1
      %v677 = vmul.f32 %v517, 0.1
      %v678 = vmul.f32 %v518, 0.1
      %v679 = vmul.f32 %v519, 0.1
      %v680 = vmul.f32 %v520, 0.1
      %v681 = vmul.f32 %v521, 0.1
      %v682 = vmul.f32 %v522, 0.1
      %v683 = vmul.f32 %v523, 0.1
      %v684 = vmul.f32 %v524, 0.1
      %v685 = vmul.f32 %v525, 0.1
      %v686 = vmul.f32 %v526, 0.1
      %v687 = vmul.f32 %v527, 0.1
      %v688 = vmul.f32 %v528, 0.1
      %v689 = vmul.f32 %v529, 0.1
      %v690 = vmul.f32 %v530, 0.1
      %v691 = vmul.f32 %v531, 0.1
      %v692 = vmul.f32 %v532, 0.1
      %v693 = vmul.f32 %v533, 0.1
      %v694 = vmul.f32 %v534, 0.1
      %v695 = vmul.f32 %v535, 0.1
      %v696 = vmul.f32 %v536, 0.1
      %v697 = vmul.f32 %v537, 0.1
      %v698 = vmul.f32 %v538, 0.1
      %v699 = vmul.f32 %v539, 0.1
      %v700 = vmul.f32 %v540, 0.1
      %v701 = vmul.f32 %v541, 0.1
      %v702 = vmul.f32 %v542, 0.1
      %v703 = vmul.f32 %v543, 0.1
      %v704 = vmul.f32 %v544, 0.1
      %v705 = vmul.f32 %v545, 0.1
      %v706 = vmul.f32 %v546, 0.1
      %v707 = vmul.f32 %v547, 0.1
      %v708 = vmul.f32 %v548, 0.1
      %v709 = vmul.f32 %v549, 0.1
      %v710 = vmul.f32 %v550, 0.1
      %v711 = vmul.f32 %v551, 0.1
      %v712 = vmul.f32 %v552, 0.1
      %v713 = vmul.f32 %v553, 0.1
      %v714 = vmul.f32 %v554, 0.1
      %v715 = vmul.f32 %v555, 0.1
      %v716 = vmul.f32 %v556, 0.1
      %v717 = vmul.f32 %v557, 0.1
      %v718 = vmul.f32 %v558, 0.1
      %v719 = vmul.f32 %v559, 0.1
      %v720 = vmul.f32 %v560, 0.1
      %v721 = vmul.f32 %v561, 0.1
      %v722 = vmul.f32 %v562, 0.1
      %v723 = vmul.f32 %v563, 0.1
      %v724 = vmul.f32 %v564, 0.1
      %v725 = vmul.f32 %v565, 0.1
      %v726 = vmul.f32 %v566, 0.1
      %v727 = vsel %vm567, %v487, %v647
      %v728 = vsel %vm568, %v488, %v648
      %v729 = vsel %vm569, %v489, %v649
      %v730 = vsel %vm570, %v490, %v650
      %v731 = vsel %vm571, %v491, %v651
      %v732 = vsel %vm572, %v492, %v652
      %v733 = vsel %vm573, %v493, %v653
      %v734 = vsel %vm574, %v494, %v654
      %v735 = vsel %vm575, %v495, %v655
      %v736 = vsel %vm576, %v496, %v656
      %v737 = vsel %vm577, %v497, %v657
      %v738 = vsel %vm578, %v498, %v658
      %v739 = vsel %vm579, %v499, %v659
      %v740 = vsel %vm580, %v500, %v660
      %v741 = vsel %vm581, %v501, %v661
      %v742 = vsel %vm582, %v502, %v662
      %v743 = vsel %vm583, %v503, %v663
      %v744 = vsel %vm584, %v504, %v664
      %v745 = vsel %vm585, %v505, %v665
      %v746 = vsel %vm586, %v506, %v666
      %v747 = vsel %vm587, %v507, %v667
      %v748 = vsel %vm588, %v508, %v668
      %v749 = vsel %vm589, %v509, %v669
      %v750 = vsel %vm590, %v510, %v670
      %v751 = vsel %vm591, %v511, %v671
      %v752 = vsel %vm592, %v512, %v672
      %v753 = vsel %vm593, %v513, %v673
      %v754 = vsel %vm594, %v514, %v674
      %v755 = vsel %vm595, %v515, %v675
      %v756 = vsel %vm596, %v516, %v676
      %v757 = vsel %vm597, %v517, %v677
      %v758 = vsel %vm598, %v518, %v678
      %v759 = vsel %vm599, %v519, %v679
      %v760 = vsel %vm600, %v520, %v680
      %v761 = vsel %vm601, %v521, %v681
      %v762 = vsel %vm602, %v522, %v682
      %v763 = vsel %vm603, %v523, %v683
      %v764 = vsel %vm604, %v524, %v684
      %v765 = vsel %vm605, %v525, %v685
      %v766 = vsel %vm606, %v526, %v686
      %v767 = vsel %vm607, %v527, %v687
      %v768 = vsel %vm608, %v528, %v688
      %v769 = vsel %vm609, %v529, %v689
      %v770 = vsel %vm610, %v530, %v690
      %v771 = vsel %vm611, %v531, %v691
      %v772 = vsel %vm612, %v532, %v692
      %v773 = vsel %vm613, %v533, %v693
      %v774 = vsel %vm614, %v534, %v694
      %v775 = vsel %vm615, %v535, %v695
      %v776 = vsel %vm616, %v536, %v696
      %v777 = vsel %vm617, %v537, %v697
      %v778 = vsel %vm618, %v538, %v698
      %v779 = vsel %vm619, %v539, %v699
      %v780 = vsel %vm620, %v540, %v700
      %v781 = vsel %vm621, %v541, %v701
      %v782 = vsel %vm622, %v542, %v702
      %v783 = vsel %vm623, %v543, %v703
      %v784 = vsel %vm624, %v544, %v704
      %v785 = vsel %vm625, %v545, %v705
      %v786 = vsel %vm626, %v546, %v706
      %v787 = vsel %vm627, %v547, %v707
      %v788 = vsel %vm628, %v548, %v708
      %v789 = vsel %vm629, %v549, %v709
      %v790 = vsel %vm630, %v550, %v710
      %v791 = vsel %vm631, %v551, %v711
      %v792 = vsel %vm632, %v552, %v712
      %v793 = vsel %vm633, %v553, %v713
      %v794 = vsel %vm634, %v554, %v714
      %v795 = vsel %vm635, %v555, %v715
      %v796 = vsel %vm636, %v556, %v716
      %v797 = vsel %vm637, %v557, %v717
      %v798 = vsel %vm638, %v558, %v718
      %v799 = vsel %vm639, %v559, %v719
      %v800 = vsel %vm640, %v560, %v720
      %v801 = vsel %vm641, %v561, %v721
      %v802 = vsel %vm642, %v562, %v722
      %v803 = vsel %vm643, %v563, %v723
      %v804 = vsel %vm644, %v564, %v724
      %v805 = vsel %vm645, %v565, %v725
      %v806 = vsel %vm646, %v566, %v726
      %v807 = vpack.c.bf16 %v728, %v727
      %v808 = vpack.c.bf16 %v730, %v729
      %v809 = vpack.c.bf16 %v732, %v731
      %v810 = vpack.c.bf16 %v734, %v733
      %v811 = vpack.c.bf16 %v736, %v735
      %v812 = vpack.c.bf16 %v738, %v737
      %v813 = vpack.c.bf16 %v740, %v739
      %v814 = vpack.c.bf16 %v742, %v741
      %v815 = vpack.c.bf16 %v744, %v743
      %v816 = vpack.c.bf16 %v746, %v745
      %v817 = vpack.c.bf16 %v748, %v747
      %v818 = vpack.c.bf16 %v750, %v749
      %v819 = vpack.c.bf16 %v752, %v751
      %v820 = vpack.c.bf16 %v754, %v753
      %v821 = vpack.c.bf16 %v756, %v755
      %v822 = vpack.c.bf16 %v758, %v757
      %v823 = vpack.c.bf16 %v760, %v759
      %v824 = vpack.c.bf16 %v762, %v761
      %v825 = vpack.c.bf16 %v764, %v763
      %v826 = vpack.c.bf16 %v766, %v765
      %v827 = vpack.c.bf16 %v768, %v767
      %v828 = vpack.c.bf16 %v770, %v769
      %v829 = vpack.c.bf16 %v772, %v771
      %v830 = vpack.c.bf16 %v774, %v773
      %v831 = vpack.c.bf16 %v776, %v775
      %v832 = vpack.c.bf16 %v778, %v777
      %v833 = vpack.c.bf16 %v780, %v779
      %v834 = vpack.c.bf16 %v782, %v781
      %v835 = vpack.c.bf16 %v784, %v783
      %v836 = vpack.c.bf16 %v786, %v785
      %v837 = vpack.c.bf16 %v788, %v787
      %v838 = vpack.c.bf16 %v790, %v789
      %v839 = vpack.c.bf16 %v792, %v791
      %v840 = vpack.c.bf16 %v794, %v793
      %v841 = vpack.c.bf16 %v796, %v795
      %v842 = vpack.c.bf16 %v798, %v797
      %v843 = vpack.c.bf16 %v800, %v799
      %v844 = vpack.c.bf16 %v802, %v801
      %v845 = vpack.c.bf16 %v804, %v803
      %v846 = vpack.c.bf16 %v806, %v805
      %v887 = vunpack.c.l.b16 %v807
      %v888 = vunpack.c.h.b16 %v807
      %v889 = vunpack.c.l.b16 %v808
      %v890 = vunpack.c.h.b16 %v808
      %v891 = vunpack.c.l.b16 %v809
      %v892 = vunpack.c.h.b16 %v809
      %v893 = vunpack.c.l.b16 %v810
      %v894 = vunpack.c.h.b16 %v810
      %v895 = vunpack.c.l.b16 %v811
      %v896 = vunpack.c.h.b16 %v811
      %v897 = vunpack.c.l.b16 %v812
      %v898 = vunpack.c.h.b16 %v812
      %v899 = vunpack.c.l.b16 %v813
      %v900 = vunpack.c.h.b16 %v813
      %v901 = vunpack.c.l.b16 %v814
      %v902 = vunpack.c.h.b16 %v814
      %v903 = vunpack.c.l.b16 %v815
      %v904 = vunpack.c.h.b16 %v815
      %v905 = vunpack.c.l.b16 %v816
      %v906 = vunpack.c.h.b16 %v816
      %v907 = vunpack.c.l.b16 %v817
      %v908 = vunpack.c.h.b16 %v817
      %v909 = vunpack.c.l.b16 %v818
      %v910 = vunpack.c.h.b16 %v818
      %v911 = vunpack.c.l.b16 %v819
      %v912 = vunpack.c.h.b16 %v819
      %v913 = vunpack.c.l.b16 %v820
      %v914 = vunpack.c.h.b16 %v820
      %v915 = vunpack.c.l.b16 %v821
      %v916 = vunpack.c.h.b16 %v821
      %v917 = vunpack.c.l.b16 %v822
      %v918 = vunpack.c.h.b16 %v822
      %v919 = vunpack.c.l.b16 %v823
      %v920 = vunpack.c.h.b16 %v823
      %v921 = vunpack.c.l.b16 %v824
      %v922 = vunpack.c.h.b16 %v824
      %v923 = vunpack.c.l.b16 %v825
      %v924 = vunpack.c.h.b16 %v825
      %v925 = vunpack.c.l.b16 %v826
      %v926 = vunpack.c.h.b16 %v826
      %v927 = vunpack.c.l.b16 %v827
      %v928 = vunpack.c.h.b16 %v827
      %v929 = vunpack.c.l.b16 %v828
      %v930 = vunpack.c.h.b16 %v828
      %v931 = vunpack.c.l.b16 %v829
      %v932 = vunpack.c.h.b16 %v829
      %v933 = vunpack.c.l.b16 %v830
      %v934 = vunpack.c.h.b16 %v830
      %v935 = vunpack.c.l.b16 %v831
      %v936 = vunpack.c.h.b16 %v831
      %v937 = vunpack.c.l.b16 %v832
      %v938 = vunpack.c.h.b16 %v832
      %v939 = vunpack.c.l.b16 %v833
      %v940 = vunpack.c.h.b16 %v833
      %v941 = vunpack.c.l.b16 %v834
      %v942 = vunpack.c.h.b16 %v834
      %v943 = vunpack.c.l.b16 %v835
      %v944 = vunpack.c.h.b16 %v835
      %v945 = vunpack.c.l.b16 %v836
      %v946 = vunpack.c.h.b16 %v836
      %v947 = vunpack.c.l.b16 %v837
      %v948 = vunpack.c.h.b16 %v837
      %v949 = vunpack.c.l.b16 %v838
      %v950 = vunpack.c.h.b16 %v838
      %v951 = vunpack.c.l.b16 %v839
      %v952 = vunpack.c.h.b16 %v839
      %v953 = vunpack.c.l.b16 %v840
      %v954 = vunpack.c.h.b16 %v840
      %v955 = vunpack.c.l.b16 %v841
      %v956 = vunpack.c.h.b16 %v841
      %v957 = vunpack.c.l.b16 %v842
      %v958 = vunpack.c.h.b16 %v842
      %v959 = vunpack.c.l.b16 %v843
      %v960 = vunpack.c.h.b16 %v843
      %v961 = vunpack.c.l.b16 %v844
      %v962 = vunpack.c.h.b16 %v844
      %v963 = vunpack.c.l.b16 %v845
      %v964 = vunpack.c.h.b16 %v845
      %v965 = vunpack.c.l.b16 %v846
      %v966 = vunpack.c.h.b16 %v846
      %v967 = vpack.c.b16 %v887, %v887
      %v968 = vpack.c.b16 %v888, %v888
      %v969 = vpack.c.b16 %v889, %v889
      %v970 = vpack.c.b16 %v890, %v890
      %v971 = vpack.c.b16 %v891, %v891
      %v972 = vpack.c.b16 %v892, %v892
      %v973 = vpack.c.b16 %v893, %v893
      %v974 = vpack.c.b16 %v894, %v894
      %v975 = vpack.c.b16 %v895, %v895
      %v976 = vpack.c.b16 %v896, %v896
      %v977 = vpack.c.b16 %v897, %v897
      %v978 = vpack.c.b16 %v898, %v898
      %v979 = vpack.c.b16 %v899, %v899
      %v980 = vpack.c.b16 %v900, %v900
      %v981 = vpack.c.b16 %v901, %v901
      %v982 = vpack.c.b16 %v902, %v902
      %v983 = vpack.c.b16 %v903, %v903
      %v984 = vpack.c.b16 %v904, %v904
      %v985 = vpack.c.b16 %v905, %v905
      %v986 = vpack.c.b16 %v906, %v906
      %v987 = vpack.c.b16 %v907, %v907
      %v988 = vpack.c.b16 %v908, %v908
      %v989 = vpack.c.b16 %v909, %v909
      %v990 = vpack.c.b16 %v910, %v910
      %v991 = vpack.c.b16 %v911, %v911
      %v992 = vpack.c.b16 %v912, %v912
      %v993 = vpack.c.b16 %v913, %v913
      %v994 = vpack.c.b16 %v914, %v914
      %v995 = vpack.c.b16 %v915, %v915
      %v996 = vpack.c.b16 %v916, %v916
      %v997 = vpack.c.b16 %v917, %v917
      %v998 = vpack.c.b16 %v918, %v918
      %v999 = vpack.c.b16 %v919, %v919
      %v1000 = vpack.c.b16 %v920, %v920
      %v1001 = vpack.c.b16 %v921, %v921
      %v1002 = vpack.c.b16 %v922, %v922
      %v1003 = vpack.c.b16 %v923, %v923
      %v1004 = vpack.c.b16 %v924, %v924
      %v1005 = vpack.c.b16 %v925, %v925
      %v1006 = vpack.c.b16 %v926, %v926
      %v1007 = vpack.c.b16 %v927, %v927
      %v1008 = vpack.c.b16 %v928, %v928
      %v1009 = vpack.c.b16 %v929, %v929
      %v1010 = vpack.c.b16 %v930, %v930
      %v1011 = vpack.c.b16 %v931, %v931
      %v1012 = vpack.c.b16 %v932, %v932
      %v1013 = vpack.c.b16 %v933, %v933
      %v1014 = vpack.c.b16 %v934, %v934
      %v1015 = vpack.c.b16 %v935, %v935
      %v1016 = vpack.c.b16 %v936, %v936
      %v1017 = vpack.c.b16 %v937, %v937
      %v1018 = vpack.c.b16 %v938, %v938
      %v1019 = vpack.c.b16 %v939, %v939
      %v1020 = vpack.c.b16 %v940, %v940
      %v1021 = vpack.c.b16 %v941, %v941
      %v1022 = vpack.c.b16 %v942, %v942
      %v1023 = vpack.c.b16 %v943, %v943
      %v1024 = vpack.c.b16 %v944, %v944
      %v1025 = vpack.c.b16 %v945, %v945
      %v1026 = vpack.c.b16 %v946, %v946
      %v1027 = vpack.c.b16 %v947, %v947
      %v1028 = vpack.c.b16 %v948, %v948
      %v1029 = vpack.c.b16 %v949, %v949
      %v1030 = vpack.c.b16 %v950, %v950
      %v1031 = vpack.c.b16 %v951, %v951
      %v1032 = vpack.c.b16 %v952, %v952
      %v1033 = vpack.c.b16 %v953, %v953
      %v1034 = vpack.c.b16 %v954, %v954
      %v1035 = vpack.c.b16 %v955, %v955
      %v1036 = vpack.c.b16 %v956, %v956
      %v1037 = vpack.c.b16 %v957, %v957
      %v1038 = vpack.c.b16 %v958, %v958
      %v1039 = vpack.c.b16 %v959, %v959
      %v1040 = vpack.c.b16 %v960, %v960
      %v1041 = vpack.c.b16 %v961, %v961
      %v1042 = vpack.c.b16 %v962, %v962
      %v1043 = vpack.c.b16 %v963, %v963
      %v1044 = vpack.c.b16 %v964, %v964
      %v1045 = vpack.c.b16 %v965, %v965
      %v1046 = vpack.c.b16 %v966, %v966
      %1127 = vst [vmem:[%s231] sm:$0xf] %v967
      %1128 = vst [vmem:[%s231 + $0x4] sm:$0xf] %v968
      %1129 = vst [vmem:[%s231 + $0x8] sm:$0xf] %v969
      %1130 = vst [vmem:[%s231 + $0xc] sm:$0xf] %v970
      %1131 = vst [vmem:[%s231 + $0x10] sm:$0xf] %v971
      %1132 = vst [vmem:[%s231 + $0x14] sm:$0xf] %v972
      %1133 = vst [vmem:[%s231 + $0x18] sm:$0xf] %v973
      %1134 = vst [vmem:[%s231 + $0x1c] sm:$0xf] %v974
      %1135 = vst [vmem:[%s231 + $0x20] sm:$0xf] %v975
      %1136 = vst [vmem:[%s231 + $0x24] sm:$0xf] %v976
      %1137 = vst [vmem:[%s231 + $0x28] sm:$0xf] %v977
      %1138 = vst [vmem:[%s231 + $0x2c] sm:$0xf] %v978
      %1139 = vst [vmem:[%s231 + $0x30] sm:$0xf] %v979
      %1140 = vst [vmem:[%s231 + $0x34] sm:$0xf] %v980
      %1141 = vst [vmem:[%s231 + $0x38] sm:$0xf] %v981
      %1142 = vst [vmem:[%s231 + $0x3c] sm:$0xf] %v982
      %1143 = vst [vmem:[%s231 + $0x40] sm:$0xf] %v983
      %1144 = vst [vmem:[%s231 + $0x44] sm:$0xf] %v984
      %1145 = vst [vmem:[%s231 + $0x48] sm:$0xf] %v985
      %1146 = vst [vmem:[%s231 + $0x4c] sm:$0xf] %v986
      %1147 = vst [vmem:[%s231 + $0x50] sm:$0xf] %v987
      %1148 = vst [vmem:[%s231 + $0x54] sm:$0xf] %v988
      %1149 = vst [vmem:[%s231 + $0x58] sm:$0xf] %v989
      %1150 = vst [vmem:[%s231 + $0x5c] sm:$0xf] %v990
      %1151 = vst [vmem:[%s231 + $0x60] sm:$0xf] %v991
      %1152 = vst [vmem:[%s231 + $0x64] sm:$0xf] %v992
      %1153 = vst [vmem:[%s231 + $0x68] sm:$0xf] %v993
      %1154 = vst [vmem:[%s231 + $0x6c] sm:$0xf] %v994
      %1155 = vst [vmem:[%s231 + $0x70] sm:$0xf] %v995
      %1156 = vst [vmem:[%s231 + $0x74] sm:$0xf] %v996
      %1157 = vst [vmem:[%s231 + $0x78] sm:$0xf] %v997
      %1158 = vst [vmem:[%s231 + $0x7c] sm:$0xf] %v998
      %1159 = vst [vmem:[%s231 + $0x80] sm:$0xf] %v999
      %1160 = vst [vmem:[%s231 + $0x84] sm:$0xf] %v1000
      %1161 = vst [vmem:[%s231 + $0x88] sm:$0xf] %v1001
      %1162 = vst [vmem:[%s231 + $0x8c] sm:$0xf] %v1002
      %1163 = vst [vmem:[%s231 + $0x90] sm:$0xf] %v1003
      %1164 = vst [vmem:[%s231 + $0x94] sm:$0xf] %v1004
      %1165 = vst [vmem:[%s231 + $0x98] sm:$0xf] %v1005
      %1166 = vst [vmem:[%s231 + $0x9c] sm:$0xf] %v1006
      %1167 = vst [vmem:[%s231 + $0xa0] sm:$0xf] %v1007
      %1168 = vst [vmem:[%s231 + $0xa4] sm:$0xf] %v1008
      %1169 = vst [vmem:[%s231 + $0xa8] sm:$0xf] %v1009
      %1170 = vst [vmem:[%s231 + $0xac] sm:$0xf] %v1010
      %1171 = vst [vmem:[%s231 + $0xb0] sm:$0xf] %v1011
      %1172 = vst [vmem:[%s231 + $0xb4] sm:$0xf] %v1012
      %1173 = vst [vmem:[%s231 + $0xb8] sm:$0xf] %v1013
      %1174 = vst [vmem:[%s231 + $0xbc] sm:$0xf] %v1014
      %1175 = vst [vmem:[%s231 + $0xc0] sm:$0xf] %v1015
      %1176 = vst [vmem:[%s231 + $0xc4] sm:$0xf] %v1016
      %1177 = vst [vmem:[%s231 + $0xc8] sm:$0xf] %v1017
      %1178 = vst [vmem:[%s231 + $0xcc] sm:$0xf] %v1018
      %1179 = vst [vmem:[%s231 + $0xd0] sm:$0xf] %v1019
      %1180 = vst [vmem:[%s231 + $0xd4] sm:$0xf] %v1020
      %1181 = vst [vmem:[%s231 + $0xd8] sm:$0xf] %v1021
      %1182 = vst [vmem:[%s231 + $0xdc] sm:$0xf] %v1022
      %1183 = vst [vmem:[%s231 + $0xe0] sm:$0xf] %v1023
      %1184 = vst [vmem:[%s231 + $0xe4] sm:$0xf] %v1024
      %1185 = vst [vmem:[%s231 + $0xe8] sm:$0xf] %v1025
      %1186 = vst [vmem:[%s231 + $0xec] sm:$0xf] %v1026
      %1187 = vst [vmem:[%s231 + $0xf0] sm:$0xf] %v1027
      %1188 = vst [vmem:[%s231 + $0xf4] sm:$0xf] %v1028
      %1189 = vst [vmem:[%s231 + $0xf8] sm:$0xf] %v1029
      %1190 = vst [vmem:[%s231 + $0xfc] sm:$0xf] %v1030
      %1191 = vst [vmem:[%s231 + $0x100] sm:$0xf] %v1031
      %1192 = vst [vmem:[%s231 + $0x104] sm:$0xf] %v1032
      %1193 = vst [vmem:[%s231 + $0x108] sm:$0xf] %v1033
      %1194 = vst [vmem:[%s231 + $0x10c] sm:$0xf] %v1034
      %1195 = vst [vmem:[%s231 + $0x110] sm:$0xf] %v1035
      %1196 = vst [vmem:[%s231 + $0x114] sm:$0xf] %v1036
      %1197 = vst [vmem:[%s231 + $0x118] sm:$0xf] %v1037
      %1198 = vst [vmem:[%s231 + $0x11c] sm:$0xf] %v1038
      %1199 = vst [vmem:[%s231 + $0x120] sm:$0xf] %v1039
      %1200 = vst [vmem:[%s231 + $0x124] sm:$0xf] %v1040
      %1201 = vst [vmem:[%s231 + $0x128] sm:$0xf] %v1041
      %1202 = vst [vmem:[%s231 + $0x12c] sm:$0xf] %v1042
      %1203 = vst [vmem:[%s231 + $0x130] sm:$0xf] %v1043
      %1204 = vst [vmem:[%s231 + $0x134] sm:$0xf] %v1044
      %1205 = vst [vmem:[%s231 + $0x138] sm:$0xf] %v1045
      %1206 = vst [vmem:[%s231 + $0x13c] sm:$0xf] %v1046
      %s1207 = smul.u32 80, %s18
      %p1208 = scmp.lt.s32.totalorder %s1207, 159
      %s1209 = scalar_select %p1208, %s1207, 159
      %p1210 = scmp.lt.s32.totalorder %s19, 0
      %s1211 = scalar_select %p1210, %s19, 0
      %s1212 = sadd.s32 %s1211, %s1209
      %s1213 = smul.addr %s1212, 4
      %s1214 = scalar_lea.vmem %s3, %s1213
      // Predicated region
      $region33: #{conv_bn_leaky_nhwc.3} parent=31 // pred_check
        %p1215 = pneg %p126
      $region34: #{conv_bn_leaky_nhwc.3} parent=31 // pred_check_branch
        %1217 = sbr.rel (%p1215) target = $region36
      $region35: #{conv_bn_leaky_nhwc.3} parent=31 // pred_region
        %s1218 = smul.u32 80, %s18
      $region36: #{conv_bn_leaky_nhwc.3} parent=31 // pred_fallthru
        _
    $region32: #{conv_bn_leaky_nhwc.3} parent=5 // pred_fallthru
      _
    %p1219 = scmp.le.s32.totalorder 2, %s9
    // Predicated region
    $region37: #{conv_bn_leaky_nhwc.3} parent=5 // pred_check
      %p1220 = pneg %p1219
    $region38: #{conv_bn_leaky_nhwc.3} parent=5 // pred_check_branch
      %1222 = sbr.rel (%p1220) target = $region40
    $region39: #{conv_bn_leaky_nhwc.3} parent=5 // pred_region
      %s1223 = ssub.s32 %s9, 2
      // Predicated region
      $region41: #{conv_bn_leaky_nhwc.3} parent=39 // pred_check
        %p1224 = pneg %p132
      $region42: #{conv_bn_leaky_nhwc.3} parent=39 // pred_check_branch
        %1226 = sbr.rel (%p1224) target = $region44
      $region43: #{conv_bn_leaky_nhwc.3} parent=39 // pred_region
        %s1227 = smul.u32 80, %s20
        %p1228 = scmp.lt.s32.totalorder %s1227, 159
        %s1229 = scalar_select %p1228, %s1227, 159
        %p1230 = scmp.lt.s32.totalorder %s21, 0
        %s1231 = scalar_select %p1230, %s21, 0
        %s1232 = sadd.s32 %s1231, %s1229
        %s1233 = smul.addr %s1232, 4
        %s1234 = scalar_lea.vmem %s3, %s1233
      $region44: #{conv_bn_leaky_nhwc.3} parent=39 // pred_fallthru
        _
    $region40: #{conv_bn_leaky_nhwc.3} parent=5 // pred_fallthru
      _
  $region6: #{conv_bn_leaky_nhwc.3} parent=0 // loop_footer
    %s13 = sadd.s32 1, %s9
  $region7: #{conv_bn_leaky_nhwc.3} parent=0 // loop_footer_branch
    %8 = sbr.rel target = $region3
  $region8: #{conv_bn_leaky_nhwc.3} parent=0 // loop_exit
    _

// kernel: conv_bn_leaky_nhwc.2
$region0: #{conv_bn_leaky_nhwc.2}
  #allocation0 [shape = 'u32[]', space=smem, size = 0x4, offset = 0x4, fixed_abs, tag = 'smem constant byte address 0x4 - core index']
  #allocation1 [shape = 'u32[144,128]{1,0:T(1,128)}', space=vmem, size = 0x12000, scoped, tag = 'internal scratch']
  #allocation2 [shape = 'f32[640,128]{1,0:T(8,128)}', space=vmem, size = 0x50000, scoped, tag = 'scratch operand']
  %s0 = inlined_call_operand.vmem [shape: bf16[1280,128], index: 0, kind: input, shape index: {}]
  %s1 = inlined_call_operand.vmem [shape: bf16[128,128], index: 1, kind: input, shape index: {}]
  %s2 = inlined_call_operand.vmem [shape: bf16[1280,128], index: 2, kind: output, shape index: {0}]
  %s3 = inlined_call_operand.vmem [shape: f32[16,128], index: 3, kind: output, shape index: {1}]
  %s4 = inlined_call_operand.vmem [shape: f32[16,128], index: 4, kind: output, shape index: {2}]
  %5 = xla_tuple %s2, %s3, %s4
  %s6 = sld [smem:[#allocation0]]
  $region65: #{conv_bn_leaky_nhwc.2} parent=0
    _
  %s8 = ssub.s32 1, %s6
  %s9 = scalar_select 0, %s8, %s6
  loop: start=0, step=1, limit=4
  $region2: #{conv_bn_leaky_nhwc.2} parent=0 // loop_pre_header
    _
  $region3: #{conv_bn_leaky_nhwc.2} parent=0 // loop_header
    %s11 = sphi 0, %s15
    %p12 = scmp.ge.s32.totalorder %s11, 4
    %s18 = sphi 0, %s37
    %s19 = sphi 0, %s33
    %s20 = sphi 0, %s29
    %s21 = sphi 0, %s18
    %s22 = sphi 0, %s19
    %s23 = sphi 0, %s20
    %s24 = sphi 0, %s21
    %s25 = sphi 0, %s22
    %s26 = sphi 0, %s23
    %s42 = sphi 0, %s44
    %s45 = sphi 0, %s42
    %s46 = sphi 0, %s45
    %s62 = sphi 0, %s46
    %s70 = sphi 0, %s72
    %s73 = sphi 0, %s70
    %s74 = sphi 0, %s73
    %s90 = sphi 0, %s74
    %s98 = sphi 0, %s100
    %s101 = sphi 0, %s98
    %s102 = sphi 0, %s101
    %s118 = sphi 0, %s102
    %s126 = sphi 0, %s128
    %s129 = sphi 0, %s126
    %s130 = sphi 0, %s129
    %s146 = sphi 0, %s130
    %s154 = sphi 0, %s156
    %s157 = sphi 0, %s154
    %s158 = sphi 0, %s157
    %s174 = sphi 0, %s158
  $region4: #{conv_bn_leaky_nhwc.2} parent=0 // loop_header_branch
    %14 = sbr.rel (%p12) target = $region8
  $region5: #{conv_bn_leaky_nhwc.2} parent=0 // loop_body
    %s16 = ssub.s32 %s11, 1
    %s17 = ssub.s32 %s11, 2
    %s27 = sadd.s32 1, %s20
    %p28 = scmp.ge.s32.totalorder %s27, 1
    %s29 = scalar_select %p28, 0, %s27
    %s30 = sadd.s32 1, %s19
    %s31 = scalar_select %p28, %s30, %s19
    %p32 = scmp.ge.s32.totalorder %s31, 1
    %s33 = scalar_select %p32, 0, %s31
    %s34 = sadd.s32 1, %s18
    %s35 = scalar_select %p32, %s34, %s18
    %p36 = scmp.ge.s32.totalorder %s35, 2
    %s37 = scalar_select %p36, 0, %s35
    %s38 = ssub.s32 %s18, %s37
    %s39 = ssub.s32 %s20, %s29
    %s40 = sor.u32 %s38, %s39
    %p41 = scmp.eq.s32.totalorder %s40, 0
    %s43 = sadd.s32 %s42, 1
    %s44 = scalar_select %p41, %s42, %s43
    %p47 = pneg %p41
    %p48 = scmp.eq.s32.totalorder %s11, 1
    %p49 = por %p47, %p48
    %p50 = scmp.ne.s32.totalorder %s42, %s45
    %p51 = scmp.eq.s32.totalorder %s11, 0
    %p52 = por %p50, %p51
    %p53 = scmp.ne.s32.totalorder %s42, %s45
    %p54 = scmp.eq.s32.totalorder %s16, 1
    %p55 = por %p53, %p54
    %p56 = scmp.ne.s32.totalorder %s45, %s46
    %p57 = scmp.eq.s32.totalorder %s16, 0
    %p58 = por %p56, %p57
    %p59 = scmp.ne.s32.totalorder %s45, %s46
    %p60 = scmp.eq.s32.totalorder %s17, 1
    %p61 = por %p59, %p60
    %p63 = scmp.ne.s32.totalorder %s46, %s62
    %p64 = scmp.eq.s32.totalorder %s17, 0
    %p65 = por %p63, %p64
    %s66 = ssub.s32 %s20, %s29
    %s67 = ssub.s32 %s19, %s33
    %s68 = sor.u32 %s66, %s67
    %p69 = scmp.eq.s32.totalorder %s68, 0
    %s71 = sadd.s32 %s70, 1
    %s72 = scalar_select %p69, %s70, %s71
    %p75 = pneg %p69
    %p76 = scmp.eq.s32.totalorder %s11, 1
    %p77 = por %p75, %p76
    %p78 = scmp.ne.s32.totalorder %s70, %s73
    %p79 = scmp.eq.s32.totalorder %s11, 0
    %p80 = por %p78, %p79
    %p81 = scmp.ne.s32.totalorder %s70, %s73
    %p82 = scmp.eq.s32.totalorder %s16, 1
    %p83 = por %p81, %p82
    %p84 = scmp.ne.s32.totalorder %s73, %s74
    %p85 = scmp.eq.s32.totalorder %s16, 0
    %p86 = por %p84, %p85
    %p87 = scmp.ne.s32.totalorder %s73, %s74
    %p88 = scmp.eq.s32.totalorder %s17, 1
    %p89 = por %p87, %p88
    %p91 = scmp.ne.s32.totalorder %s74, %s90
    %p92 = scmp.eq.s32.totalorder %s17, 0
    %p93 = por %p91, %p92
    %s94 = ssub.s32 %s18, %s37
    %s95 = ssub.s32 %s19, %s33
    %s96 = sor.u32 %s94, %s95
    %p97 = scmp.eq.s32.totalorder %s96, 0
    %s99 = sadd.s32 %s98, 1
    %s100 = scalar_select %p97, %s98, %s99
    %p103 = pneg %p97
    %p104 = scmp.eq.s32.totalorder %s11, 1
    %p105 = por %p103, %p104
    %p106 = scmp.ne.s32.totalorder %s98, %s101
    %p107 = scmp.eq.s32.totalorder %s11, 0
    %p108 = por %p106, %p107
    %p109 = scmp.ne.s32.totalorder %s98, %s101
    %p110 = scmp.eq.s32.totalorder %s16, 1
    %p111 = por %p109, %p110
    %p112 = scmp.ne.s32.totalorder %s101, %s102
    %p113 = scmp.eq.s32.totalorder %s16, 0
    %p114 = por %p112, %p113
    %p115 = scmp.ne.s32.totalorder %s101, %s102
    %p116 = scmp.eq.s32.totalorder %s17, 1
    %p117 = por %p115, %p116
    %p119 = scmp.ne.s32.totalorder %s102, %s118
    %p120 = scmp.eq.s32.totalorder %s17, 0
    %p121 = por %p119, %p120
    %s122 = ssub.s32 %s18, %s37
    %s123 = ssub.s32 %s19, %s33
    %s124 = sor.u32 %s122, %s123
    %p125 = scmp.eq.s32.totalorder %s124, 0
    %s127 = sadd.s32 %s126, 1
    %s128 = scalar_select %p125, %s126, %s127
    %p131 = pneg %p125
    %p132 = scmp.eq.s32.totalorder %s11, 1
    %p133 = por %p131, %p132
    %p134 = scmp.ne.s32.totalorder %s126, %s129
    %p135 = scmp.eq.s32.totalorder %s11, 0
    %p136 = por %p134, %p135
    %p137 = scmp.ne.s32.totalorder %s126, %s129
    %p138 = scmp.eq.s32.totalorder %s16, 1
    %p139 = por %p137, %p138
    %p140 = scmp.ne.s32.totalorder %s129, %s130
    %p141 = scmp.eq.s32.totalorder %s16, 0
    %p142 = por %p140, %p141
    %p143 = scmp.ne.s32.totalorder %s129, %s130
    %p144 = scmp.eq.s32.totalorder %s17, 1
    %p145 = por %p143, %p144
    %p147 = scmp.ne.s32.totalorder %s130, %s146
    %p148 = scmp.eq.s32.totalorder %s17, 0
    %p149 = por %p147, %p148
    %s150 = ssub.s32 %s18, %s37
    %s151 = ssub.s32 %s19, %s33
    %s152 = sor.u32 %s150, %s151
    %p153 = scmp.eq.s32.totalorder %s152, 0
    %s155 = sadd.s32 %s154, 1
    %s156 = scalar_select %p153, %s154, %s155
    %p159 = pneg %p153
    %p160 = scmp.eq.s32.totalorder %s11, 1
    %p161 = por %p159, %p160
    %p162 = scmp.ne.s32.totalorder %s154, %s157
    %p163 = scmp.eq.s32.totalorder %s11, 0
    %p164 = por %p162, %p163
    %p165 = scmp.ne.s32.totalorder %s154, %s157
    %p166 = scmp.eq.s32.totalorder %s16, 1
    %p167 = por %p165, %p166
    %p168 = scmp.ne.s32.totalorder %s157, %s158
    %p169 = scmp.eq.s32.totalorder %s16, 0
    %p170 = por %p168, %p169
    %p171 = scmp.ne.s32.totalorder %s157, %s158
    %p172 = scmp.eq.s32.totalorder %s17, 1
    %p173 = por %p171, %p172
    %p175 = scmp.ne.s32.totalorder %s158, %s174
    %p176 = scmp.eq.s32.totalorder %s17, 0
    %p177 = por %p175, %p176
    %p178 = scmp.le.s32.totalorder 1, %s11
    %p179 = scmp.lt.s32.totalorder %s11, 3
    %p180 = pnand %p178, %p179
    %p181 = pneg %p180
    // Predicated region
    $region9: #{conv_bn_leaky_nhwc.2} parent=5 // pred_check
      _
    $region10: #{conv_bn_leaky_nhwc.2} parent=5 // pred_check_branch
      %183 = sbr.rel (%p180) target = $region12
    $region11: #{conv_bn_leaky_nhwc.2} parent=5 // pred_region
      %s184 = ssub.s32 %s11, 1
      // Predicated region
      $region13: #{conv_bn_leaky_nhwc.2} parent=11 // pred_check
        %p185 = pneg %p86
      $region14: #{conv_bn_leaky_nhwc.2} parent=11 // pred_check_branch
        %187 = sbr.rel (%p185) target = $region16
      $region15: #{conv_bn_leaky_nhwc.2} parent=11 // pred_region
        %s188 = smul.u32 16, %s23
        %p189 = scmp.lt.s32.totalorder %s188, 15
        %s190 = scalar_select %p189, %s188, 15
        %p191 = scmp.lt.s32.totalorder %s22, 0
        %s192 = scalar_select %p191, %s22, 0
        %s193 = sadd.s32 %s192, %s190
        %s194 = smul.addr %s193, 4
        %s195 = scalar_lea.vmem %s1, %s194
        %s196 = smul.u32 16, %s23
      $region16: #{conv_bn_leaky_nhwc.2} parent=11 // pred_fallthru
        _
    $region12: #{conv_bn_leaky_nhwc.2} parent=5 // pred_fallthru
      _
    %p197 = scmp.lt.s32.totalorder %s11, 2
    // Predicated region
    $region17: #{conv_bn_leaky_nhwc.2} parent=5 // pred_check
      %p198 = pneg %p197
    $region18: #{conv_bn_leaky_nhwc.2} parent=5 // pred_check_branch
      %200 = sbr.rel (%p198) target = $region20
    $region19: #{conv_bn_leaky_nhwc.2} parent=5 // pred_region
      // Predicated region
      $region21: #{conv_bn_leaky_nhwc.2} parent=19 // pred_check
        %p201 = pneg %p52
      $region22: #{conv_bn_leaky_nhwc.2} parent=19 // pred_check_branch
        %203 = sbr.rel (%p201) target = $region24
      $region23: #{conv_bn_leaky_nhwc.2} parent=19 // pred_region
        %s204 = smul.u32 80, %s18
        %p205 = scmp.lt.s32.totalorder %s204, 159
        %s206 = scalar_select %p205, %s204, 159
        %p207 = scmp.lt.s32.totalorder %s20, 0
        %s208 = scalar_select %p207, %s20, 0
        %s209 = sadd.s32 %s208, %s206
        %s210 = smul.addr %s209, 4
        %s211 = scalar_lea.vmem %s0, %s210
        %s212 = smul.u32 80, %s18
      $region24: #{conv_bn_leaky_nhwc.2} parent=19 // pred_fallthru
        _
    $region20: #{conv_bn_leaky_nhwc.2} parent=5 // pred_fallthru
      _
    %p213 = scmp.le.s32.totalorder 1, %s11
    %p214 = scmp.lt.s32.totalorder %s11, 3
    %p215 = pnand %p213, %p214
    %p216 = pneg %p215
    // Predicated region
    $region25: #{conv_bn_leaky_nhwc.2} parent=5 // pred_check
      _
    $region26: #{conv_bn_leaky_nhwc.2} parent=5 // pred_check_branch
      %218 = sbr.rel (%p215) target = $region28
    $region27: #{conv_bn_leaky_nhwc.2} parent=5 // pred_region
      %s219 = ssub.s32 %s11, 1
      %s220 = smul.u32 80, %s21
      %p221 = scmp.lt.s32.totalorder %s220, 159
      %s222 = scalar_select %p221, %s220, 159
      %p223 = scmp.lt.s32.totalorder %s23, 0
      %s224 = scalar_select %p223, %s23, 0
      %s225 = sadd.s32 %s224, %s222
      %s226 = smul.addr %s225, 4
      %s227 = scalar_lea.vmem %s0, %s226
      %p228 = pneg %p58
      %p229 = pneg %p55
      %s230 = smul.u32 16, %s23
      %p231 = scmp.lt.s32.totalorder %s230, 15
      %s232 = scalar_select %p231, %s230, 15
      %p233 = scmp.lt.s32.totalorder %s22, 0
      %s234 = scalar_select %p233, %s22, 0
      %s235 = sadd.s32 %s234, %s232
      %s236 = smul.addr %s235, 4
      %s237 = scalar_lea.vmem %s1, %s236
      %p238 = pneg %p86
      %p239 = pneg %p83
      %p240 = pneg %p114
      %p241 = pneg %p111
      %s242 = smul.u32 80, %s21
      %p243 = scmp.lt.s32.totalorder %s242, 159
      %s244 = scalar_select %p243, %s242, 159
      %p245 = scmp.lt.s32.totalorder %s22, 0
      %s246 = scalar_select %p245, %s22, 0
      %s247 = sadd.s32 %s246, %s244
      %s248 = smul.addr %s247, 4
      %s249 = scalar_lea.vmem %s2, %s248
      %p250 = pneg %p142
      %p251 = pneg %p139
      %p252 = scmp.lt.s32.totalorder %s21, 1
      %s253 = scalar_select %p252, %s21, 1
      %p254 = scmp.lt.s32.totalorder %s22, 0
      %s255 = scalar_select %p254, %s22, 0
      %s256 = sadd.s32 %s255, %s253
      %s257 = smul.addr %s256, 8
      %s258 = scalar_lea.vmem %s3, %s257
      %p259 = pneg %p170
      %p260 = pneg %p167
      %p261 = scmp.lt.s32.totalorder %s21, 1
      %s262 = scalar_select %p261, %s21, 1
      %p263 = scmp.lt.s32.totalorder %s22, 0
      %s264 = scalar_select %p263, %s22, 0
      %s265 = sadd.s32 %s264, %s262
      %s266 = smul.addr %s265, 8
      %s267 = scalar_lea.vmem %s4, %s266
      %s268 = smul.u32 80, %s21
      %p269 = scmp.lt.s32.totalorder %s268, 159
      %s270 = scalar_select %p269, %s268, 159
      %p271 = scmp.lt.s32.totalorder %s23, 0
      %s272 = scalar_select %p271, %s23, 0
      %s273 = sadd.s32 %s272, %s270
      %s274 = smul.addr %s273, 4
      %s275 = scalar_lea.vmem %s0, %s274
      %s276 = smul.u32 80, %s21
      %s277 = smul.u32 16, %s23
      %p278 = scmp.lt.s32.totalorder %s277, 15
      %s279 = scalar_select %p278, %s277, 15
      %p280 = scmp.lt.s32.totalorder %s22, 0
      %s281 = scalar_select %p280, %s22, 0
      %s282 = sadd.s32 %s281, %s279
      %s283 = smul.addr %s282, 4
      %s284 = scalar_lea.vmem %s1, %s283
      %s285 = smul.u32 16, %s23
      %s286 = smul.u32 80, %s21
      %p287 = scmp.lt.s32.totalorder %s286, 159
      %s288 = scalar_select %p287, %s286, 159
      %p289 = scmp.lt.s32.totalorder %s22, 0
      %s290 = scalar_select %p289, %s22, 0
      %s291 = sadd.s32 %s290, %s288
      %s292 = smul.addr %s291, 4
      %s293 = scalar_lea.vmem %s2, %s292
      %s294 = smul.u32 80, %s21
      %p295 = scmp.lt.s32.totalorder %s21, 1
      %s296 = scalar_select %p295, %s21, 1
      %p297 = scmp.lt.s32.totalorder %s22, 0
      %s298 = scalar_select %p297, %s22, 0
      %s299 = sadd.s32 %s298, %s296
      %s300 = smul.addr %s299, 8
      %s301 = scalar_lea.vmem %s3, %s300
      %p302 = scmp.lt.s32.totalorder %s21, 1
      %s303 = scalar_select %p302, %s21, 1
      %p304 = scmp.lt.s32.totalorder %s22, 0
      %s305 = scalar_select %p304, %s22, 0
      %s306 = sadd.s32 %s305, %s303
      %s307 = smul.addr %s306, 8
      %s308 = scalar_lea.vmem %s4, %s307
      %p310 = scmp.eq.s32.totalorder %s23, 0
      // Predicated region
      $region29: #{conv_bn_leaky_nhwc.2} parent=27 // pred_check
        %p311 = pneg %p310
      $region30: #{conv_bn_leaky_nhwc.2} parent=27 // pred_check_branch
        %313 = sbr.rel (%p311) target = $region32
      $region31: #{conv_bn_leaky_nhwc.2} parent=27 // pred_region
        %314 = vst [vmem:[#allocation2] sm:$0xff] 0.0
        %315 = vst [vmem:[#allocation2 + $0x8] sm:$0xff] 0.0
        %316 = vst [vmem:[#allocation2 + $0x10] sm:$0xff] 0.0
        %317 = vst [vmem:[#allocation2 + $0x18] sm:$0xff] 0.0
        %318 = vst [vmem:[#allocation2 + $0x20] sm:$0xff] 0.0
        %319 = vst [vmem:[#allocation2 + $0x28] sm:$0xff] 0.0
        %320 = vst [vmem:[#allocation2 + $0x30] sm:$0xff] 0.0
        %321 = vst [vmem:[#allocation2 + $0x38] sm:$0xff] 0.0
        %322 = vst [vmem:[#allocation2 + $0x40] sm:$0xff] 0.0
        %323 = vst [vmem:[#allocation2 + $0x48] sm:$0xff] 0.0
        %324 = vst [vmem:[#allocation2 + $0x50] sm:$0xff] 0.0
        %325 = vst [vmem:[#allocation2 + $0x58] sm:$0xff] 0.0
        %326 = vst [vmem:[#allocation2 + $0x60] sm:$0xff] 0.0
        %327 = vst [vmem:[#allocation2 + $0x68] sm:$0xff] 0.0
        %328 = vst [vmem:[#allocation2 + $0x70] sm:$0xff] 0.0
        %329 = vst [vmem:[#allocation2 + $0x78] sm:$0xff] 0.0
        %330 = vst [vmem:[#allocation2 + $0x80] sm:$0xff] 0.0
        %331 = vst [vmem:[#allocation2 + $0x88] sm:$0xff] 0.0
        %332 = vst [vmem:[#allocation2 + $0x90] sm:$0xff] 0.0
        %333 = vst [vmem:[#allocation2 + $0x98] sm:$0xff] 0.0
        %334 = vst [vmem:[#allocation2 + $0xa0] sm:$0xff] 0.0
        %335 = vst [vmem:[#allocation2 + $0xa8] sm:$0xff] 0.0
        %336 = vst [vmem:[#allocation2 + $0xb0] sm:$0xff] 0.0
        %337 = vst [vmem:[#allocation2 + $0xb8] sm:$0xff] 0.0
        %338 = vst [vmem:[#allocation2 + $0xc0] sm:$0xff] 0.0
        %339 = vst [vmem:[#allocation2 + $0xc8] sm:$0xff] 0.0
        %340 = vst [vmem:[#allocation2 + $0xd0] sm:$0xff] 0.0
        %341 = vst [vmem:[#allocation2 + $0xd8] sm:$0xff] 0.0
        %342 = vst [vmem:[#allocation2 + $0xe0] sm:$0xff] 0.0
        %343 = vst [vmem:[#allocation2 + $0xe8] sm:$0xff] 0.0
        %344 = vst [vmem:[#allocation2 + $0xf0] sm:$0xff] 0.0
        %345 = vst [vmem:[#allocation2 + $0xf8] sm:$0xff] 0.0
        %346 = vst [vmem:[#allocation2 + $0x100] sm:$0xff] 0.0
        %347 = vst [vmem:[#allocation2 + $0x108] sm:$0xff] 0.0
        %348 = vst [vmem:[#allocation2 + $0x110] sm:$0xff] 0.0
        %349 = vst [vmem:[#allocation2 + $0x118] sm:$0xff] 0.0
        %350 = vst [vmem:[#allocation2 + $0x120] sm:$0xff] 0.0
        %351 = vst [vmem:[#allocation2 + $0x128] sm:$0xff] 0.0
        %352 = vst [vmem:[#allocation2 + $0x130] sm:$0xff] 0.0
        %353 = vst [vmem:[#allocation2 + $0x138] sm:$0xff] 0.0
        %354 = vst [vmem:[#allocation2 + $0x140] sm:$0xff] 0.0
        %355 = vst [vmem:[#allocation2 + $0x148] sm:$0xff] 0.0
        %356 = vst [vmem:[#allocation2 + $0x150] sm:$0xff] 0.0
        %357 = vst [vmem:[#allocation2 + $0x158] sm:$0xff] 0.0
        %358 = vst [vmem:[#allocation2 + $0x160] sm:$0xff] 0.0
        %359 = vst [vmem:[#allocation2 + $0x168] sm:$0xff] 0.0
        %360 = vst [vmem:[#allocation2 + $0x170] sm:$0xff] 0.0
        %361 = vst [vmem:[#allocation2 + $0x178] sm:$0xff] 0.0
        %362 = vst [vmem:[#allocation2 + $0x180] sm:$0xff] 0.0
        %363 = vst [vmem:[#allocation2 + $0x188] sm:$0xff] 0.0
        %364 = vst [vmem:[#allocation2 + $0x190] sm:$0xff] 0.0
        %365 = vst [vmem:[#allocation2 + $0x198] sm:$0xff] 0.0
        %366 = vst [vmem:[#allocation2 + $0x1a0] sm:$0xff] 0.0
        %367 = vst [vmem:[#allocation2 + $0x1a8] sm:$0xff] 0.0
        %368 = vst [vmem:[#allocation2 + $0x1b0] sm:$0xff] 0.0
        %369 = vst [vmem:[#allocation2 + $0x1b8] sm:$0xff] 0.0
        %370 = vst [vmem:[#allocation2 + $0x1c0] sm:$0xff] 0.0
        %371 = vst [vmem:[#allocation2 + $0x1c8] sm:$0xff] 0.0
        %372 = vst [vmem:[#allocation2 + $0x1d0] sm:$0xff] 0.0
        %373 = vst [vmem:[#allocation2 + $0x1d8] sm:$0xff] 0.0
        %374 = vst [vmem:[#allocation2 + $0x1e0] sm:$0xff] 0.0
        %375 = vst [vmem:[#allocation2 + $0x1e8] sm:$0xff] 0.0
        %376 = vst [vmem:[#allocation2 + $0x1f0] sm:$0xff] 0.0
        %377 = vst [vmem:[#allocation2 + $0x1f8] sm:$0xff] 0.0
        %378 = vst [vmem:[#allocation2 + $0x200] sm:$0xff] 0.0
        %379 = vst [vmem:[#allocation2 + $0x208] sm:$0xff] 0.0
        %380 = vst [vmem:[#allocation2 + $0x210] sm:$0xff] 0.0
        %381 = vst [vmem:[#allocation2 + $0x218] sm:$0xff] 0.0
        %382 = vst [vmem:[#allocation2 + $0x220] sm:$0xff] 0.0
        %383 = vst [vmem:[#allocation2 + $0x228] sm:$0xff] 0.0
        %384 = vst [vmem:[#allocation2 + $0x230] sm:$0xff] 0.0
        %385 = vst [vmem:[#allocation2 + $0x238] sm:$0xff] 0.0
        %386 = vst [vmem:[#allocation2 + $0x240] sm:$0xff] 0.0
        %387 = vst [vmem:[#allocation2 + $0x248] sm:$0xff] 0.0
        %388 = vst [vmem:[#allocation2 + $0x250] sm:$0xff] 0.0
        %389 = vst [vmem:[#allocation2 + $0x258] sm:$0xff] 0.0
        %390 = vst [vmem:[#allocation2 + $0x260] sm:$0xff] 0.0
        %391 = vst [vmem:[#allocation2 + $0x268] sm:$0xff] 0.0
        %392 = vst [vmem:[#allocation2 + $0x270] sm:$0xff] 0.0
        %393 = vst [vmem:[#allocation2 + $0x278] sm:$0xff] 0.0
      $region32: #{conv_bn_leaky_nhwc.2} parent=27 // pred_fallthru
        _
      %v394 = vld [vmem:[#allocation2] sm:$0xff]
      %v395 = vld [vmem:[#allocation2 + $0x8] sm:$0xff]
      %v396 = vld [vmem:[#allocation2 + $0x10] sm:$0xff]
      %v397 = vld [vmem:[#allocation2 + $0x18] sm:$0xff]
      %v398 = vld [vmem:[#allocation2 + $0x20] sm:$0xff]
      %v399 = vld [vmem:[#allocation2 + $0x28] sm:$0xff]
      %v400 = vld [vmem:[#allocation2 + $0x30] sm:$0xff]
      %v401 = vld [vmem:[#allocation2 + $0x38] sm:$0xff]
      %v402 = vld [vmem:[#allocation2 + $0x40] sm:$0xff]
      %v403 = vld [vmem:[#allocation2 + $0x48] sm:$0xff]
      %v404 = vld [vmem:[#allocation2 + $0x50] sm:$0xff]
      %v405 = vld [vmem:[#allocation2 + $0x58] sm:$0xff]
      %v406 = vld [vmem:[#allocation2 + $0x60] sm:$0xff]
      %v407 = vld [vmem:[#allocation2 + $0x68] sm:$0xff]
      %v408 = vld [vmem:[#allocation2 + $0x70] sm:$0xff]
      %v409 = vld [vmem:[#allocation2 + $0x78] sm:$0xff]
      %v410 = vld [vmem:[#allocation2 + $0x80] sm:$0xff]
      %v411 = vld [vmem:[#allocation2 + $0x88] sm:$0xff]
      %v412 = vld [vmem:[#allocation2 + $0x90] sm:$0xff]
      %v413 = vld [vmem:[#allocation2 + $0x98] sm:$0xff]
      %v414 = vld [vmem:[#allocation2 + $0xa0] sm:$0xff]
      %v415 = vld [vmem:[#allocation2 + $0xa8] sm:$0xff]
      %v416 = vld [vmem:[#allocation2 + $0xb0] sm:$0xff]
      %v417 = vld [vmem:[#allocation2 + $0xb8] sm:$0xff]
      %v418 = vld [vmem:[#allocation2 + $0xc0] sm:$0xff]
      %v419 = vld [vmem:[#allocation2 + $0xc8] sm:$0xff]
      %v420 = vld [vmem:[#allocation2 + $0xd0] sm:$0xff]
      %v421 = vld [vmem:[#allocation2 + $0xd8] sm:$0xff]
      %v422 = vld [vmem:[#allocation2 + $0xe0] sm:$0xff]
      %v423 = vld [vmem:[#allocation2 + $0xe8] sm:$0xff]
      %v424 = vld [vmem:[#allocation2 + $0xf0] sm:$0xff]
      %v425 = vld [vmem:[#allocation2 + $0xf8] sm:$0xff]
      %v426 = vld [vmem:[#allocation2 + $0x100] sm:$0xff]
      %v427 = vld [vmem:[#allocation2 + $0x108] sm:$0xff]
      %v428 = vld [vmem:[#allocation2 + $0x110] sm:$0xff]
      %v429 = vld [vmem:[#allocation2 + $0x118] sm:$0xff]
      %v430 = vld [vmem:[#allocation2 + $0x120] sm:$0xff]
      %v431 = vld [vmem:[#allocation2 + $0x128] sm:$0xff]
      %v432 = vld [vmem:[#allocation2 + $0x130] sm:$0xff]
      %v433 = vld [vmem:[#allocation2 + $0x138] sm:$0xff]
      %v434 = vld [vmem:[#allocation2 + $0x140] sm:$0xff]
      %v435 = vld [vmem:[#allocation2 + $0x148] sm:$0xff]
      %v436 = vld [vmem:[#allocation2 + $0x150] sm:$0xff]
      %v437 = vld [vmem:[#allocation2 + $0x158] sm:$0xff]
      %v438 = vld [vmem:[#allocation2 + $0x160] sm:$0xff]
      %v439 = vld [vmem:[#allocation2 + $0x168] sm:$0xff]
      %v440 = vld [vmem:[#allocation2 + $0x170] sm:$0xff]
      %v441 = vld [vmem:[#allocation2 + $0x178] sm:$0xff]
      %v442 = vld [vmem:[#allocation2 + $0x180] sm:$0xff]
      %v443 = vld [vmem:[#allocation2 + $0x188] sm:$0xff]
      %v444 = vld [vmem:[#allocation2 + $0x190] sm:$0xff]
      %v445 = vld [vmem:[#allocation2 + $0x198] sm:$0xff]
      %v446 = vld [vmem:[#allocation2 + $0x1a0] sm:$0xff]
      %v447 = vld [vmem:[#allocation2 + $0x1a8] sm:$0xff]
      %v448 = vld [vmem:[#allocation2 + $0x1b0] sm:$0xff]
      %v449 = vld [vmem:[#allocation2 + $0x1b8] sm:$0xff]
      %v450 = vld [vmem:[#allocation2 + $0x1c0] sm:$0xff]
      %v451 = vld [vmem:[#allocation2 + $0x1c8] sm:$0xff]
      %v452 = vld [vmem:[#allocation2 + $0x1d0] sm:$0xff]
      %v453 = vld [vmem:[#allocation2 + $0x1d8] sm:$0xff]
      %v454 = vld [vmem:[#allocation2 + $0x1e0] sm:$0xff]
      %v455 = vld [vmem:[#allocation2 + $0x1e8] sm:$0xff]
      %v456 = vld [vmem:[#allocation2 + $0x1f0] sm:$0xff]
      %v457 = vld [vmem:[#allocation2 + $0x1f8] sm:$0xff]
      %v458 = vld [vmem:[#allocation2 + $0x200] sm:$0xff]
      %v459 = vld [vmem:[#allocation2 + $0x208] sm:$0xff]
      %v460 = vld [vmem:[#allocation2 + $0x210] sm:$0xff]
      %v461 = vld [vmem:[#allocation2 + $0x218] sm:$0xff]
      %v462 = vld [vmem:[#allocation2 + $0x220] sm:$0xff]
      %v463 = vld [vmem:[#allocation2 + $0x228] sm:$0xff]
      %v464 = vld [vmem:[#allocation2 + $0x230] sm:$0xff]
      %v465 = vld [vmem:[#allocation2 + $0x238] sm:$0xff]
      %v466 = vld [vmem:[#allocation2 + $0x240] sm:$0xff]
      %v467 = vld [vmem:[#allocation2 + $0x248] sm:$0xff]
      %v468 = vld [vmem:[#allocation2 + $0x250] sm:$0xff]
      %v469 = vld [vmem:[#allocation2 + $0x258] sm:$0xff]
      %v470 = vld [vmem:[#allocation2 + $0x260] sm:$0xff]
      %v471 = vld [vmem:[#allocation2 + $0x268] sm:$0xff]
      %v472 = vld [vmem:[#allocation2 + $0x270] sm:$0xff]
      %v473 = vld [vmem:[#allocation2 + $0x278] sm:$0xff]
      %v474 = vld [vmem:[%s275] sm:$0xf]
      %v475 = vld [vmem:[%s275 + $0x4] sm:$0xf]
      %v476 = vld [vmem:[%s275 + $0x8] sm:$0xf]
      %v477 = vld [vmem:[%s275 + $0xc] sm:$0xf]
      %v478 = vld [vmem:[%s275 + $0x10] sm:$0xf]
      %v479 = vld [vmem:[%s275 + $0x14] sm:$0xf]
      %v480 = vld [vmem:[%s275 + $0x18] sm:$0xf]
      %v481 = vld [vmem:[%s275 + $0x1c] sm:$0xf]
      %v482 = vld [vmem:[%s275 + $0x20] sm:$0xf]
      %v483 = vld [vmem:[%s275 + $0x24] sm:$0xf]
      %v484 = vld [vmem:[%s275 + $0x28] sm:$0xf]
      %v485 = vld [vmem:[%s275 + $0x2c] sm:$0xf]
      %v486 = vld [vmem:[%s275 + $0x30] sm:$0xf]
      %v487 = vld [vmem:[%s275 + $0x34] sm:$0xf]
      %v488 = vld [vmem:[%s275 + $0x38] sm:$0xf]
      %v489 = vld [vmem:[%s275 + $0x3c] sm:$0xf]
      %v490 = vld [vmem:[%s275 + $0x40] sm:$0xf]
      %v491 = vld [vmem:[%s275 + $0x44] sm:$0xf]
      %v492 = vld [vmem:[%s275 + $0x48] sm:$0xf]
      %v493 = vld [vmem:[%s275 + $0x4c] sm:$0xf]
      %v494 = vld [vmem:[%s275 + $0x50] sm:$0xf]
      %v495 = vld [vmem:[%s275 + $0x54] sm:$0xf]
      %v496 = vld [vmem:[%s275 + $0x58] sm:$0xf]
      %v497 = vld [vmem:[%s275 + $0x5c] sm:$0xf]
      %v498 = vld [vmem:[%s275 + $0x60] sm:$0xf]
      %v499 = vld [vmem:[%s275 + $0x64] sm:$0xf]
      %v500 = vld [vmem:[%s275 + $0x68] sm:$0xf]
      %v501 = vld [vmem:[%s275 + $0x6c] sm:$0xf]
      %v502 = vld [vmem:[%s275 + $0x70] sm:$0xf]
      %v503 = vld [vmem:[%s275 + $0x74] sm:$0xf]
      %v504 = vld [vmem:[%s275 + $0x78] sm:$0xf]
      %v505 = vld [vmem:[%s275 + $0x7c] sm:$0xf]
      %v506 = vld [vmem:[%s275 + $0x80] sm:$0xf]
      %v507 = vld [vmem:[%s275 + $0x84] sm:$0xf]
      %v508 = vld [vmem:[%s275 + $0x88] sm:$0xf]
      %v509 = vld [vmem:[%s275 + $0x8c] sm:$0xf]
      %v510 = vld [vmem:[%s275 + $0x90] sm:$0xf]
      %v511 = vld [vmem:[%s275 + $0x94] sm:$0xf]
      %v512 = vld [vmem:[%s275 + $0x98] sm:$0xf]
      %v513 = vld [vmem:[%s275 + $0x9c] sm:$0xf]
      %v514 = vld [vmem:[%s275 + $0xa0] sm:$0xf]
      %v515 = vld [vmem:[%s275 + $0xa4] sm:$0xf]
      %v516 = vld [vmem:[%s275 + $0xa8] sm:$0xf]
      %v517 = vld [vmem:[%s275 + $0xac] sm:$0xf]
      %v518 = vld [vmem:[%s275 + $0xb0] sm:$0xf]
      %v519 = vld [vmem:[%s275 + $0xb4] sm:$0xf]
      %v520 = vld [vmem:[%s275 + $0xb8] sm:$0xf]
      %v521 = vld [vmem:[%s275 + $0xbc] sm:$0xf]
      %v522 = vld [vmem:[%s275 + $0xc0] sm:$0xf]
      %v523 = vld [vmem:[%s275 + $0xc4] sm:$0xf]
      %v524 = vld [vmem:[%s275 + $0xc8] sm:$0xf]
      %v525 = vld [vmem:[%s275 + $0xcc] sm:$0xf]
      %v526 = vld [vmem:[%s275 + $0xd0] sm:$0xf]
      %v527 = vld [vmem:[%s275 + $0xd4] sm:$0xf]
      %v528 = vld [vmem:[%s275 + $0xd8] sm:$0xf]
      %v529 = vld [vmem:[%s275 + $0xdc] sm:$0xf]
      %v530 = vld [vmem:[%s275 + $0xe0] sm:$0xf]
      %v531 = vld [vmem:[%s275 + $0xe4] sm:$0xf]
      %v532 = vld [vmem:[%s275 + $0xe8] sm:$0xf]
      %v533 = vld [vmem:[%s275 + $0xec] sm:$0xf]
      %v534 = vld [vmem:[%s275 + $0xf0] sm:$0xf]
      %v535 = vld [vmem:[%s275 + $0xf4] sm:$0xf]
      %v536 = vld [vmem:[%s275 + $0xf8] sm:$0xf]
      %v537 = vld [vmem:[%s275 + $0xfc] sm:$0xf]
      %v538 = vld [vmem:[%s275 + $0x100] sm:$0xf]
      %v539 = vld [vmem:[%s275 + $0x104] sm:$0xf]
      %v540 = vld [vmem:[%s275 + $0x108] sm:$0xf]
      %v541 = vld [vmem:[%s275 + $0x10c] sm:$0xf]
      %v542 = vld [vmem:[%s275 + $0x110] sm:$0xf]
      %v543 = vld [vmem:[%s275 + $0x114] sm:$0xf]
      %v544 = vld [vmem:[%s275 + $0x118] sm:$0xf]
      %v545 = vld [vmem:[%s275 + $0x11c] sm:$0xf]
      %v546 = vld [vmem:[%s275 + $0x120] sm:$0xf]
      %v547 = vld [vmem:[%s275 + $0x124] sm:$0xf]
      %v548 = vld [vmem:[%s275 + $0x128] sm:$0xf]
      %v549 = vld [vmem:[%s275 + $0x12c] sm:$0xf]
      %v550 = vld [vmem:[%s275 + $0x130] sm:$0xf]
      %v551 = vld [vmem:[%s275 + $0x134] sm:$0xf]
      %v552 = vld [vmem:[%s275 + $0x138] sm:$0xf]
      %v553 = vld [vmem:[%s275 + $0x13c] sm:$0xf]
      %v554 = vld [vmem:[%s284] sm:$0xf]
      %v555 = vld [vmem:[%s284 + $0x4] sm:$0xf]
      %v556 = vld [vmem:[%s284 + $0x8] sm:$0xf]
      %v557 = vld [vmem:[%s284 + $0xc] sm:$0xf]
      %v558 = vld [vmem:[%s284 + $0x10] sm:$0xf]
      %v559 = vld [vmem:[%s284 + $0x14] sm:$0xf]
      %v560 = vld [vmem:[%s284 + $0x18] sm:$0xf]
      %v561 = vld [vmem:[%s284 + $0x1c] sm:$0xf]
      %v562 = vld [vmem:[%s284 + $0x20] sm:$0xf]
      %v563 = vld [vmem:[%s284 + $0x24] sm:$0xf]
      %v564 = vld [vmem:[%s284 + $0x28] sm:$0xf]
      %v565 = vld [vmem:[%s284 + $0x2c] sm:$0xf]
      %v566 = vld [vmem:[%s284 + $0x30] sm:$0xf]
      %v567 = vld [vmem:[%s284 + $0x34] sm:$0xf]
      %v568 = vld [vmem:[%s284 + $0x38] sm:$0xf]
      %v569 = vld [vmem:[%s284 + $0x3c] sm:$0xf]
      %v650 = vunpack.c.l.b16 %v474
      %v651 = vunpack.c.l.b16 %v475
      %v652 = vunpack.c.l.b16 %v476
      %v653 = vunpack.c.l.b16 %v477
      %v654 = vunpack.c.l.b16 %v478
      %v655 = vunpack.c.l.b16 %v479
      %v656 = vunpack.c.l.b16 %v480
      %v657 = vunpack.c.l.b16 %v481
      %v658 = vunpack.c.l.b16 %v482
      %v659 = vunpack.c.l.b16 %v483
      %v660 = vunpack.c.l.b16 %v484
      %v661 = vunpack.c.l.b16 %v485
      %v662 = vunpack.c.l.b16 %v486
      %v663 = vunpack.c.l.b16 %v487
      %v664 = vunpack.c.l.b16 %v488
      %v665 = vunpack.c.l.b16 %v489
      %v666 = vunpack.c.l.b16 %v490
      %v667 = vunpack.c.l.b16 %v491
      %v668 = vunpack.c.l.b16 %v492
      %v669 = vunpack.c.l.b16 %v493
      %v670 = vunpack.c.l.b16 %v494
      %v671 = vunpack.c.l.b16 %v495
      %v672 = vunpack.c.l.b16 %v496
      %v673 = vunpack.c.l.b16 %v497
      %v674 = vunpack.c.l.b16 %v498
      %v675 = vunpack.c.l.b16 %v499
      %v676 = vunpack.c.l.b16 %v500
      %v677 = vunpack.c.l.b16 %v501
      %v678 = vunpack.c.l.b16 %v502
      %v679 = vunpack.c.l.b16 %v503
      %v680 = vunpack.c.l.b16 %v504
      %v681 = vunpack.c.l.b16 %v505
      %v682 = vunpack.c.l.b16 %v506
      %v683 = vunpack.c.l.b16 %v507
      %v684 = vunpack.c.l.b16 %v508
      %v685 = vunpack.c.l.b16 %v509
      %v686 = vunpack.c.l.b16 %v510
      %v687 = vunpack.c.l.b16 %v511
      %v688 = vunpack.c.l.b16 %v512
      %v689 = vunpack.c.l.b16 %v513
      %v690 = vunpack.c.l.b16 %v514
      %v691 = vunpack.c.l.b16 %v515
      %v692 = vunpack.c.l.b16 %v516
      %v693 = vunpack.c.l.b16 %v517
      %v694 = vunpack.c.l.b16 %v518
      %v695 = vunpack.c.l.b16 %v519
      %v696 = vunpack.c.l.b16 %v520
      %v697 = vunpack.c.l.b16 %v521
      %v698 = vunpack.c.l.b16 %v522
      %v699 = vunpack.c.l.b16 %v523
      %v700 = vunpack.c.l.b16 %v524
      %v701 = vunpack.c.l.b16 %v525
      %v702 = vunpack.c.l.b16 %v526
      %v703 = vunpack.c.l.b16 %v527
      %v704 = vunpack.c.l.b16 %v528
      %v705 = vunpack.c.l.b16 %v529
      %v706 = vunpack.c.l.b16 %v530
      %v707 = vunpack.c.l.b16 %v531
      %v708 = vunpack.c.l.b16 %v532
      %v709 = vunpack.c.l.b16 %v533
      %v710 = vunpack.c.l.b16 %v534
      %v711 = vunpack.c.l.b16 %v535
      %v712 = vunpack.c.l.b16 %v536
      %v713 = vunpack.c.l.b16 %v537
      %v714 = vunpack.c.l.b16 %v538
      %v715 = vunpack.c.l.b16 %v539
      %v716 = vunpack.c.l.b16 %v540
      %v717 = vunpack.c.l.b16 %v541
      %v718 = vunpack.c.l.b16 %v542
      %v719 = vunpack.c.l.b16 %v543
      %v720 = vunpack.c.l.b16 %v544
      %v721 = vunpack.c.l.b16 %v545
      %v722 = vunpack.c.l.b16 %v546
      %v723 = vunpack.c.l.b16 %v547
      %v724 = vunpack.c.l.b16 %v548
      %v725 = vunpack.c.l.b16 %v549
      %v726 = vunpack.c.l.b16 %v550
      %v727 = vunpack.c.l.b16 %v551
      %v728 = vunpack.c.l.b16 %v552
      %v729 = vunpack.c.l.b16 %v553
      %v730 = vpack.c.b16 %v651, %v650
      %v731 = vpack.c.b16 %v653, %v652
      %v732 = vpack.c.b16 %v655, %v654
      %v733 = vpack.c.b16 %v657, %v656
      %v734 = vpack.c.b16 %v659, %v658
      %v735 = vpack.c.b16 %v661, %v660
      %v736 = vpack.c.b16 %v663, %v662
      %v737 = vpack.c.b16 %v665, %v664
      %v738 = vpack.c.b16 %v667, %v666
      %v739 = vpack.c.b16 %v669, %v668
      %v740 = vpack.c.b16 %v671, %v670
      %v741 = vpack.c.b16 %v673, %v672
      %v742 = vpack.c.b16 %v675, %v674
      %v743 = vpack.c.b16 %v677, %v676
      %v744 = vpack.c.b16 %v679, %v678
      %v745 = vpack.c.b16 %v681, %v680
      %v746 = vpack.c.b16 %v683, %v682
      %v747 = vpack.c.b16 %v685, %v684
      %v748 = vpack.c.b16 %v687, %v686
      %v749 = vpack.c.b16 %v689, %v688
      %v750 = vpack.c.b16 %v691, %v690
      %v751 = vpack.c.b16 %v693, %v692
      %v752 = vpack.c.b16 %v695, %v694
      %v753 = vpack.c.b16 %v697, %v696
      %v754 = vpack.c.b16 %v699, %v698
      %v755 = vpack.c.b16 %v701, %v700
      %v756 = vpack.c.b16 %v703, %v702
      %v757 = vpack.c.b16 %v705, %v704
      %v758 = vpack.c.b16 %v707, %v706
      %v759 = vpack.c.b16 %v709, %v708
      %v760 = vpack.c.b16 %v711, %v710
      %v761 = vpack.c.b16 %v713, %v712
      %v762 = vpack.c.b16 %v715, %v714
      %v763 = vpack.c.b16 %v717, %v716
      %v764 = vpack.c.b16 %v719, %v718
      %v765 = vpack.c.b16 %v721, %v720
      %v766 = vpack.c.b16 %v723, %v722
      %v767 = vpack.c.b16 %v725, %v724
      %v768 = vpack.c.b16 %v727, %v726
      %v769 = vpack.c.b16 %v729, %v728
      %v826 = vunpack.c.l.b16 %v554
      %v827 = vunpack.c.l.b16 %v555
      %v828 = vunpack.c.l.b16 %v556
      %v829 = vunpack.c.l.b16 %v557
      %v830 = vunpack.c.l.b16 %v558
      %v831 = vunpack.c.l.b16 %v559
      %v832 = vunpack.c.l.b16 %v560
      %v833 = vunpack.c.l.b16 %v561
      %v834 = vunpack.c.l.b16 %v562
      %v835 = vunpack.c.l.b16 %v563
      %v836 = vunpack.c.l.b16 %v564
      %v837 = vunpack.c.l.b16 %v565
      %v838 = vunpack.c.l.b16 %v566
      %v839 = vunpack.c.l.b16 %v567
      %v840 = vunpack.c.l.b16 %v568
      %v841 = vunpack.c.l.b16 %v569
      %v842 = vpack.c.b16 %v827, %v826
      %v843 = vpack.c.b16 %v829, %v828
      %v844 = vpack.c.b16 %v831, %v830
      %v845 = vpack.c.b16 %v833, %v832
      %v846 = vpack.c.b16 %v835, %v834
      %v847 = vpack.c.b16 %v837, %v836
      %v848 = vpack.c.b16 %v839, %v838
      %v849 = vpack.c.b16 %v841, %v840
      %858 = vmatprep.subr.bf16.mxu0 0
      %859 = vmatpush1.bf16.msra.mxu0 %v842
      %860 = vmatprep.subr.bf16.mxu0 0
      %861 = vmatpush1.bf16.msra.mxu0 %v843
      %862 = vmatprep.subr.bf16.mxu0 0
      %863 = vmatpush1.bf16.msra.mxu0 %v844
      %864 = vmatprep.subr.bf16.mxu0 0
      %865 = vmatpush1.bf16.msra.mxu0 %v845
      %866 = vmatprep.subr.bf16.mxu0 0
      %867 = vmatpush1.bf16.msra.mxu0 %v846
      %868 = vmatprep.subr.bf16.mxu0 0
      %869 = vmatpush1.bf16.msra.mxu0 %v847
      %870 = vmatprep.subr.bf16.mxu0 0
      %871 = vmatpush1.bf16.msra.mxu0 %v848
      %872 = vmatprep.subr.bf16.mxu0 0
      %873 = vmatpush1.bf16.msra.mxu0 %v849
      %874 = vmatprep.subr.bf16.mxu0 0
      %875 = vmatpush1.bf16.msra.mxu0 0
      %876 = vmatprep.subr.bf16.mxu0 0
      %877 = vmatpush1.bf16.msra.mxu0 0
      %878 = vmatprep.subr.bf16.mxu0 0
      %879 = vmatpush1.bf16.msra.mxu0 0
      %880 = vmatprep.subr.bf16.mxu0 0
      %881 = vmatpush1.bf16.msra.mxu0 0
      %882 = vmatprep.subr.bf16.mxu0 0
      %883 = vmatpush1.bf16.msra.mxu0 0
      %884 = vmatprep.subr.bf16.mxu0 0
      %885 = vmatpush1.bf16.msra.mxu0 0
      %886 = vmatprep.subr.bf16.mxu0 0
      %887 = vmatpush1.bf16.msra.mxu0 0
      %888 = vmatprep.subr.bf16.mxu0 0
      %889 = vmatpush1.bf16.msra.mxu0 0
      %890 = vmatprep.mubr.bf16.mxu0 0
      %891 = vmatmul.mubr.bf16.gmra.mrb[0].mxu0 %v730
      %v892 = vpop.f32.mrb[0].mxu0
      %v893 = vadd.f32 0.0, %v892
      %v894 = vpop.f32.mrb[0].mxu0
      %v895 = vpop.f32.mrb[0].mxu0
      %v896 = vadd.f32 0.0, %v895
      %v897 = vpop.f32.mrb[0].mxu0
      %898 = vmatprep.mubr.bf16.mxu0 0
      %899 = vmatmul.mubr.bf16.gmra.mrb[0].mxu0 %v731
      %v900 = vpop.f32.mrb[0].mxu0
      %v901 = vadd.f32 0.0, %v900
      %v902 = vpop.f32.mrb[0].mxu0
      %v903 = vpop.f32.mrb[0].mxu0
      %v904 = vadd.f32 0.0, %v903
      %v905 = vpop.f32.mrb[0].mxu0
      %906 = vmatprep.mubr.bf16.mxu0 0
      %907 = vmatmul.mubr.bf16.gmra.mrb[0].mxu0 %v732
      %v908 = vpop.f32.mrb[0].mxu0
      %v909 = vadd.f32 0.0, %v908
      %v910 = vpop.f32.mrb[0].mxu0
      %v911 = vpop.f32.mrb[0].mxu0
      %v912 = vadd.f32 0.0, %v911
      %v913 = vpop.f32.mrb[0].mxu0
      %914 = vmatprep.mubr.bf16.mxu0 0
      %915 = vmatmul.mubr.bf16.gmra.mrb[0].mxu0 %v733
      %v916 = vpop.f32.mrb[0].mxu0
      %v917 = vadd.f32 0.0, %v916
      %v918 = vpop.f32.mrb[0].mxu0
      %v919 = vpop.f32.mrb[0].mxu0
      %v920 = vadd.f32 0.0, %v919
      %v921 = vpop.f32.mrb[0].mxu0
      %922 = vmatprep.mubr.bf16.mxu0 0
      %923 = vmatmul.mubr.bf16.gmra.mrb[0].mxu0 %v734
      %v924 = vpop.f32.mrb[0].mxu0
      %v925 = vadd.f32 0.0, %v924
      %v926 = vpop.f32.mrb[0].mxu0
      %v927 = vpop.f32.mrb[0].mxu0
      %v928 = vadd.f32 0.0, %v927
      %v929 = vpop.f32.mrb[0].mxu0
      %930 = vmatprep.mubr.bf16.mxu0 0
      %931 = vmatmul.mubr.bf16.gmra.mrb[0].mxu0 %v735
      %v932 = vpop.f32.mrb[0].mxu0
      %v933 = vadd.f32 0.0, %v932
      %v934 = vpop.f32.mrb[0].mxu0
      %v935 = vpop.f32.mrb[0].mxu0
      %v936 = vadd.f32 0.0, %v935
      %v937 = vpop.f32.mrb[0].mxu0
      %938 = vmatprep.mubr.bf16.mxu0 0
      %939 = vmatmul.mubr.bf16.gmra.mrb[0].mxu0 %v736
      %v940 = vpop.f32.mrb[0].mxu0
      %v941 = vadd.f32 0.0, %v940
      %v942 = vpop.f32.mrb[0].mxu0
      %v943 = vpop.f32.mrb[0].mxu0
      %v944 = vadd.f32 0.0, %v943
      %v945 = vpop.f32.mrb[0].mxu0
      %946 = vmatprep.mubr.bf16.mxu0 0
      %947 = vmatmul.mubr.bf16.gmra.mrb[0].mxu0 %v737
      %v948 = vpop.f32.mrb[0].mxu0
      %v949 = vadd.f32 0.0, %v948
      %v950 = vpop.f32.mrb[0].mxu0
      %v951 = vpop.f32.mrb[0].mxu0
      %v952 = vadd.f32 0.0, %v951
      %v953 = vpop.f32.mrb[0].mxu0
      %954 = vmatprep.mubr.bf16.mxu0 0
      %955 = vmatmul.mubr.bf16.gmra.mrb[0].mxu0 %v738
      %v956 = vpop.f32.mrb[0].mxu0
      %v957 = vadd.f32 0.0, %v956
      %v958 = vpop.f32.mrb[0].mxu0
      %v959 = vpop.f32.mrb[0].mxu0
      %v960 = vadd.f32 0.0, %v959
      %v961 = vpop.f32.mrb[0].mxu0
      %962 = vmatprep.mubr.bf16.mxu0 0
      %963 = vmatmul.mubr.bf16.gmra.mrb[0].mxu0 %v739
      %v964 = vpop.f32.mrb[0].mxu0
      %v965 = vadd.f32 0.0, %v964
      %v966 = vpop.f32.mrb[0].mxu0
      %v967 = vpop.f32.mrb[0].mxu0
      %v968 = vadd.f32 0.0, %v967
      %v969 = vpop.f32.mrb[0].mxu0
      %970 = vmatprep.mubr.bf16.mxu0 0
      %971 = vmatmul.mubr.bf16.gmra.mrb[0].mxu0 %v740
      %v972 = vpop.f32.mrb[0].mxu0
      %v973 = vadd.f32 0.0, %v972
      %v974 = vpop.f32.mrb[0].mxu0
      %v975 = vpop.f32.mrb[0].mxu0
      %v976 = vadd.f32 0.0, %v975
      %v977 = vpop.f32.mrb[0].mxu0
      %978 = vmatprep.mubr.bf16.mxu0 0
      %979 = vmatmul.mubr.bf16.gmra.mrb[0].mxu0 %v741
      %v980 = vpop.f32.mrb[0].mxu0
      %v981 = vadd.f32 0.0, %v980
      %v982 = vpop.f32.mrb[0].mxu0
      %v983 = vpop.f32.mrb[0].mxu0
      %v984 = vadd.f32 0.0, %v983
      %v985 = vpop.f32.mrb[0].mxu0
      %986 = vmatprep.mubr.bf16.mxu0 0
      %987 = vmatmul.mubr.bf16.gmra.mrb[0].mxu0 %v742
      %v988 = vpop.f32.mrb[0].mxu0
      %v989 = vadd.f32 0.0, %v988
      %v990 = vpop.f32.mrb[0].mxu0
      %v991 = vpop.f32.mrb[0].mxu0
      %v992 = vadd.f32 0.0, %v991
      %v993 = vpop.f32.mrb[0].mxu0
      %994 = vmatprep.mubr.bf16.mxu0 0
      %995 = vmatmul.mubr.bf16.gmra.mrb[0].mxu0 %v743
      %v996 = vpop.f32.mrb[0].mxu0
      %v997 = vadd.f32 0.0, %v996
      %v998 = vpop.f32.mrb[0].mxu0
      %v999 = vpop.f32.mrb[0].mxu0
      %v1000 = vadd.f32 0.0, %v999
      %v1001 = vpop.f32.mrb[0].mxu0
      %1002 = vmatprep.mubr.bf16.mxu0 0
      %1003 = vmatmul.mubr.bf16.gmra.mrb[0].mxu0 %v744
      %v1004 = vpop.f32.mrb[0].mxu0
      %v1005 = vadd.f32 0.0, %v1004
      %v1006 = vpop.f32.mrb[0].mxu0
      %v1007 = vpop.f32.mrb[0].mxu0
      %v1008 = vadd.f32 0.0, %v1007
      %v1009 = vpop.f32.mrb[0].mxu0
      %1010 = vmatprep.mubr.bf16.mxu0 0
      %1011 = vmatmul.mubr.bf16.gmra.mrb[0].mxu0 %v745
      %v1012 = vpop.f32.mrb[0].mxu0
      %v1013 = vadd.f32 0.0, %v1012
      %v1014 = vpop.f32.mrb[0].mxu0
      %v1015 = vpop.f32.mrb[0].mxu0
      %v1016 = vadd.f32 0.0, %v1015
      %v1017 = vpop.f32.mrb[0].mxu0
      %1018 = vmatprep.mubr.bf16.mxu0 0
      %1019 = vmatmul.mubr.bf16.gmra.mrb[0].mxu0 %v746
      %v1020 = vpop.f32.mrb[0].mxu0
      %v1021 = vadd.f32 0.0, %v1020
      %v1022 = vpop.f32.mrb[0].mxu0
      %v1023 = vpop.f32.mrb[0].mxu0
      %v1024 = vadd.f32 0.0, %v1023
      %v1025 = vpop.f32.mrb[0].mxu0
      %1026 = vmatprep.mubr.bf16.mxu0 0
      %1027 = vmatmul.mubr.bf16.gmra.mrb[0].mxu0 %v747
      %v1028 = vpop.f32.mrb[0].mxu0
      %v1029 = vadd.f32 0.0, %v1028
      %v1030 = vpop.f32.mrb[0].mxu0
      %v1031 = vpop.f32.mrb[0].mxu0
      %v1032 = vadd.f32 0.0, %v1031
      %v1033 = vpop.f32.mrb[0].mxu0
      %1034 = vmatprep.mubr.bf16.mxu0 0
      %1035 = vmatmul.mubr.bf16.gmra.mrb[0].mxu0 %v748
      %v1036 = vpop.f32.mrb[0].mxu0
      %v1037 = vadd.f32 0.0, %v1036
      %v1038 = vpop.f32.mrb[0].mxu0
      %v1039 = vpop.f32.mrb[0].mxu0
      %v1040 = vadd.f32 0.0, %v1039
      %v1041 = vpop.f32.mrb[0].mxu0
      %1042 = vmatprep.mubr.bf16.mxu0 0
      %1043 = vmatmul.mubr.bf16.gmra.mrb[0].mxu0 %v749
      %v1044 = vpop.f32.mrb[0].mxu0
      %v1045 = vadd.f32 0.0, %v1044
      %v1046 = vpop.f32.mrb[0].mxu0
      %v1047 = vpop.f32.mrb[0].mxu0
      %v1048 = vadd.f32 0.0, %v1047
      %v1049 = vpop.f32.mrb[0].mxu0
      %1050 = vmatprep.mubr.bf16.mxu0 0
      %1051 = vmatmul.mubr.bf16.gmra.mrb[0].mxu0 %v750
      %v1052 = vpop.f32.mrb[0].mxu0
      %v1053 = vadd.f32 0.0, %v1052
      %v1054 = vpop.f32.mrb[0].mxu0
      %v1055 = vpop.f32.mrb[0].mxu0
      %v1056 = vadd.f32 0.0, %v1055
      %v1057 = vpop.f32.mrb[0].mxu0
      %1058 = vmatprep.mubr.bf16.mxu0 0
      %1059 = vmatmul.mubr.bf16.gmra.mrb[0].mxu0 %v751
      %v1060 = vpop.f32.mrb[0].mxu0
      %v1061 = vadd.f32 0.0, %v1060
      %v1062 = vpop.f32.mrb[0].mxu0
      %v1063 = vpop.f32.mrb[0].mxu0
      %v1064 = vadd.f32 0.0, %v1063
      %v1065 = vpop.f32.mrb[0].mxu0
      %1066 = vmatprep.mubr.bf16.mxu0 0
      %1067 = vmatmul.mubr.bf16.gmra.mrb[0].mxu0 %v752
      %v1068 = vpop.f32.mrb[0].mxu0
      %v1069 = vadd.f32 0.0, %v1068
      %v1070 = vpop.f32.mrb[0].mxu0
      %v1071 = vpop.f32.mrb[0].mxu0
      %v1072 = vadd.f32 0.0, %v1071
      %v1073 = vpop.f32.mrb[0].mxu0
      %1074 = vmatprep.mubr.bf16.mxu0 0
      %1075 = vmatmul.mubr.bf16.gmra.mrb[0].mxu0 %v753
      %v1076 = vpop.f32.mrb[0].mxu0
      %v1077 = vadd.f32 0.0, %v1076
      %v1078 = vpop.f32.mrb[0].mxu0
      %v1079 = vpop.f32.mrb[0].mxu0
      %v1080 = vadd.f32 0.0, %v1079
      %v1081 = vpop.f32.mrb[0].mxu0
      %1082 = vmatprep.mubr.bf16.mxu0 0
      %1083 = vmatmul.mubr.bf16.gmra.mrb[0].mxu0 %v754
      %v1084 = vpop.f32.mrb[0].mxu0
      %v1085 = vadd.f32 0.0, %v1084
      %v1086 = vpop.f32.mrb[0].mxu0
      %v1087 = vpop.f32.mrb[0].mxu0
      %v1088 = vadd.f32 0.0, %v1087
      %v1089 = vpop.f32.mrb[0].mxu0
      %1090 = vmatprep.mubr.bf16.mxu0 0
      %1091 = vmatmul.mubr.bf16.gmra.mrb[0].mxu0 %v755
      %v1092 = vpop.f32.mrb[0].mxu0
      %v1093 = vadd.f32 0.0, %v1092
      %v1094 = vpop.f32.mrb[0].mxu0
      %v1095 = vpop.f32.mrb[0].mxu0
      %v1096 = vadd.f32 0.0, %v1095
      %v1097 = vpop.f32.mrb[0].mxu0
      %1098 = vmatprep.mubr.bf16.mxu0 0
      %1099 = vmatmul.mubr.bf16.gmra.mrb[0].mxu0 %v756
      %v1100 = vpop.f32.mrb[0].mxu0
      %v1101 = vadd.f32 0.0, %v1100
      %v1102 = vpop.f32.mrb[0].mxu0
      %v1103 = vpop.f32.mrb[0].mxu0
      %v1104 = vadd.f32 0.0, %v1103
      %v1105 = vpop.f32.mrb[0].mxu0
      %1106 = vmatprep.mubr.bf16.mxu0 0
      %1107 = vmatmul.mubr.bf16.gmra.mrb[0].mxu0 %v757
      %v1108 = vpop.f32.mrb[0].mxu0
      %v1109 = vadd.f32 0.0, %v1108
      %v1110 = vpop.f32.mrb[0].mxu0
      %v1111 = vpop.f32.mrb[0].mxu0
      %v1112 = vadd.f32 0.0, %v1111
      %v1113 = vpop.f32.mrb[0].mxu0
      %1114 = vmatprep.mubr.bf16.mxu0 0
      %1115 = vmatmul.mubr.bf16.gmra.mrb[0].mxu0 %v758
      %v1116 = vpop.f32.mrb[0].mxu0
      %v1117 = vadd.f32 0.0, %v1116
      %v1118 = vpop.f32.mrb[0].mxu0
      %v1119 = vpop.f32.mrb[0].mxu0
      %v1120 = vadd.f32 0.0, %v1119
      %v1121 = vpop.f32.mrb[0].mxu0
      %1122 = vmatprep.mubr.bf16.mxu0 0
      %1123 = vmatmul.mubr.bf16.gmra.mrb[0].mxu0 %v759
      %v1124 = vpop.f32.mrb[0].mxu0
      %v1125 = vadd.f32 0.0, %v1124
      %v1126 = vpop.f32.mrb[0].mxu0
      %v1127 = vpop.f32.mrb[0].mxu0
      %v1128 = vadd.f32 0.0, %v1127
      %v1129 = vpop.f32.mrb[0].mxu0
      %1130 = vmatprep.mubr.bf16.mxu0 0
      %1131 = vmatmul.mubr.bf16.gmra.mrb[0].mxu0 %v760
      %v1132 = vpop.f32.mrb[0].mxu0
      %v1133 = vadd.f32 0.0, %v1132
      %v1134 = vpop.f32.mrb[0].mxu0
      %v1135 = vpop.f32.mrb[0].mxu0
      %v1136 = vadd.f32 0.0, %v1135
      %v1137 = vpop.f32.mrb[0].mxu0
      %1138 = vmatprep.mubr.bf16.mxu0 0
      %1139 = vmatmul.mubr.bf16.gmra.mrb[0].mxu0 %v761
      %v1140 = vpop.f32.mrb[0].mxu0
      %v1141 = vadd.f32 0.0, %v1140
      %v1142 = vpop.f32.mrb[0].mxu0
      %v1143 = vpop.f32.mrb[0].mxu0
      %v1144 = vadd.f32 0.0, %v1143
      %v1145 = vpop.f32.mrb[0].mxu0
      %1146 = vmatprep.mubr.bf16.mxu0 0
      %1147 = vmatmul.mubr.bf16.gmra.mrb[0].mxu0 %v762
      %v1148 = vpop.f32.mrb[0].mxu0
      %v1149 = vadd.f32 0.0, %v1148
      %v1150 = vpop.f32.mrb[0].mxu0
      %v1151 = vpop.f32.mrb[0].mxu0
      %v1152 = vadd.f32 0.0, %v1151
      %v1153 = vpop.f32.mrb[0].mxu0
      %1154 = vmatprep.mubr.bf16.mxu0 0
      %1155 = vmatmul.mubr.bf16.gmra.mrb[0].mxu0 %v763
      %v1156 = vpop.f32.mrb[0].mxu0
      %v1157 = vadd.f32 0.0, %v1156
      %v1158 = vpop.f32.mrb[0].mxu0
      %v1159 = vpop.f32.mrb[0].mxu0
      %v1160 = vadd.f32 0.0, %v1159
      %v1161 = vpop.f32.mrb[0].mxu0
      %1162 = vmatprep.mubr.bf16.mxu0 0
      %1163 = vmatmul.mubr.bf16.gmra.mrb[0].mxu0 %v764
      %v1164 = vpop.f32.mrb[0].mxu0
      %v1165 = vadd.f32 0.0, %v1164
      %v1166 = vpop.f32.mrb[0].mxu0
      %v1167 = vpop.f32.mrb[0].mxu0
      %v1168 = vadd.f32 0.0, %v1167
      %v1169 = vpop.f32.mrb[0].mxu0
      %1170 = vmatprep.mubr.bf16.mxu0 0
      %1171 = vmatmul.mubr.bf16.gmra.mrb[0].mxu0 %v765
      %v1172 = vpop.f32.mrb[0].mxu0
      %v1173 = vadd.f32 0.0, %v1172
      %v1174 = vpop.f32.mrb[0].mxu0
      %v1175 = vpop.f32.mrb[0].mxu0
      %v1176 = vadd.f32 0.0, %v1175
      %v1177 = vpop.f32.mrb[0].mxu0
      %1178 = vmatprep.mubr.bf16.mxu0 0
      %1179 = vmatmul.mubr.bf16.gmra.mrb[0].mxu0 %v766
      %v1180 = vpop.f32.mrb[0].mxu0
      %v1181 = vadd.f32 0.0, %v1180
      %v1182 = vpop.f32.mrb[0].mxu0
      %v1183 = vpop.f32.mrb[0].mxu0
      %v1184 = vadd.f32 0.0, %v1183
      %v1185 = vpop.f32.mrb[0].mxu0
      %1186 = vmatprep.mubr.bf16.mxu0 0
      %1187 = vmatmul.mubr.bf16.gmra.mrb[0].mxu0 %v767
      %v1188 = vpop.f32.mrb[0].mxu0
      %v1189 = vadd.f32 0.0, %v1188
      %v1190 = vpop.f32.mrb[0].mxu0
      %v1191 = vpop.f32.mrb[0].mxu0
      %v1192 = vadd.f32 0.0, %v1191
      %v1193 = vpop.f32.mrb[0].mxu0
      %1194 = vmatprep.mubr.bf16.mxu0 0
      %1195 = vmatmul.mubr.bf16.gmra.mrb[0].mxu0 %v768
      %v1196 = vpop.f32.mrb[0].mxu0
      %v1197 = vadd.f32 0.0, %v1196
      %v1198 = vpop.f32.mrb[0].mxu0
      %v1199 = vpop.f32.mrb[0].mxu0
      %v1200 = vadd.f32 0.0, %v1199
      %v1201 = vpop.f32.mrb[0].mxu0
      %1202 = vmatprep.mubr.bf16.mxu0 0
      %1203 = vmatmul.mubr.bf16.gmra.mrb[0].mxu0 %v769
      %v1204 = vpop.f32.mrb[0].mxu0
      %v1205 = vadd.f32 0.0, %v1204
      %v1206 = vpop.f32.mrb[0].mxu0
      %v1207 = vpop.f32.mrb[0].mxu0
      %v1208 = vadd.f32 0.0, %v1207
      %v1209 = vpop.f32.mrb[0].mxu0
      %1210 = vdwg.mxu0
      %v1211 = vadd.f32 %v394, %v893
      %v1212 = vadd.f32 %v395, %v896
      %v1213 = vadd.f32 %v396, %v901
      %v1214 = vadd.f32 %v397, %v904
      %v1215 = vadd.f32 %v398, %v909
      %v1216 = vadd.f32 %v399, %v912
      %v1217 = vadd.f32 %v400, %v917
      %v1218 = vadd.f32 %v401, %v920
      %v1219 = vadd.f32 %v402, %v925
      %v1220 = vadd.f32 %v403, %v928
      %v1221 = vadd.f32 %v404, %v933
      %v1222 = vadd.f32 %v405, %v936
      %v1223 = vadd.f32 %v406, %v941
      %v1224 = vadd.f32 %v407, %v944
      %v1225 = vadd.f32 %v408, %v949
      %v1226 = vadd.f32 %v409, %v952
      %v1227 = vadd.f32 %v410, %v957
      %v1228 = vadd.f32 %v411, %v960
      %v1229 = vadd.f32 %v412, %v965
      %v1230 = vadd.f32 %v413, %v968
      %v1231 = vadd.f32 %v414, %v973
      %v1232 = vadd.f32 %v415, %v976
      %v1233 = vadd.f32 %v416, %v981
      %v1234 = vadd.f32 %v417, %v984
      %v1235 = vadd.f32 %v418, %v989
      %v1236 = vadd.f32 %v419, %v992
      %v1237 = vadd.f32 %v420, %v997
      %v1238 = vadd.f32 %v421, %v1000
      %v1239 = vadd.f32 %v422, %v1005
      %v1240 = vadd.f32 %v423, %v1008
      %v1241 = vadd.f32 %v424, %v1013
      %v1242 = vadd.f32 %v425, %v1016
      %v1243 = vadd.f32 %v426, %v1021
      %v1244 = vadd.f32 %v427, %v1024
      %v1245 = vadd.f32 %v428, %v1029
      %v1246 = vadd.f32 %v429, %v1032
      %v1247 = vadd.f32 %v430, %v1037
      %v1248 = vadd.f32 %v431, %v1040
      %v1249 = vadd.f32 %v432, %v1045
      %v1250 = vadd.f32 %v433, %v1048
      %v1251 = vadd.f32 %v434, %v1053
      %v1252 = vadd.f32 %v435, %v1056
      %v1253 = vadd.f32 %v436, %v1061
      %v1254 = vadd.f32 %v437, %v1064
      %v1255 = vadd.f32 %v438, %v1069
      %v1256 = vadd.f32 %v439, %v1072
      %v1257 = vadd.f32 %v440, %v1077
      %v1258 = vadd.f32 %v441, %v1080
      %v1259 = vadd.f32 %v442, %v1085
      %v1260 = vadd.f32 %v443, %v1088
      %v1261 = vadd.f32 %v444, %v1093
      %v1262 = vadd.f32 %v445, %v1096
      %v1263 = vadd.f32 %v446, %v1101
      %v1264 = vadd.f32 %v447, %v1104
      %v1265 = vadd.f32 %v448, %v1109
      %v1266 = vadd.f32 %v449, %v1112
      %v1267 = vadd.f32 %v450, %v1117
      %v1268 = vadd.f32 %v451, %v1120
      %v1269 = vadd.f32 %v452, %v1125
      %v1270 = vadd.f32 %v453, %v1128
      %v1271 = vadd.f32 %v454, %v1133
      %v1272 = vadd.f32 %v455, %v1136
      %v1273 = vadd.f32 %v456, %v1141
      %v1274 = vadd.f32 %v457, %v1144
      %v1275 = vadd.f32 %v458, %v1149
      %v1276 = vadd.f32 %v459, %v1152
      %v1277 = vadd.f32 %v460, %v1157
      %v1278 = vadd.f32 %v461, %v1160
      %v1279 = vadd.f32 %v462, %v1165
      %v1280 = vadd.f32 %v463, %v1168
      %v1281 = vadd.f32 %v464, %v1173
      %v1282 = vadd.f32 %v465, %v1176
      %v1283 = vadd.f32 %v466, %v1181
      %v1284 = vadd.f32 %v467, %v1184
      %v1285 = vadd.f32 %v468, %v1189
      %v1286 = vadd.f32 %v469, %v1192
      %v1287 = vadd.f32 %v470, %v1197
      %v1288 = vadd.f32 %v471, %v1200
      %v1289 = vadd.f32 %v472, %v1205
      %v1290 = vadd.f32 %v473, %v1208
      %1291 = vst [vmem:[#allocation2] sm:$0xff] %v1211
      %1292 = vst [vmem:[#allocation2 + $0x8] sm:$0xff] %v1212
      %1293 = vst [vmem:[#allocation2 + $0x10] sm:$0xff] %v1213
      %1294 = vst [vmem:[#allocation2 + $0x18] sm:$0xff] %v1214
      %1295 = vst [vmem:[#allocation2 + $0x20] sm:$0xff] %v1215
      %1296 = vst [vmem:[#allocation2 + $0x28] sm:$0xff] %v1216
      %1297 = vst [vmem:[#allocation2 + $0x30] sm:$0xff] %v1217
      %1298 = vst [vmem:[#allocation2 + $0x38] sm:$0xff] %v1218
      %1299 = vst [vmem:[#allocation2 + $0x40] sm:$0xff] %v1219
      %1300 = vst [vmem:[#allocation2 + $0x48] sm:$0xff] %v1220
      %1301 = vst [vmem:[#allocation2 + $0x50] sm:$0xff] %v1221
      %1302 = vst [vmem:[#allocation2 + $0x58] sm:$0xff] %v1222
      %1303 = vst [vmem:[#allocation2 + $0x60] sm:$0xff] %v1223
      %1304 = vst [vmem:[#allocation2 + $0x68] sm:$0xff] %v1224
      %1305 = vst [vmem:[#allocation2 + $0x70] sm:$0xff] %v1225
      %1306 = vst [vmem:[#allocation2 + $0x78] sm:$0xff] %v1226
      %1307 = vst [vmem:[#allocation2 + $0x80] sm:$0xff] %v1227
      %1308 = vst [vmem:[#allocation2 + $0x88] sm:$0xff] %v1228
      %1309 = vst [vmem:[#allocation2 + $0x90] sm:$0xff] %v1229
      %1310 = vst [vmem:[#allocation2 + $0x98] sm:$0xff] %v1230
      %1311 = vst [vmem:[#allocation2 + $0xa0] sm:$0xff] %v1231
      %1312 = vst [vmem:[#allocation2 + $0xa8] sm:$0xff] %v1232
      %1313 = vst [vmem:[#allocation2 + $0xb0] sm:$0xff] %v1233
      %1314 = vst [vmem:[#allocation2 + $0xb8] sm:$0xff] %v1234
      %1315 = vst [vmem:[#allocation2 + $0xc0] sm:$0xff] %v1235
      %1316 = vst [vmem:[#allocation2 + $0xc8] sm:$0xff] %v1236
      %1317 = vst [vmem:[#allocation2 + $0xd0] sm:$0xff] %v1237
      %1318 = vst [vmem:[#allocation2 + $0xd8] sm:$0xff] %v1238
      %1319 = vst [vmem:[#allocation2 + $0xe0] sm:$0xff] %v1239
      %1320 = vst [vmem:[#allocation2 + $0xe8] sm:$0xff] %v1240
      %1321 = vst [vmem:[#allocation2 + $0xf0] sm:$0xff] %v1241
      %1322 = vst [vmem:[#allocation2 + $0xf8] sm:$0xff] %v1242
      %1323 = vst [vmem:[#allocation2 + $0x100] sm:$0xff] %v1243
      %1324 = vst [vmem:[#allocation2 + $0x108] sm:$0xff] %v1244
      %1325 = vst [vmem:[#allocation2 + $0x110] sm:$0xff] %v1245
      %1326 = vst [vmem:[#allocation2 + $0x118] sm:$0xff] %v1246
      %1327 = vst [vmem:[#allocation2 + $0x120] sm:$0xff] %v1247
      %1328 = vst [vmem:[#allocation2 + $0x128] sm:$0xff] %v1248
      %1329 = vst [vmem:[#allocation2 + $0x130] sm:$0xff] %v1249
      %1330 = vst [vmem:[#allocation2 + $0x138] sm:$0xff] %v1250
      %1331 = vst [vmem:[#allocation2 + $0x140] sm:$0xff] %v1251
      %1332 = vst [vmem:[#allocation2 + $0x148] sm:$0xff] %v1252
      %1333 = vst [vmem:[#allocation2 + $0x150] sm:$0xff] %v1253
      %1334 = vst [vmem:[#allocation2 + $0x158] sm:$0xff] %v1254
      %1335 = vst [vmem:[#allocation2 + $0x160] sm:$0xff] %v1255
      %1336 = vst [vmem:[#allocation2 + $0x168] sm:$0xff] %v1256
      %1337 = vst [vmem:[#allocation2 + $0x170] sm:$0xff] %v1257
      %1338 = vst [vmem:[#allocation2 + $0x178] sm:$0xff] %v1258
      %1339 = vst [vmem:[#allocation2 + $0x180] sm:$0xff] %v1259
      %1340 = vst [vmem:[#allocation2 + $0x188] sm:$0xff] %v1260
      %1341 = vst [vmem:[#allocation2 + $0x190] sm:$0xff] %v1261
      %1342 = vst [vmem:[#allocation2 + $0x198] sm:$0xff] %v1262
      %1343 = vst [vmem:[#allocation2 + $0x1a0] sm:$0xff] %v1263
      %1344 = vst [vmem:[#allocation2 + $0x1a8] sm:$0xff] %v1264
      %1345 = vst [vmem:[#allocation2 + $0x1b0] sm:$0xff] %v1265
      %1346 = vst [vmem:[#allocation2 + $0x1b8] sm:$0xff] %v1266
      %1347 = vst [vmem:[#allocation2 + $0x1c0] sm:$0xff] %v1267
      %1348 = vst [vmem:[#allocation2 + $0x1c8] sm:$0xff] %v1268
      %1349 = vst [vmem:[#allocation2 + $0x1d0] sm:$0xff] %v1269
      %1350 = vst [vmem:[#allocation2 + $0x1d8] sm:$0xff] %v1270
      %1351 = vst [vmem:[#allocation2 + $0x1e0] sm:$0xff] %v1271
      %1352 = vst [vmem:[#allocation2 + $0x1e8] sm:$0xff] %v1272
      %1353 = vst [vmem:[#allocation2 + $0x1f0] sm:$0xff] %v1273
      %1354 = vst [vmem:[#allocation2 + $0x1f8] sm:$0xff] %v1274
      %1355 = vst [vmem:[#allocation2 + $0x200] sm:$0xff] %v1275
      %1356 = vst [vmem:[#allocation2 + $0x208] sm:$0xff] %v1276
      %1357 = vst [vmem:[#allocation2 + $0x210] sm:$0xff] %v1277
      %1358 = vst [vmem:[#allocation2 + $0x218] sm:$0xff] %v1278
      %1359 = vst [vmem:[#allocation2 + $0x220] sm:$0xff] %v1279
      %1360 = vst [vmem:[#allocation2 + $0x228] sm:$0xff] %v1280
      %1361 = vst [vmem:[#allocation2 + $0x230] sm:$0xff] %v1281
      %1362 = vst [vmem:[#allocation2 + $0x238] sm:$0xff] %v1282
      %1363 = vst [vmem:[#allocation2 + $0x240] sm:$0xff] %v1283
      %1364 = vst [vmem:[#allocation2 + $0x248] sm:$0xff] %v1284
      %1365 = vst [vmem:[#allocation2 + $0x250] sm:$0xff] %v1285
      %1366 = vst [vmem:[#allocation2 + $0x258] sm:$0xff] %v1286
      %1367 = vst [vmem:[#allocation2 + $0x260] sm:$0xff] %v1287
      %1368 = vst [vmem:[#allocation2 + $0x268] sm:$0xff] %v1288
      %1369 = vst [vmem:[#allocation2 + $0x270] sm:$0xff] %v1289
      %1370 = vst [vmem:[#allocation2 + $0x278] sm:$0xff] %v1290
      // Predicated region
      $region33: #{conv_bn_leaky_nhwc.2} parent=27 // pred_check
        %p1371 = pneg %p310
      $region34: #{conv_bn_leaky_nhwc.2} parent=27 // pred_check_branch
        %1373 = sbr.rel (%p1371) target = $region36
      $region35: #{conv_bn_leaky_nhwc.2} parent=27 // pred_region
        %v1374 = vld [vmem:[#allocation2] sm:$0xff]
        %v1375 = vld [vmem:[#allocation2 + $0x8] sm:$0xff]
        %v1376 = vld [vmem:[#allocation2 + $0x10] sm:$0xff]
        %v1377 = vld [vmem:[#allocation2 + $0x18] sm:$0xff]
        %v1378 = vld [vmem:[#allocation2 + $0x20] sm:$0xff]
        %v1379 = vld [vmem:[#allocation2 + $0x28] sm:$0xff]
        %v1380 = vld [vmem:[#allocation2 + $0x30] sm:$0xff]
        %v1381 = vld [vmem:[#allocation2 + $0x38] sm:$0xff]
        %v1382 = vld [vmem:[#allocation2 + $0x40] sm:$0xff]
        %v1383 = vld [vmem:[#allocation2 + $0x48] sm:$0xff]
        %v1384 = vld [vmem:[#allocation2 + $0x50] sm:$0xff]
        %v1385 = vld [vmem:[#allocation2 + $0x58] sm:$0xff]
        %v1386 = vld [vmem:[#allocation2 + $0x60] sm:$0xff]
        %v1387 = vld [vmem:[#allocation2 + $0x68] sm:$0xff]
        %v1388 = vld [vmem:[#allocation2 + $0x70] sm:$0xff]
        %v1389 = vld [vmem:[#allocation2 + $0x78] sm:$0xff]
        %v1390 = vld [vmem:[#allocation2 + $0x80] sm:$0xff]
        %v1391 = vld [vmem:[#allocation2 + $0x88] sm:$0xff]
        %v1392 = vld [vmem:[#allocation2 + $0x90] sm:$0xff]
        %v1393 = vld [vmem:[#allocation2 + $0x98] sm:$0xff]
        %v1394 = vld [vmem:[#allocation2 + $0xa0] sm:$0xff]
        %v1395 = vld [vmem:[#allocation2 + $0xa8] sm:$0xff]
        %v1396 = vld [vmem:[#allocation2 + $0xb0] sm:$0xff]
        %v1397 = vld [vmem:[#allocation2 + $0xb8] sm:$0xff]
        %v1398 = vld [vmem:[#allocation2 + $0xc0] sm:$0xff]
        %v1399 = vld [vmem:[#allocation2 + $0xc8] sm:$0xff]
        %v1400 = vld [vmem:[#allocation2 + $0xd0] sm:$0xff]
        %v1401 = vld [vmem:[#allocation2 + $0xd8] sm:$0xff]
        %v1402 = vld [vmem:[#allocation2 + $0xe0] sm:$0xff]
        %v1403 = vld [vmem:[#allocation2 + $0xe8] sm:$0xff]
        %v1404 = vld [vmem:[#allocation2 + $0xf0] sm:$0xff]
        %v1405 = vld [vmem:[#allocation2 + $0xf8] sm:$0xff]
        %v1406 = vld [vmem:[#allocation2 + $0x100] sm:$0xff]
        %v1407 = vld [vmem:[#allocation2 + $0x108] sm:$0xff]
        %v1408 = vld [vmem:[#allocation2 + $0x110] sm:$0xff]
        %v1409 = vld [vmem:[#allocation2 + $0x118] sm:$0xff]
        %v1410 = vld [vmem:[#allocation2 + $0x120] sm:$0xff]
        %v1411 = vld [vmem:[#allocation2 + $0x128] sm:$0xff]
        %v1412 = vld [vmem:[#allocation2 + $0x130] sm:$0xff]
        %v1413 = vld [vmem:[#allocation2 + $0x138] sm:$0xff]
        %v1414 = vld [vmem:[#allocation2 + $0x140] sm:$0xff]
        %v1415 = vld [vmem:[#allocation2 + $0x148] sm:$0xff]
        %v1416 = vld [vmem:[#allocation2 + $0x150] sm:$0xff]
        %v1417 = vld [vmem:[#allocation2 + $0x158] sm:$0xff]
        %v1418 = vld [vmem:[#allocation2 + $0x160] sm:$0xff]
        %v1419 = vld [vmem:[#allocation2 + $0x168] sm:$0xff]
        %v1420 = vld [vmem:[#allocation2 + $0x170] sm:$0xff]
        %v1421 = vld [vmem:[#allocation2 + $0x178] sm:$0xff]
        %v1422 = vld [vmem:[#allocation2 + $0x180] sm:$0xff]
        %v1423 = vld [vmem:[#allocation2 + $0x188] sm:$0xff]
        %v1424 = vld [vmem:[#allocation2 + $0x190] sm:$0xff]
        %v1425 = vld [vmem:[#allocation2 + $0x198] sm:$0xff]
        %v1426 = vld [vmem:[#allocation2 + $0x1a0] sm:$0xff]
        %v1427 = vld [vmem:[#allocation2 + $0x1a8] sm:$0xff]
        %v1428 = vld [vmem:[#allocation2 + $0x1b0] sm:$0xff]
        %v1429 = vld [vmem:[#allocation2 + $0x1b8] sm:$0xff]
        %v1430 = vld [vmem:[#allocation2 + $0x1c0] sm:$0xff]
        %v1431 = vld [vmem:[#allocation2 + $0x1c8] sm:$0xff]
        %v1432 = vld [vmem:[#allocation2 + $0x1d0] sm:$0xff]
        %v1433 = vld [vmem:[#allocation2 + $0x1d8] sm:$0xff]
        %v1434 = vld [vmem:[#allocation2 + $0x1e0] sm:$0xff]
        %v1435 = vld [vmem:[#allocation2 + $0x1e8] sm:$0xff]
        %v1436 = vld [vmem:[#allocation2 + $0x1f0] sm:$0xff]
        %v1437 = vld [vmem:[#allocation2 + $0x1f8] sm:$0xff]
        %v1438 = vld [vmem:[#allocation2 + $0x200] sm:$0xff]
        %v1439 = vld [vmem:[#allocation2 + $0x208] sm:$0xff]
        %v1440 = vld [vmem:[#allocation2 + $0x210] sm:$0xff]
        %v1441 = vld [vmem:[#allocation2 + $0x218] sm:$0xff]
        %v1442 = vld [vmem:[#allocation2 + $0x220] sm:$0xff]
        %v1443 = vld [vmem:[#allocation2 + $0x228] sm:$0xff]
        %v1444 = vld [vmem:[#allocation2 + $0x230] sm:$0xff]
        %v1445 = vld [vmem:[#allocation2 + $0x238] sm:$0xff]
        %v1446 = vld [vmem:[#allocation2 + $0x240] sm:$0xff]
        %v1447 = vld [vmem:[#allocation2 + $0x248] sm:$0xff]
        %v1448 = vld [vmem:[#allocation2 + $0x250] sm:$0xff]
        %v1449 = vld [vmem:[#allocation2 + $0x258] sm:$0xff]
        %v1450 = vld [vmem:[#allocation2 + $0x260] sm:$0xff]
        %v1451 = vld [vmem:[#allocation2 + $0x268] sm:$0xff]
        %v1452 = vld [vmem:[#allocation2 + $0x270] sm:$0xff]
        %v1453 = vld [vmem:[#allocation2 + $0x278] sm:$0xff]
        %v1454 = vpack.c.bf16 %v1375, %v1374
        %v1455 = vpack.c.bf16 %v1377, %v1376
        %v1456 = vpack.c.bf16 %v1379, %v1378
        %v1457 = vpack.c.bf16 %v1381, %v1380
        %v1458 = vpack.c.bf16 %v1383, %v1382
        %v1459 = vpack.c.bf16 %v1385, %v1384
        %v1460 = vpack.c.bf16 %v1387, %v1386
        %v1461 = vpack.c.bf16 %v1389, %v1388
        %v1462 = vpack.c.bf16 %v1391, %v1390
        %v1463 = vpack.c.bf16 %v1393, %v1392
        %v1464 = vpack.c.bf16 %v1395, %v1394
        %v1465 = vpack.c.bf16 %v1397, %v1396
        %v1466 = vpack.c.bf16 %v1399, %v1398
        %v1467 = vpack.c.bf16 %v1401, %v1400
        %v1468 = vpack.c.bf16 %v1403, %v1402
        %v1469 = vpack.c.bf16 %v1405, %v1404
        %v1470 = vpack.c.bf16 %v1407, %v1406
        %v1471 = vpack.c.bf16 %v1409, %v1408
        %v1472 = vpack.c.bf16 %v1411, %v1410
        %v1473 = vpack.c.bf16 %v1413, %v1412
        %v1474 = vpack.c.bf16 %v1415, %v1414
        %v1475 = vpack.c.bf16 %v1417, %v1416
        %v1476 = vpack.c.bf16 %v1419, %v1418
        %v1477 = vpack.c.bf16 %v1421, %v1420
        %v1478 = vpack.c.bf16 %v1423, %v1422
        %v1479 = vpack.c.bf16 %v1425, %v1424
        %v1480 = vpack.c.bf16 %v1427, %v1426
        %v1481 = vpack.c.bf16 %v1429, %v1428
        %v1482 = vpack.c.bf16 %v1431, %v1430
        %v1483 = vpack.c.bf16 %v1433, %v1432
        %v1484 = vpack.c.bf16 %v1435, %v1434
        %v1485 = vpack.c.bf16 %v1437, %v1436
        %v1486 = vpack.c.bf16 %v1439, %v1438
        %v1487 = vpack.c.bf16 %v1441, %v1440
        %v1488 = vpack.c.bf16 %v1443, %v1442
        %v1489 = vpack.c.bf16 %v1445, %v1444
        %v1490 = vpack.c.bf16 %v1447, %v1446
        %v1491 = vpack.c.bf16 %v1449, %v1448
        %v1492 = vpack.c.bf16 %v1451, %v1450
        %v1493 = vpack.c.bf16 %v1453, %v1452
        %v1534 = vunpack.c.l.b16 %v1454
        %v1535 = vunpack.c.h.b16 %v1454
        %v1536 = vunpack.c.l.b16 %v1455
        %v1537 = vunpack.c.h.b16 %v1455
        %v1538 = vunpack.c.l.b16 %v1456
        %v1539 = vunpack.c.h.b16 %v1456
        %v1540 = vunpack.c.l.b16 %v1457
        %v1541 = vunpack.c.h.b16 %v1457
        %v1542 = vunpack.c.l.b16 %v1458
        %v1543 = vunpack.c.h.b16 %v1458
        %v1544 = vunpack.c.l.b16 %v1459
        %v1545 = vunpack.c.h.b16 %v1459
        %v1546 = vunpack.c.l.b16 %v1460
        %v1547 = vunpack.c.h.b16 %v1460
        %v1548 = vunpack.c.l.b16 %v1461
        %v1549 = vunpack.c.h.b16 %v1461
        %v1550 = vunpack.c.l.b16 %v1462
        %v1551 = vunpack.c.h.b16 %v1462
        %v1552 = vunpack.c.l.b16 %v1463
        %v1553 = vunpack.c.h.b16 %v1463
        %v1554 = vunpack.c.l.b16 %v1464
        %v1555 = vunpack.c.h.b16 %v1464
        %v1556 = vunpack.c.l.b16 %v1465
        %v1557 = vunpack.c.h.b16 %v1465
        %v1558 = vunpack.c.l.b16 %v1466
        %v1559 = vunpack.c.h.b16 %v1466
        %v1560 = vunpack.c.l.b16 %v1467
        %v1561 = vunpack.c.h.b16 %v1467
        %v1562 = vunpack.c.l.b16 %v1468
        %v1563 = vunpack.c.h.b16 %v1468
        %v1564 = vunpack.c.l.b16 %v1469
        %v1565 = vunpack.c.h.b16 %v1469
        %v1566 = vunpack.c.l.b16 %v1470
        %v1567 = vunpack.c.h.b16 %v1470
        %v1568 = vunpack.c.l.b16 %v1471
        %v1569 = vunpack.c.h.b16 %v1471
        %v1570 = vunpack.c.l.b16 %v1472
        %v1571 = vunpack.c.h.b16 %v1472
        %v1572 = vunpack.c.l.b16 %v1473
        %v1573 = vunpack.c.h.b16 %v1473
        %v1574 = vunpack.c.l.b16 %v1474
        %v1575 = vunpack.c.h.b16 %v1474
        %v1576 = vunpack.c.l.b16 %v1475
        %v1577 = vunpack.c.h.b16 %v1475
        %v1578 = vunpack.c.l.b16 %v1476
        %v1579 = vunpack.c.h.b16 %v1476
        %v1580 = vunpack.c.l.b16 %v1477
        %v1581 = vunpack.c.h.b16 %v1477
        %v1582 = vunpack.c.l.b16 %v1478
        %v1583 = vunpack.c.h.b16 %v1478
        %v1584 = vunpack.c.l.b16 %v1479
        %v1585 = vunpack.c.h.b16 %v1479
        %v1586 = vunpack.c.l.b16 %v1480
        %v1587 = vunpack.c.h.b16 %v1480
        %v1588 = vunpack.c.l.b16 %v1481
        %v1589 = vunpack.c.h.b16 %v1481
        %v1590 = vunpack.c.l.b16 %v1482
        %v1591 = vunpack.c.h.b16 %v1482
        %v1592 = vunpack.c.l.b16 %v1483
        %v1593 = vunpack.c.h.b16 %v1483
        %v1594 = vunpack.c.l.b16 %v1484
        %v1595 = vunpack.c.h.b16 %v1484
        %v1596 = vunpack.c.l.b16 %v1485
        %v1597 = vunpack.c.h.b16 %v1485
        %v1598 = vunpack.c.l.b16 %v1486
        %v1599 = vunpack.c.h.b16 %v1486
        %v1600 = vunpack.c.l.b16 %v1487
        %v1601 = vunpack.c.h.b16 %v1487
        %v1602 = vunpack.c.l.b16 %v1488
        %v1603 = vunpack.c.h.b16 %v1488
        %v1604 = vunpack.c.l.b16 %v1489
        %v1605 = vunpack.c.h.b16 %v1489
        %v1606 = vunpack.c.l.b16 %v1490
        %v1607 = vunpack.c.h.b16 %v1490
        %v1608 = vunpack.c.l.b16 %v1491
        %v1609 = vunpack.c.h.b16 %v1491
        %v1610 = vunpack.c.l.b16 %v1492
        %v1611 = vunpack.c.h.b16 %v1492
        %v1612 = vunpack.c.l.b16 %v1493
        %v1613 = vunpack.c.h.b16 %v1493
        %v1614 = vpack.c.b16 %v1534, %v1534
        %v1615 = vpack.c.b16 %v1535, %v1535
        %v1616 = vpack.c.b16 %v1536, %v1536
        %v1617 = vpack.c.b16 %v1537, %v1537
        %v1618 = vpack.c.b16 %v1538, %v1538
        %v1619 = vpack.c.b16 %v1539, %v1539
        %v1620 = vpack.c.b16 %v1540, %v1540
        %v1621 = vpack.c.b16 %v1541, %v1541
        %v1622 = vpack.c.b16 %v1542, %v1542
        %v1623 = vpack.c.b16 %v1543, %v1543
        %v1624 = vpack.c.b16 %v1544, %v1544
        %v1625 = vpack.c.b16 %v1545, %v1545
        %v1626 = vpack.c.b16 %v1546, %v1546
        %v1627 = vpack.c.b16 %v1547, %v1547
        %v1628 = vpack.c.b16 %v1548, %v1548
        %v1629 = vpack.c.b16 %v1549, %v1549
        %v1630 = vpack.c.b16 %v1550, %v1550
        %v1631 = vpack.c.b16 %v1551, %v1551
        %v1632 = vpack.c.b16 %v1552, %v1552
        %v1633 = vpack.c.b16 %v1553, %v1553
        %v1634 = vpack.c.b16 %v1554, %v1554
        %v1635 = vpack.c.b16 %v1555, %v1555
        %v1636 = vpack.c.b16 %v1556, %v1556
        %v1637 = vpack.c.b16 %v1557, %v1557
        %v1638 = vpack.c.b16 %v1558, %v1558
        %v1639 = vpack.c.b16 %v1559, %v1559
        %v1640 = vpack.c.b16 %v1560, %v1560
        %v1641 = vpack.c.b16 %v1561, %v1561
        %v1642 = vpack.c.b16 %v1562, %v1562
        %v1643 = vpack.c.b16 %v1563, %v1563
        %v1644 = vpack.c.b16 %v1564, %v1564
        %v1645 = vpack.c.b16 %v1565, %v1565
        %v1646 = vpack.c.b16 %v1566, %v1566
        %v1647 = vpack.c.b16 %v1567, %v1567
        %v1648 = vpack.c.b16 %v1568, %v1568
        %v1649 = vpack.c.b16 %v1569, %v1569
        %v1650 = vpack.c.b16 %v1570, %v1570
        %v1651 = vpack.c.b16 %v1571, %v1571
        %v1652 = vpack.c.b16 %v1572, %v1572
        %v1653 = vpack.c.b16 %v1573, %v1573
        %v1654 = vpack.c.b16 %v1574, %v1574
        %v1655 = vpack.c.b16 %v1575, %v1575
        %v1656 = vpack.c.b16 %v1576, %v1576
        %v1657 = vpack.c.b16 %v1577, %v1577
        %v1658 = vpack.c.b16 %v1578, %v1578
        %v1659 = vpack.c.b16 %v1579, %v1579
        %v1660 = vpack.c.b16 %v1580, %v1580
        %v1661 = vpack.c.b16 %v1581, %v1581
        %v1662 = vpack.c.b16 %v1582, %v1582
        %v1663 = vpack.c.b16 %v1583, %v1583
        %v1664 = vpack.c.b16 %v1584, %v1584
        %v1665 = vpack.c.b16 %v1585, %v1585
        %v1666 = vpack.c.b16 %v1586, %v1586
        %v1667 = vpack.c.b16 %v1587, %v1587
        %v1668 = vpack.c.b16 %v1588, %v1588
        %v1669 = vpack.c.b16 %v1589, %v1589
        %v1670 = vpack.c.b16 %v1590, %v1590
        %v1671 = vpack.c.b16 %v1591, %v1591
        %v1672 = vpack.c.b16 %v1592, %v1592
        %v1673 = vpack.c.b16 %v1593, %v1593
        %v1674 = vpack.c.b16 %v1594, %v1594
        %v1675 = vpack.c.b16 %v1595, %v1595
        %v1676 = vpack.c.b16 %v1596, %v1596
        %v1677 = vpack.c.b16 %v1597, %v1597
        %v1678 = vpack.c.b16 %v1598, %v1598
        %v1679 = vpack.c.b16 %v1599, %v1599
        %v1680 = vpack.c.b16 %v1600, %v1600
        %v1681 = vpack.c.b16 %v1601, %v1601
        %v1682 = vpack.c.b16 %v1602, %v1602
        %v1683 = vpack.c.b16 %v1603, %v1603
        %v1684 = vpack.c.b16 %v1604, %v1604
        %v1685 = vpack.c.b16 %v1605, %v1605
        %v1686 = vpack.c.b16 %v1606, %v1606
        %v1687 = vpack.c.b16 %v1607, %v1607
        %v1688 = vpack.c.b16 %v1608, %v1608
        %v1689 = vpack.c.b16 %v1609, %v1609
        %v1690 = vpack.c.b16 %v1610, %v1610
        %v1691 = vpack.c.b16 %v1611, %v1611
        %v1692 = vpack.c.b16 %v1612, %v1612
        %v1693 = vpack.c.b16 %v1613, %v1613
        %1774 = vst [vmem:[%s293] sm:$0xf] %v1614
        %1775 = vst [vmem:[%s293 + $0x4] sm:$0xf] %v1615
        %1776 = vst [vmem:[%s293 + $0x8] sm:$0xf] %v1616
        %1777 = vst [vmem:[%s293 + $0xc] sm:$0xf] %v1617
        %1778 = vst [vmem:[%s293 + $0x10] sm:$0xf] %v1618
        %1779 = vst [vmem:[%s293 + $0x14] sm:$0xf] %v1619
        %1780 = vst [vmem:[%s293 + $0x18] sm:$0xf] %v1620
        %1781 = vst [vmem:[%s293 + $0x1c] sm:$0xf] %v1621
        %1782 = vst [vmem:[%s293 + $0x20] sm:$0xf] %v1622
        %1783 = vst [vmem:[%s293 + $0x24] sm:$0xf] %v1623
        %1784 = vst [vmem:[%s293 + $0x28] sm:$0xf] %v1624
        %1785 = vst [vmem:[%s293 + $0x2c] sm:$0xf] %v1625
        %1786 = vst [vmem:[%s293 + $0x30] sm:$0xf] %v1626
        %1787 = vst [vmem:[%s293 + $0x34] sm:$0xf] %v1627
        %1788 = vst [vmem:[%s293 + $0x38] sm:$0xf] %v1628
        %1789 = vst [vmem:[%s293 + $0x3c] sm:$0xf] %v1629
        %1790 = vst [vmem:[%s293 + $0x40] sm:$0xf] %v1630
        %1791 = vst [vmem:[%s293 + $0x44] sm:$0xf] %v1631
        %1792 = vst [vmem:[%s293 + $0x48] sm:$0xf] %v1632
        %1793 = vst [vmem:[%s293 + $0x4c] sm:$0xf] %v1633
        %1794 = vst [vmem:[%s293 + $0x50] sm:$0xf] %v1634
        %1795 = vst [vmem:[%s293 + $0x54] sm:$0xf] %v1635
        %1796 = vst [vmem:[%s293 + $0x58] sm:$0xf] %v1636
        %1797 = vst [vmem:[%s293 + $0x5c] sm:$0xf] %v1637
        %1798 = vst [vmem:[%s293 + $0x60] sm:$0xf] %v1638
        %1799 = vst [vmem:[%s293 + $0x64] sm:$0xf] %v1639
        %1800 = vst [vmem:[%s293 + $0x68] sm:$0xf] %v1640
        %1801 = vst [vmem:[%s293 + $0x6c] sm:$0xf] %v1641
        %1802 = vst [vmem:[%s293 + $0x70] sm:$0xf] %v1642
        %1803 = vst [vmem:[%s293 + $0x74] sm:$0xf] %v1643
        %1804 = vst [vmem:[%s293 + $0x78] sm:$0xf] %v1644
        %1805 = vst [vmem:[%s293 + $0x7c] sm:$0xf] %v1645
        %1806 = vst [vmem:[%s293 + $0x80] sm:$0xf] %v1646
        %1807 = vst [vmem:[%s293 + $0x84] sm:$0xf] %v1647
        %1808 = vst [vmem:[%s293 + $0x88] sm:$0xf] %v1648
        %1809 = vst [vmem:[%s293 + $0x8c] sm:$0xf] %v1649
        %1810 = vst [vmem:[%s293 + $0x90] sm:$0xf] %v1650
        %1811 = vst [vmem:[%s293 + $0x94] sm:$0xf] %v1651
        %1812 = vst [vmem:[%s293 + $0x98] sm:$0xf] %v1652
        %1813 = vst [vmem:[%s293 + $0x9c] sm:$0xf] %v1653
        %1814 = vst [vmem:[%s293 + $0xa0] sm:$0xf] %v1654
        %1815 = vst [vmem:[%s293 + $0xa4] sm:$0xf] %v1655
        %1816 = vst [vmem:[%s293 + $0xa8] sm:$0xf] %v1656
        %1817 = vst [vmem:[%s293 + $0xac] sm:$0xf] %v1657
        %1818 = vst [vmem:[%s293 + $0xb0] sm:$0xf] %v1658
        %1819 = vst [vmem:[%s293 + $0xb4] sm:$0xf] %v1659
        %1820 = vst [vmem:[%s293 + $0xb8] sm:$0xf] %v1660
        %1821 = vst [vmem:[%s293 + $0xbc] sm:$0xf] %v1661
        %1822 = vst [vmem:[%s293 + $0xc0] sm:$0xf] %v1662
        %1823 = vst [vmem:[%s293 + $0xc4] sm:$0xf] %v1663
        %1824 = vst [vmem:[%s293 + $0xc8] sm:$0xf] %v1664
        %1825 = vst [vmem:[%s293 + $0xcc] sm:$0xf] %v1665
        %1826 = vst [vmem:[%s293 + $0xd0] sm:$0xf] %v1666
        %1827 = vst [vmem:[%s293 + $0xd4] sm:$0xf] %v1667
        %1828 = vst [vmem:[%s293 + $0xd8] sm:$0xf] %v1668
        %1829 = vst [vmem:[%s293 + $0xdc] sm:$0xf] %v1669
        %1830 = vst [vmem:[%s293 + $0xe0] sm:$0xf] %v1670
        %1831 = vst [vmem:[%s293 + $0xe4] sm:$0xf] %v1671
        %1832 = vst [vmem:[%s293 + $0xe8] sm:$0xf] %v1672
        %1833 = vst [vmem:[%s293 + $0xec] sm:$0xf] %v1673
        %1834 = vst [vmem:[%s293 + $0xf0] sm:$0xf] %v1674
        %1835 = vst [vmem:[%s293 + $0xf4] sm:$0xf] %v1675
        %1836 = vst [vmem:[%s293 + $0xf8] sm:$0xf] %v1676
        %1837 = vst [vmem:[%s293 + $0xfc] sm:$0xf] %v1677
        %1838 = vst [vmem:[%s293 + $0x100] sm:$0xf] %v1678
        %1839 = vst [vmem:[%s293 + $0x104] sm:$0xf] %v1679
        %1840 = vst [vmem:[%s293 + $0x108] sm:$0xf] %v1680
        %1841 = vst [vmem:[%s293 + $0x10c] sm:$0xf] %v1681
        %1842 = vst [vmem:[%s293 + $0x110] sm:$0xf] %v1682
        %1843 = vst [vmem:[%s293 + $0x114] sm:$0xf] %v1683
        %1844 = vst [vmem:[%s293 + $0x118] sm:$0xf] %v1684
        %1845 = vst [vmem:[%s293 + $0x11c] sm:$0xf] %v1685
        %1846 = vst [vmem:[%s293 + $0x120] sm:$0xf] %v1686
        %1847 = vst [vmem:[%s293 + $0x124] sm:$0xf] %v1687
        %1848 = vst [vmem:[%s293 + $0x128] sm:$0xf] %v1688
        %1849 = vst [vmem:[%s293 + $0x12c] sm:$0xf] %v1689
        %1850 = vst [vmem:[%s293 + $0x130] sm:$0xf] %v1690
        %1851 = vst [vmem:[%s293 + $0x134] sm:$0xf] %v1691
        %1852 = vst [vmem:[%s293 + $0x138] sm:$0xf] %v1692
        %1853 = vst [vmem:[%s293 + $0x13c] sm:$0xf] %v1693
        %v1854 = vadd.f32 %v1374, %v1375
        %v1855 = vadd.f32 %v1854, %v1376
        %v1856 = vadd.f32 %v1855, %v1377
        %v1857 = vadd.f32 %v1856, %v1378
        %v1858 = vadd.f32 %v1857, %v1379
        %v1859 = vadd.f32 %v1858, %v1380
        %v1860 = vadd.f32 %v1859, %v1381
        %v1861 = vadd.f32 %v1860, %v1382
        %v1862 = vadd.f32 %v1861, %v1383
        %v1863 = vadd.f32 %v1862, %v1384
        %v1864 = vadd.f32 %v1863, %v1385
        %v1865 = vadd.f32 %v1864, %v1386
        %v1866 = vadd.f32 %v1865, %v1387
        %v1867 = vadd.f32 %v1866, %v1388
        %v1868 = vadd.f32 %v1867, %v1389
        %v1869 = vadd.f32 %v1868, %v1390
        %v1870 = vadd.f32 %v1869, %v1391
        %v1871 = vadd.f32 %v1870, %v1392
        %v1872 = vadd.f32 %v1871, %v1393
        %v1873 = vadd.f32 %v1872, %v1394
        %v1874 = vadd.f32 %v1873, %v1395
        %v1875 = vadd.f32 %v1874, %v1396
        %v1876 = vadd.f32 %v1875, %v1397
        %v1877 = vadd.f32 %v1876, %v1398
        %v1878 = vadd.f32 %v1877, %v1399
        %v1879 = vadd.f32 %v1878, %v1400
        %v1880 = vadd.f32 %v1879, %v1401
        %v1881 = vadd.f32 %v1880, %v1402
        %v1882 = vadd.f32 %v1881, %v1403
        %v1883 = vadd.f32 %v1882, %v1404
        %v1884 = vadd.f32 %v1883, %v1405
        %v1885 = vadd.f32 %v1884, %v1406
        %v1886 = vadd.f32 %v1885, %v1407
        %v1887 = vadd.f32 %v1886, %v1408
        %v1888 = vadd.f32 %v1887, %v1409
        %v1889 = vadd.f32 %v1888, %v1410
        %v1890 = vadd.f32 %v1889, %v1411
        %v1891 = vadd.f32 %v1890, %v1412
        %v1892 = vadd.f32 %v1891, %v1413
        %v1893 = vadd.f32 %v1892, %v1414
        %v1894 = vadd.f32 %v1893, %v1415
        %v1895 = vadd.f32 %v1894, %v1416
        %v1896 = vadd.f32 %v1895, %v1417
        %v1897 = vadd.f32 %v1896, %v1418
        %v1898 = vadd.f32 %v1897, %v1419
        %v1899 = vadd.f32 %v1898, %v1420
        %v1900 = vadd.f32 %v1899, %v1421
        %v1901 = vadd.f32 %v1900, %v1422
        %v1902 = vadd.f32 %v1901, %v1423
        %v1903 = vadd.f32 %v1902, %v1424
        %v1904 = vadd.f32 %v1903, %v1425
        %v1905 = vadd.f32 %v1904, %v1426
        %v1906 = vadd.f32 %v1905, %v1427
        %v1907 = vadd.f32 %v1906, %v1428
        %v1908 = vadd.f32 %v1907, %v1429
        %v1909 = vadd.f32 %v1908, %v1430
        %v1910 = vadd.f32 %v1909, %v1431
        %v1911 = vadd.f32 %v1910, %v1432
        %v1912 = vadd.f32 %v1911, %v1433
        %v1913 = vadd.f32 %v1912, %v1434
        %v1914 = vadd.f32 %v1913, %v1435
        %v1915 = vadd.f32 %v1914, %v1436
        %v1916 = vadd.f32 %v1915, %v1437
        %v1917 = vadd.f32 %v1916, %v1438
        %v1918 = vadd.f32 %v1917, %v1439
        %v1919 = vadd.f32 %v1918, %v1440
        %v1920 = vadd.f32 %v1919, %v1441
        %v1921 = vadd.f32 %v1920, %v1442
        %v1922 = vadd.f32 %v1921, %v1443
        %v1923 = vadd.f32 %v1922, %v1444
        %v1924 = vadd.f32 %v1923, %v1445
        %v1925 = vadd.f32 %v1924, %v1446
        %v1926 = vadd.f32 %v1925, %v1447
        %v1927 = vadd.f32 %v1926, %v1448
        %v1928 = vadd.f32 %v1927, %v1449
        %v1929 = vadd.f32 %v1928, %v1450
        %v1930 = vadd.f32 %v1929, %v1451
        %v1931 = vadd.f32 %v1930, %v1452
        %v1932 = vadd.f32 %v1931, %v1453
        %1933 = vst [vmem:[%s301] sm:$0xff] %v1932
        %v1934 = vmul.f32 %v1374, %v1374
        %v1935 = vmul.f32 %v1375, %v1375
        %v1936 = vmul.f32 %v1376, %v1376
        %v1937 = vmul.f32 %v1377, %v1377
        %v1938 = vmul.f32 %v1378, %v1378
        %v1939 = vmul.f32 %v1379, %v1379
        %v1940 = vmul.f32 %v1380, %v1380
        %v1941 = vmul.f32 %v1381, %v1381
        %v1942 = vmul.f32 %v1382, %v1382
        %v1943 = vmul.f32 %v1383, %v1383
        %v1944 = vmul.f32 %v1384, %v1384
        %v1945 = vmul.f32 %v1385, %v1385
        %v1946 = vmul.f32 %v1386, %v1386
        %v1947 = vmul.f32 %v1387, %v1387
        %v1948 = vmul.f32 %v1388, %v1388
        %v1949 = vmul.f32 %v1389, %v1389
        %v1950 = vmul.f32 %v1390, %v1390
        %v1951 = vmul.f32 %v1391, %v1391
        %v1952 = vmul.f32 %v1392, %v1392
        %v1953 = vmul.f32 %v1393, %v1393
        %v1954 = vmul.f32 %v1394, %v1394
        %v1955 = vmul.f32 %v1395, %v1395
        %v1956 = vmul.f32 %v1396, %v1396
        %v1957 = vmul.f32 %v1397, %v1397
        %v1958 = vmul.f32 %v1398, %v1398
        %v1959 = vmul.f32 %v1399, %v1399
        %v1960 = vmul.f32 %v1400, %v1400
        %v1961 = vmul.f32 %v1401, %v1401
        %v1962 = vmul.f32 %v1402, %v1402
        %v1963 = vmul.f32 %v1403, %v1403
        %v1964 = vmul.f32 %v1404, %v1404
        %v1965 = vmul.f32 %v1405, %v1405
        %v1966 = vmul.f32 %v1406, %v1406
        %v1967 = vmul.f32 %v1407, %v1407
        %v1968 = vmul.f32 %v1408, %v1408
        %v1969 = vmul.f32 %v1409, %v1409
        %v1970 = vmul.f32 %v1410, %v1410
        %v1971 = vmul.f32 %v1411, %v1411
        %v1972 = vmul.f32 %v1412, %v1412
        %v1973 = vmul.f32 %v1413, %v1413
        %v1974 = vmul.f32 %v1414, %v1414
        %v1975 = vmul.f32 %v1415, %v1415
        %v1976 = vmul.f32 %v1416, %v1416
        %v1977 = vmul.f32 %v1417, %v1417
        %v1978 = vmul.f32 %v1418, %v1418
        %v1979 = vmul.f32 %v1419, %v1419
        %v1980 = vmul.f32 %v1420, %v1420
        %v1981 = vmul.f32 %v1421, %v1421
        %v1982 = vmul.f32 %v1422, %v1422
        %v1983 = vmul.f32 %v1423, %v1423
        %v1984 = vmul.f32 %v1424, %v1424
        %v1985 = vmul.f32 %v1425, %v1425
        %v1986 = vmul.f32 %v1426, %v1426
        %v1987 = vmul.f32 %v1427, %v1427
        %v1988 = vmul.f32 %v1428, %v1428
        %v1989 = vmul.f32 %v1429, %v1429
        %v1990 = vmul.f32 %v1430, %v1430
        %v1991 = vmul.f32 %v1431, %v1431
        %v1992 = vmul.f32 %v1432, %v1432
        %v1993 = vmul.f32 %v1433, %v1433
        %v1994 = vmul.f32 %v1434, %v1434
        %v1995 = vmul.f32 %v1435, %v1435
        %v1996 = vmul.f32 %v1436, %v1436
        %v1997 = vmul.f32 %v1437, %v1437
        %v1998 = vmul.f32 %v1438, %v1438
        %v1999 = vmul.f32 %v1439, %v1439
        %v2000 = vmul.f32 %v1440, %v1440
        %v2001 = vmul.f32 %v1441, %v1441
        %v2002 = vmul.f32 %v1442, %v1442
        %v2003 = vmul.f32 %v1443, %v1443
        %v2004 = vmul.f32 %v1444, %v1444
        %v2005 = vmul.f32 %v1445, %v1445
        %v2006 = vmul.f32 %v1446, %v1446
        %v2007 = vmul.f32 %v1447, %v1447
        %v2008 = vmul.f32 %v1448, %v1448
        %v2009 = vmul.f32 %v1449, %v1449
        %v2010 = vmul.f32 %v1450, %v1450
        %v2011 = vmul.f32 %v1451, %v1451
        %v2012 = vmul.f32 %v1452, %v1452
        %v2013 = vmul.f32 %v1453, %v1453
        %v2014 = vadd.f32 %v1934, %v1935
        %v2015 = vadd.f32 %v2014, %v1936
        %v2016 = vadd.f32 %v2015, %v1937
        %v2017 = vadd.f32 %v2016, %v1938
        %v2018 = vadd.f32 %v2017, %v1939
        %v2019 = vadd.f32 %v2018, %v1940
        %v2020 = vadd.f32 %v2019, %v1941
        %v2021 = vadd.f32 %v2020, %v1942
        %v2022 = vadd.f32 %v2021, %v1943
        %v2023 = vadd.f32 %v2022, %v1944
        %v2024 = vadd.f32 %v2023, %v1945
        %v2025 = vadd.f32 %v2024, %v1946
        %v2026 = vadd.f32 %v2025, %v1947
        %v2027 = vadd.f32 %v2026, %v1948
        %v2028 = vadd.f32 %v2027, %v1949
        %v2029 = vadd.f32 %v2028, %v1950
        %v2030 = vadd.f32 %v2029, %v1951
        %v2031 = vadd.f32 %v2030, %v1952
        %v2032 = vadd.f32 %v2031, %v1953
        %v2033 = vadd.f32 %v2032, %v1954
        %v2034 = vadd.f32 %v2033, %v1955
        %v2035 = vadd.f32 %v2034, %v1956
        %v2036 = vadd.f32 %v2035, %v1957
        %v2037 = vadd.f32 %v2036, %v1958
        %v2038 = vadd.f32 %v2037, %v1959
        %v2039 = vadd.f32 %v2038, %v1960
        %v2040 = vadd.f32 %v2039, %v1961
        %v2041 = vadd.f32 %v2040, %v1962
        %v2042 = vadd.f32 %v2041, %v1963
        %v2043 = vadd.f32 %v2042, %v1964
        %v2044 = vadd.f32 %v2043, %v1965
        %v2045 = vadd.f32 %v2044, %v1966
        %v2046 = vadd.f32 %v2045, %v1967
        %v2047 = vadd.f32 %v2046, %v1968
        %v2048 = vadd.f32 %v2047, %v1969
        %v2049 = vadd.f32 %v2048, %v1970
        %v2050 = vadd.f32 %v2049, %v1971
        %v2051 = vadd.f32 %v2050, %v1972
        %v2052 = vadd.f32 %v2051, %v1973
        %v2053 = vadd.f32 %v2052, %v1974
        %v2054 = vadd.f32 %v2053, %v1975
        %v2055 = vadd.f32 %v2054, %v1976
        %v2056 = vadd.f32 %v2055, %v1977
        %v2057 = vadd.f32 %v2056, %v1978
        %v2058 = vadd.f32 %v2057, %v1979
        %v2059 = vadd.f32 %v2058, %v1980
        %v2060 = vadd.f32 %v2059, %v1981
        %v2061 = vadd.f32 %v2060, %v1982
        %v2062 = vadd.f32 %v2061, %v1983
        %v2063 = vadd.f32 %v2062, %v1984
        %v2064 = vadd.f32 %v2063, %v1985
        %v2065 = vadd.f32 %v2064, %v1986
        %v2066 = vadd.f32 %v2065, %v1987
        %v2067 = vadd.f32 %v2066, %v1988
        %v2068 = vadd.f32 %v2067, %v1989
        %v2069 = vadd.f32 %v2068, %v1990
        %v2070 = vadd.f32 %v2069, %v1991
        %v2071 = vadd.f32 %v2070, %v1992
        %v2072 = vadd.f32 %v2071, %v1993
        %v2073 = vadd.f32 %v2072, %v1994
        %v2074 = vadd.f32 %v2073, %v1995
        %v2075 = vadd.f32 %v2074, %v1996
        %v2076 = vadd.f32 %v2075, %v1997
        %v2077 = vadd.f32 %v2076, %v1998
        %v2078 = vadd.f32 %v2077, %v1999
        %v2079 = vadd.f32 %v2078, %v2000
        %v2080 = vadd.f32 %v2079, %v2001
        %v2081 = vadd.f32 %v2080, %v2002
        %v2082 = vadd.f32 %v2081, %v2003
        %v2083 = vadd.f32 %v2082, %v2004
        %v2084 = vadd.f32 %v2083, %v2005
        %v2085 = vadd.f32 %v2084, %v2006
        %v2086 = vadd.f32 %v2085, %v2007
        %v2087 = vadd.f32 %v2086, %v2008
        %v2088 = vadd.f32 %v2087, %v2009
        %v2089 = vadd.f32 %v2088, %v2010
        %v2090 = vadd.f32 %v2089, %v2011
        %v2091 = vadd.f32 %v2090, %v2012
        %v2092 = vadd.f32 %v2091, %v2013
        %2093 = vst [vmem:[%s308] sm:$0xff] %v2092
      $region36: #{conv_bn_leaky_nhwc.2} parent=27 // pred_fallthru
        _
      %s2094 = smul.u32 80, %s21
      %p2095 = scmp.lt.s32.totalorder %s2094, 159
      %s2096 = scalar_select %p2095, %s2094, 159
      %p2097 = scmp.lt.s32.totalorder %s22, 0
      %s2098 = scalar_select %p2097, %s22, 0
      %s2099 = sadd.s32 %s2098, %s2096
      %s2100 = smul.addr %s2099, 4
      %s2101 = scalar_lea.vmem %s2, %s2100
      %p2102 = scmp.lt.s32.totalorder %s21, 1
      %s2103 = scalar_select %p2102, %s21, 1
      %p2104 = scmp.lt.s32.totalorder %s22, 0
      %s2105 = scalar_select %p2104, %s22, 0
      %s2106 = sadd.s32 %s2105, %s2103
      %s2107 = smul.addr %s2106, 8
      %s2108 = scalar_lea.vmem %s3, %s2107
      %p2109 = scmp.lt.s32.totalorder %s21, 1
      %s2110 = scalar_select %p2109, %s21, 1
      %p2111 = scmp.lt.s32.totalorder %s22, 0
      %s2112 = scalar_select %p2111, %s22, 0
      %s2113 = sadd.s32 %s2112, %s2110
      %s2114 = smul.addr %s2113, 8
      %s2115 = scalar_lea.vmem %s4, %s2114
      // Predicated region
      $region37: #{conv_bn_leaky_nhwc.2} parent=27 // pred_check
        %p2116 = pneg %p111
      $region38: #{conv_bn_leaky_nhwc.2} parent=27 // pred_check_branch
        %2118 = sbr.rel (%p2116) target = $region40
      $region39: #{conv_bn_leaky_nhwc.2} parent=27 // pred_region
        %s2119 = smul.u32 80, %s21
      $region40: #{conv_bn_leaky_nhwc.2} parent=27 // pred_fallthru
        _
      // Predicated region
      $region41: #{conv_bn_leaky_nhwc.2} parent=27 // pred_check
        %p2120 = pneg %p139
      $region42: #{conv_bn_leaky_nhwc.2} parent=27 // pred_check_branch
        %2122 = sbr.rel (%p2120) target = $region44
      $region43: #{conv_bn_leaky_nhwc.2} parent=27 // pred_region
        _
      $region44: #{conv_bn_leaky_nhwc.2} parent=27 // pred_fallthru
        _
      // Predicated region
      $region45: #{conv_bn_leaky_nhwc.2} parent=27 // pred_check
        %p2123 = pneg %p167
      $region46: #{conv_bn_leaky_nhwc.2} parent=27 // pred_check_branch
        %2125 = sbr.rel (%p2123) target = $region48
      $region47: #{conv_bn_leaky_nhwc.2} parent=27 // pred_region
        _
      $region48: #{conv_bn_leaky_nhwc.2} parent=27 // pred_fallthru
        _
    $region28: #{conv_bn_leaky_nhwc.2} parent=5 // pred_fallthru
      _
    %p2126 = scmp.le.s32.totalorder 2, %s11
    // Predicated region
    $region49: #{conv_bn_leaky_nhwc.2} parent=5 // pred_check
      %p2127 = pneg %p2126
    $region50: #{conv_bn_leaky_nhwc.2} parent=5 // pred_check_branch
      %2129 = sbr.rel (%p2127) target = $region52
    $region51: #{conv_bn_leaky_nhwc.2} parent=5 // pred_region
      %s2130 = ssub.s32 %s11, 2
      // Predicated region
      $region53: #{conv_bn_leaky_nhwc.2} parent=51 // pred_check
        %p2131 = pneg %p117
      $region54: #{conv_bn_leaky_nhwc.2} parent=51 // pred_check_branch
        %2133 = sbr.rel (%p2131) target = $region56
      $region55: #{conv_bn_leaky_nhwc.2} parent=51 // pred_region
        %s2134 = smul.u32 80, %s24
        %p2135 = scmp.lt.s32.totalorder %s2134, 159
        %s2136 = scalar_select %p2135, %s2134, 159
        %p2137 = scmp.lt.s32.totalorder %s25, 0
        %s2138 = scalar_select %p2137, %s25, 0
        %s2139 = sadd.s32 %s2138, %s2136
        %s2140 = smul.addr %s2139, 4
        %s2141 = scalar_lea.vmem %s2, %s2140
      $region56: #{conv_bn_leaky_nhwc.2} parent=51 // pred_fallthru
        _
      // Predicated region
      $region57: #{conv_bn_leaky_nhwc.2} parent=51 // pred_check
        %p2142 = pneg %p145
      $region58: #{conv_bn_leaky_nhwc.2} parent=51 // pred_check_branch
        %2144 = sbr.rel (%p2142) target = $region60
      $region59: #{conv_bn_leaky_nhwc.2} parent=51 // pred_region
        %p2145 = scmp.lt.s32.totalorder %s24, 1
        %s2146 = scalar_select %p2145, %s24, 1
        %p2147 = scmp.lt.s32.totalorder %s25, 0
        %s2148 = scalar_select %p2147, %s25, 0
        %s2149 = sadd.s32 %s2148, %s2146
        %s2150 = smul.addr %s2149, 8
        %s2151 = scalar_lea.vmem %s3, %s2150
      $region60: #{conv_bn_leaky_nhwc.2} parent=51 // pred_fallthru
        _
      // Predicated region
      $region61: #{conv_bn_leaky_nhwc.2} parent=51 // pred_check
        %p2152 = pneg %p173
      $region62: #{conv_bn_leaky_nhwc.2} parent=51 // pred_check_branch
        %2154 = sbr.rel (%p2152) target = $region64
      $region63: #{conv_bn_leaky_nhwc.2} parent=51 // pred_region
        %p2155 = scmp.lt.s32.totalorder %s24, 1
        %s2156 = scalar_select %p2155, %s24, 1
        %p2157 = scmp.lt.s32.totalorder %s25, 0
        %s2158 = scalar_select %p2157, %s25, 0
        %s2159 = sadd.s32 %s2158, %s2156
        %s2160 = smul.addr %s2159, 8
        %s2161 = scalar_lea.vmem %s4, %s2160
      $region64: #{conv_bn_leaky_nhwc.2} parent=51 // pred_fallthru
        _
    $region52: #{conv_bn_leaky_nhwc.2} parent=5 // pred_fallthru
      _
  $region6: #{conv_bn_leaky_nhwc.2} parent=0 // loop_footer
    %s15 = sadd.s32 1, %s11
  $region7: #{conv_bn_leaky_nhwc.2} parent=0 // loop_footer_branch
    %10 = sbr.rel target = $region3
  $region8: #{conv_bn_leaky_nhwc.2} parent=0 // loop_exit
    _

</llo_original>
